<compile_context>
chip_gen: v7x
topology: tpu7x:2x2x1
jax: 0.10.0
libtpu: 0.0.40
codegen_flags: <defaults>
</compile_context>

<pallas_src>
import math

import jax
import jax.numpy as jnp
from jax.experimental import pallas as pl
from jax.experimental.pallas import tpu as pltpu

LN_EPS = 1e-5  # nn.LayerNorm default
_HIGHEST = jax.lax.Precision.HIGHEST


# ---------------------------------------------------------------------------
# Hardware-aware sizing helpers
# ---------------------------------------------------------------------------
def _vmem_capacity_bytes():
    try:
        return int(pltpu.get_tpu_info().vmem_capacity_bytes)
    except Exception:
        return 64 << 20  # conservative fallback (v7x per-core VMEM)


def _choose_pack(n, c):
    """Pack `pack` logical rows into one 128-lane physical row when C < 128."""
    if c >= 128 or 128 % c != 0:
        return 1
    pack = 128 // c  # power of two because c | 128
    while pack > 1 and n % pack != 0:
        pack //= 2
    return pack


def _choose_block_rows(n_rows, row_in_bytes, row_out_bytes, resident_bytes,
                       target_tile_bytes):
    """Streamed block height (in packed rows): byte-targeted, VMEM-capped."""
    vmem_cap = _vmem_capacity_bytes()
    # 2x double buffering for the streamed in/out tiles plus ~6 tile-sized f32
    # live temporaries inside the body (x, mean, centered, var, y, out).
    per_row = 2 * (row_in_bytes + row_out_bytes) + 6 * max(row_in_bytes, row_out_bytes)
    budget = int(0.6 * vmem_cap) - 2 * resident_bytes - (2 << 20)
    max_rows = max(8, budget // max(per_row, 1))
    rows = max(8, min(target_tile_bytes // max(row_in_bytes, 1), max_rows))
    rows = (rows // 8) * 8
    if rows >= n_rows:
        return n_rows, 1, per_row  # single block covering the full extent
    return rows, pl.cdiv(n_rows, rows), per_row


def _vmem_limit(rows, per_row, resident_bytes):
    vmem_cap = _vmem_capacity_bytes()
    need = rows * per_row + 2 * resident_bytes + (2 << 20)
    return int(min(int(0.7 * vmem_cap), max(16 << 20, need)))


# ---------------------------------------------------------------------------
# Fused LayerNorm + Linear kernel (lane-packed): out = LN(x) @ W + b
#   x_ref    : (tm, pack*C)      -- `pack` logical rows per 128-lane row
#   m_ref    : (pack*C, pack*C)  -- block-diag of ones((C,C))/C (group mean)
#   w_ref    : (pack*C, pack*C_out) block-diag copies of W
# ---------------------------------------------------------------------------
def _prenorm_linear_kernel(x_ref, m_ref, g_ref, b_ref, w_ref, bias_ref, o_ref):
    x = x_ref[...].astype(jnp.float32)
    m = m_ref[...]
    mean = jnp.dot(x, m, preferred_element_type=jnp.float32, precision=_HIGHEST)
    cen = x - mean
    var = jnp.dot(cen * cen, m, preferred_element_type=jnp.float32,
                  precision=_HIGHEST)
    y = cen * jax.lax.rsqrt(var + LN_EPS)          # rsqrt -> EUP slot
    y = y * g_ref[...] + b_ref[...]                # per-segment affine
    out = jnp.dot(y.astype(w_ref.dtype), w_ref[...],
                  preferred_element_type=jnp.float32, precision=_HIGHEST)
    o_ref[...] = (out + bias_ref[...]).astype(o_ref.dtype)


def prenorm_linear_pallas(x2d, gamma, beta, w, bias, *, target_tile_bytes=2 << 20):
    n, c_in = x2d.shape
    c_out = w.shape[1]
    pack = _choose_pack(n, c_in)
    np_rows = n // pack
    cp_in = pack * c_in
    cp_out = pack * c_out

    xp = x2d.reshape(np_rows, cp_in)  # contiguous reshape: no data movement

    eye = jnp.eye(pack, dtype=jnp.float32)
    m = jnp.kron(eye, jnp.full((c_in, c_in), 1.0 / c_in, jnp.float32))
    g = jnp.tile(gamma.astype(jnp.float32), pack).reshape(1, cp_in)
    b = jnp.tile(beta.astype(jnp.float32), pack).reshape(1, cp_in)
    wb = jnp.kron(jnp.eye(pack, dtype=w.dtype), w)          # keep W's dtype
    biasb = jnp.tile(bias.astype(jnp.float32), pack).reshape(1, cp_out)

    itemsize = max(jnp.dtype(x2d.dtype).itemsize, 4)
    row_in = cp_in * itemsize
    row_out = cp_out * itemsize
    resident = (m.size + g.size + b.size + wb.size + biasb.size) * 4
    rows, grid, per_row = _choose_block_rows(np_rows, row_in, row_out, resident,
                                             target_tile_bytes)

    out = pl.pallas_call(
        _prenorm_linear_kernel,
        out_shape=jax.ShapeDtypeStruct((np_rows, cp_out), x2d.dtype),
        grid_spec=pltpu.PrefetchScalarGridSpec(
            num_scalar_prefetch=0,
            grid=(grid,),
            in_specs=[
                pl.BlockSpec((rows, cp_in), lambda i: (i, 0)),      # streamed x
                pl.BlockSpec((cp_in, cp_in), lambda i: (0, 0)),     # group-mean M
                pl.BlockSpec((1, cp_in), lambda i: (0, 0)),         # gamma
                pl.BlockSpec((1, cp_in), lambda i: (0, 0)),         # beta
                pl.BlockSpec((cp_in, cp_out), lambda i: (0, 0)),    # block-diag W
                pl.BlockSpec((1, cp_out), lambda i: (0, 0)),        # bias
            ],
            out_specs=pl.BlockSpec((rows, cp_out), lambda i: (i, 0)),
        ),
        compiler_params=pltpu.CompilerParams(
            dimension_semantics=("parallel",),
            vmem_limit_bytes=_vmem_limit(rows, per_row, resident),
        ),
    )(xp, m, g, b, wb, biasb)
    return out.reshape(n, c_out)


# ---------------------------------------------------------------------------
# Standalone lane-packed LayerNorm (used when `fn` is an arbitrary callable)
# ---------------------------------------------------------------------------
def _layernorm_kernel(x_ref, m_ref, g_ref, b_ref, o_ref):
    x = x_ref[...].astype(jnp.float32)
    m = m_ref[...]
    mean = jnp.dot(x, m, preferred_element_type=jnp.float32, precision=_HIGHEST)
    cen = x - mean
    var = jnp.dot(cen * cen, m, preferred_element_type=jnp.float32,
                  precision=_HIGHEST)
    y = cen * jax.lax.rsqrt(var + LN_EPS)
    o_ref[...] = (y * g_ref[...] + b_ref[...]).astype(o_ref.dtype)


def layernorm_pallas(x2d, gamma, beta, *, target_tile_bytes=2 << 20):
    n, c = x2d.shape
    pack = _choose_pack(n, c)
    np_rows = n // pack
    cp = pack * c

    xp = x2d.reshape(np_rows, cp)
    eye = jnp.eye(pack, dtype=jnp.float32)
    m = jnp.kron(eye, jnp.full((c, c), 1.0 / c, jnp.float32))
    g = jnp.tile(gamma.astype(jnp.float32), pack).reshape(1, cp)
    b = jnp.tile(beta.astype(jnp.float32), pack).reshape(1, cp)

    itemsize = max(jnp.dtype(x2d.dtype).itemsize, 4)
    row_bytes = cp * itemsize
    resident = (m.size + g.size + b.size) * 4
    rows, grid, per_row = _choose_block_rows(np_rows, row_bytes, row_bytes,
                                             resident, target_tile_bytes)

    out = pl.pallas_call(
        _layernorm_kernel,
        out_shape=jax.ShapeDtypeStruct((np_rows, cp), x2d.dtype),
        grid_spec=pltpu.PrefetchScalarGridSpec(
            num_scalar_prefetch=0,
            grid=(grid,),
            in_specs=[
                pl.BlockSpec((rows, cp), lambda i: (i, 0)),
                pl.BlockSpec((cp, cp), lambda i: (0, 0)),
                pl.BlockSpec((1, cp), lambda i: (0, 0)),
                pl.BlockSpec((1, cp), lambda i: (0, 0)),
            ],
            out_specs=pl.BlockSpec((rows, cp), lambda i: (i, 0)),
        ),
        compiler_params=pltpu.CompilerParams(
            dimension_semantics=("parallel",),
            vmem_limit_bytes=_vmem_limit(rows, per_row, resident),
        ),
    )(xp, m, g, b)
    return out.reshape(n, c)


# ---------------------------------------------------------------------------
# `fn` for the demo: Linear(dim, dim_out), recognized by PreNorm for fusion.
# ---------------------------------------------------------------------------
class LinearFn:
    def __init__(self, w, b):
        self.w = w  # (dim, dim_out)
        self.b = b  # (dim_out,)

    def __call__(self, x):
        # Unfused fallback (not used by PreNorm when fusion applies).
        return jnp.dot(x, self.w, precision=_HIGHEST) + self.b


# ---------------------------------------------------------------------------
# PreNorm module (mirrors the PyTorch class)
# ---------------------------------------------------------------------------
class PreNorm:
    """x -> fn(LayerNorm(dim)(x), *args, **kwargs); norm over the last axis."""

    def __init__(self, dim, fn):
        self.fn = fn
        self.dim = dim
        # nn.LayerNorm default init: weight = 1, bias = 0
        self.gamma = jnp.ones((dim,), jnp.float32)
        self.beta = jnp.zeros((dim,), jnp.float32)

    def __call__(self, x, *args, **kwargs):
        lead = x.shape[:-1]
        x2d = x.reshape(-1, self.dim)
        if isinstance(self.fn, LinearFn) and not args and not kwargs:
            # Fused single-pass kernel: LN + matmul + bias, one HBM round trip.
            y2d = prenorm_linear_pallas(x2d, self.gamma, self.beta,
                                        self.fn.w, self.fn.b)
            return y2d.reshape(*lead, self.fn.w.shape[1])
        # Generic path: Pallas LayerNorm, then arbitrary fn.
        y2d = layernorm_pallas(x2d, self.gamma, self.beta)
        return self.fn(y2d.reshape(*lead, self.dim), *args, **kwargs)


# ---------------------------------------------------------------------------
# Pure-JAX references
# ---------------------------------------------------------------------------
def layernorm_ref(x, gamma, beta):
    mean = jnp.mean(x, axis=-1, keepdims=True)
    var = jnp.mean((x - mean) ** 2, axis=-1, keepdims=True)
    return (x - mean) / jnp.sqrt(var + LN_EPS) * gamma + beta


def prenorm_linear_ref(x, gamma, beta, w, b):
    return jnp.dot(layernorm_ref(x, gamma, beta), w, precision=_HIGHEST) + b


if __name__ == "__main__":
    key = jax.random.PRNGKey(0)
    kx, kw, kb, kx2 = jax.random.split(key, 4)

    B, H, W, C = 2, 16, 16, 32  # (B, H, W, C); LayerNorm over C = dim
    x = jax.random.normal(kx, (B, H, W, C), jnp.float32)

    bound = 1.0 / math.sqrt(C)
    w_lin = jax.random.uniform(kw, (C, C), jnp.float32, -bound, bound)
    b_lin = jax.random.uniform(kb, (C,), jnp.float32, -bound, bound)

    # 1) Fused PreNorm(LayerNorm -> Linear) path (lane-packed, single block).
    prenorm = PreNorm(C, LinearFn(w_lin, b_lin))
    out = jax.block_until_ready(prenorm(x))
    ref = prenorm_linear_ref(x, prenorm.gamma, prenorm.beta, w_lin, b_lin)
    assert out.shape == (B, H, W, C)
    assert jnp.allclose(out, ref, atol=1e-4, rtol=1e-4), "fused mismatch vs reference"

    # 2) Generic-fn path (Pallas LayerNorm + arbitrary callable), N = 500 rows.
    gelu_prenorm = PreNorm(C, jax.nn.gelu)
    x_odd = jax.random.normal(kx2, (1, 20, 25, C), jnp.float32)
    out2 = jax.block_until_ready(gelu_prenorm(x_odd))
    ref2 = jax.nn.gelu(layernorm_ref(x_odd, gelu_prenorm.gamma, gelu_prenorm.beta))
    assert jnp.allclose(out2, ref2, atol=1e-4, rtol=1e-4), "LN-only mismatch vs reference"

    # 3) Multi-step grid with a ragged tail block (exercises cdiv grid and
    #    the no-pad / OOB-write-drop path) by forcing tiny tiles.
    x_rag = jax.random.normal(kx, (600, C), jnp.float32)
    out3 = jax.block_until_ready(
        prenorm_linear_pallas(x_rag, prenorm.gamma, prenorm.beta, w_lin, b_lin,
                              target_tile_bytes=16 * 1024))
    ref3 = prenorm_linear_ref(x_rag, prenorm.gamma, prenorm.beta, w_lin, b_lin)
    assert jnp.allclose(out3, ref3, atol=1e-4, rtol=1e-4), "ragged-grid mismatch vs reference"

    print("KERNEL_OK")
</pallas_src>

<mosaic_0001>
module attributes {stable_mosaic.version = 11 : i64} {
  func.func @_prenorm_linear_kernel(%arg0: i32, %arg1: memref<128x128xf32, #tpu.memory_space<vmem>>, %arg2: memref<128x128xf32, #tpu.memory_space<vmem>>, %arg3: memref<1x128xf32, #tpu.memory_space<vmem>>, %arg4: memref<1x128xf32, #tpu.memory_space<vmem>>, %arg5: memref<128x128xf32, #tpu.memory_space<vmem>>, %arg6: memref<1x128xf32, #tpu.memory_space<vmem>>, %arg7: memref<128x128xf32, #tpu.memory_space<vmem>>) attributes {dimension_semantics = [#tpu.dimension_semantics<parallel>], iteration_bounds = array<i64: 1>, scalar_prefetch = 0 : i64, scratch_operands = 0 : i64, tpu.core_type = #tpu.core_type<tc>, window_params = [{transform_indices = @transform_0, window_bounds = array<i64: 128, 128>}, {pipeline_mode = #tpu.pipeline_mode<synchronous>, transform_indices = @transform_1, window_bounds = array<i64: 128, 128>}, {pipeline_mode = #tpu.pipeline_mode<synchronous>, transform_indices = @transform_2, window_bounds = array<i64: 1, 128>}, {pipeline_mode = #tpu.pipeline_mode<synchronous>, transform_indices = @transform_3, window_bounds = array<i64: 1, 128>}, {pipeline_mode = #tpu.pipeline_mode<synchronous>, transform_indices = @transform_4, window_bounds = array<i64: 128, 128>}, {pipeline_mode = #tpu.pipeline_mode<synchronous>, transform_indices = @transform_5, window_bounds = array<i64: 1, 128>}, {transform_indices = @transform_6, window_bounds = array<i64: 128, 128>}]} {
    %c0 = arith.constant 0 : index
    %c0_0 = arith.constant 0 : index
    %0 = vector.load %arg1[%c0, %c0_0] : memref<128x128xf32, #tpu.memory_space<vmem>>, vector<128x128xf32>
    %c0_1 = arith.constant 0 : index
    %c0_2 = arith.constant 0 : index
    %1 = vector.load %arg2[%c0_1, %c0_2] : memref<128x128xf32, #tpu.memory_space<vmem>>, vector<128x128xf32>
    %cst = arith.constant dense<0.000000e+00> : vector<128x128xf32>
    %2 = tpu.matmul %0, %1, %cst {dimension_numbers = #tpu.dot_dimension_numbers<[1], [0], [0], [1], [0, 0, 1, 1], [], []>, precision = #tpu.contract_precision<fp32>} : vector<128x128xf32>, vector<128x128xf32>, vector<128x128xf32> -> vector<128x128xf32>
    %3 = arith.subf %0, %2 : vector<128x128xf32>
    %4 = arith.mulf %3, %3 : vector<128x128xf32>
    %cst_3 = arith.constant dense<0.000000e+00> : vector<128x128xf32>
    %5 = tpu.matmul %4, %1, %cst_3 {dimension_numbers = #tpu.dot_dimension_numbers<[1], [0], [0], [1], [0, 0, 1, 1], [], []>, precision = #tpu.contract_precision<fp32>} : vector<128x128xf32>, vector<128x128xf32>, vector<128x128xf32> -> vector<128x128xf32>
    %cst_4 = arith.constant 9.99999974E-6 : f32
    %6 = vector.broadcast %cst_4 : f32 to vector<128x128xf32>
    %7 = arith.addf %5, %6 : vector<128x128xf32>
    %8 = math.rsqrt %7 : vector<128x128xf32>
    %9 = arith.mulf %3, %8 : vector<128x128xf32>
    %c0_5 = arith.constant 0 : index
    %c0_6 = arith.constant 0 : index
    %10 = vector.load %arg3[%c0_5, %c0_6] : memref<1x128xf32, #tpu.memory_space<vmem>>, vector<1x128xf32>
    %11 = vector.broadcast %10 : vector<1x128xf32> to vector<128x128xf32>
    %12 = arith.mulf %9, %11 : vector<128x128xf32>
    %c0_7 = arith.constant 0 : index
    %c0_8 = arith.constant 0 : index
    %13 = vector.load %arg4[%c0_7, %c0_8] : memref<1x128xf32, #tpu.memory_space<vmem>>, vector<1x128xf32>
    %14 = vector.broadcast %13 : vector<1x128xf32> to vector<128x128xf32>
    %15 = arith.addf %12, %14 : vector<128x128xf32>
    %c0_9 = arith.constant 0 : index
    %c0_10 = arith.constant 0 : index
    %16 = vector.load %arg5[%c0_9, %c0_10] : memref<128x128xf32, #tpu.memory_space<vmem>>, vector<128x128xf32>
    %cst_11 = arith.constant dense<0.000000e+00> : vector<128x128xf32>
    %17 = tpu.matmul %15, %16, %cst_11 {dimension_numbers = #tpu.dot_dimension_numbers<[1], [0], [0], [1], [0, 0, 1, 1], [], []>, precision = #tpu.contract_precision<fp32>} : vector<128x128xf32>, vector<128x128xf32>, vector<128x128xf32> -> vector<128x128xf32>
    %c0_12 = arith.constant 0 : index
    %c0_13 = arith.constant 0 : index
    %18 = vector.load %arg6[%c0_12, %c0_13] : memref<1x128xf32, #tpu.memory_space<vmem>>, vector<1x128xf32>
    %19 = vector.broadcast %18 : vector<1x128xf32> to vector<128x128xf32>
    %20 = arith.addf %17, %19 : vector<128x128xf32>
    %c0_14 = arith.constant 0 : index
    %c0_15 = arith.constant 0 : index
    %21 = vector.load %arg7[%c0_14, %c0_15] : memref<128x128xf32, #tpu.memory_space<vmem>>, vector<128x128xf32>
    tpu.vector_store %arg7[%c0_14, %c0_15], %20 {strides = array<i32>} : memref<128x128xf32, #tpu.memory_space<vmem>>, vector<128x128xf32>,
    return
  }
  func.func @transform_0(%arg0: i32) -> (i32, i32) {
    %c0_i32 = arith.constant 0 : i32
    %c0_i32_0 = arith.constant 0 : i32
    return %arg0, %c0_i32 : i32, i32
  }
  func.func @transform_1(%arg0: i32) -> (i32, i32) {
    %c0_i32 = arith.constant 0 : i32
    %c0_i32_0 = arith.constant 0 : i32
    %c0_i32_1 = arith.constant 0 : i32
    return %c0_i32, %c0_i32_0 : i32, i32
  }
  func.func @transform_2(%arg0: i32) -> (i32, i32) {
    %c0_i32 = arith.constant 0 : i32
    %c0_i32_0 = arith.constant 0 : i32
    %c0_i32_1 = arith.constant 0 : i32
    return %c0_i32, %c0_i32_0 : i32, i32
  }
  func.func @transform_3(%arg0: i32) -> (i32, i32) {
    %c0_i32 = arith.constant 0 : i32
    %c0_i32_0 = arith.constant 0 : i32
    %c0_i32_1 = arith.constant 0 : i32
    return %c0_i32, %c0_i32_0 : i32, i32
  }
  func.func @transform_4(%arg0: i32) -> (i32, i32) {
    %c0_i32 = arith.constant 0 : i32
    %c0_i32_0 = arith.constant 0 : i32
    %c0_i32_1 = arith.constant 0 : i32
    return %c0_i32, %c0_i32_0 : i32, i32
  }
  func.func @transform_5(%arg0: i32) -> (i32, i32) {
    %c0_i32 = arith.constant 0 : i32
    %c0_i32_0 = arith.constant 0 : i32
    %c0_i32_1 = arith.constant 0 : i32
    return %c0_i32, %c0_i32_0 : i32, i32
  }
  func.func @transform_6(%arg0: i32) -> (i32, i32) {
    %c0_i32 = arith.constant 0 : i32
    %c0_i32_0 = arith.constant 0 : i32
    return %arg0, %c0_i32 : i32, i32
  }
}

</mosaic_0001>

<llo_original>
// kernel: tpu_custom_call.1
$region0: #{tpu_custom_call.1}
  #allocation0 [shape = 'u32[]', space=smem, size = 0x4, offset = 0x4, fixed_abs, tag = 'smem constant byte address 0x4 - core index']
  #allocation1 [shape = 'u32[144,128]{1,0:T(1,128)}', space=vmem, size = 0x12000, scoped, tag = 'internal scratch']
  %s0 = inlined_call_operand.hbm [shape: f32[128,128], index: 0, kind: input, shape index: {}]
  %s1 = inlined_call_operand.hbm [shape: f32[128,128], index: 1, kind: input, shape index: {}]
  %s2 = inlined_call_operand.vmem [shape: f32[1,128], index: 2, kind: input, shape index: {}]
  %s3 = inlined_call_operand.vmem [shape: f32[1,128], index: 3, kind: input, shape index: {}]
  %s4 = inlined_call_operand.hbm [shape: f32[128,128], index: 4, kind: input, shape index: {}]
  %s5 = inlined_call_operand.vmem [shape: f32[1,128], index: 5, kind: input, shape index: {}]
  %s6 = inlined_call_operand.hbm [shape: f32[128,128], index: 6, kind: output, shape index: {}]
  %s7 = sld [smem:[#allocation0]]
  $region46: #{tpu_custom_call.1} parent=0
    _
  %s9 = ssub.s32 1, %s7
  %s10 = scalar_select 0, %s9, %s7
  $region1: #{tpu_custom_call.1} parent=0
    #allocation2 [shape = 'u8[65536]{0}', space=vmem, size = 0x10000, scoped, tag = 'input window, operand 0, single buffered']
    #allocation3 [shape = 's32[1]{0}', space=sflag, size = 0x4, scoped, tag = 'scoped memory for tpu_custom_call.1']
    #allocation4 [shape = 's32[1]{0}', space=sflag, size = 0x4, scoped, tag = 'scoped memory for tpu_custom_call.1']
    #allocation5 [shape = 'u8[65536]{0}', space=vmem, size = 0x10000, scoped, tag = 'input window, operand 1, single buffered']
    #allocation6 [shape = 's32[1]{0}', space=sflag, size = 0x4, scoped, tag = 'scoped memory for tpu_custom_call.1']
    #allocation7 [shape = 'u8[65536]{0}', space=vmem, size = 0x10000, scoped, tag = 'input window, operand 4, single buffered']
    #allocation8 [shape = 'u8[65536]{0}', space=vmem, size = 0x10000, scoped, tag = 'output window, operand 0, single buffered']
    %11 = vsyncpa [#allocation3], 0
    %12 = vsyncpa [#allocation6], 0
    %13 = vsyncpa [#allocation4], 0
    // Predicated region
    $region2: #{tpu_custom_call.1} parent=1 // pred_check
      _
    $region3: #{tpu_custom_call.1} parent=1 // pred_check_branch
      %15 = sbr.rel (0) target = $region5
    $region4: #{tpu_custom_call.1} parent=1 // pred_region
      %s17 = ssub.s32 2048, 2048
      %18 = vsyncadd [#allocation3], %s17
      %s19 = sshll.u32 [#allocation2], 4
      %s20 = int_to_ptr.vmem [resolvable:$true] %s19
      %25 = dma.hbm_to_vmem [thread:$0]  %s0, 2048, %s20, [#allocation3], 128, 128, 8
    $region5: #{tpu_custom_call.1} parent=1 // pred_fallthru
      _
    // Predicated region
    $region6: #{tpu_custom_call.1} parent=1 // pred_check
      _
    $region7: #{tpu_custom_call.1} parent=1 // pred_check_branch
      %27 = sbr.rel (0) target = $region9
    $region8: #{tpu_custom_call.1} parent=1 // pred_region
      %s29 = ssub.s32 2048, 2048
      %30 = vsyncadd [#allocation6], %s29
      %s31 = sshll.u32 [#allocation5], 4
      %s32 = int_to_ptr.vmem [resolvable:$true] %s31
      %37 = dma.hbm_to_vmem [thread:$0]  %s1, 2048, %s32, [#allocation6], 128, 128, 8
    $region9: #{tpu_custom_call.1} parent=1 // pred_fallthru
      _
    // Predicated region
    $region10: #{tpu_custom_call.1} parent=1 // pred_check
      _
    $region11: #{tpu_custom_call.1} parent=1 // pred_check_branch
      %39 = sbr.rel (0) target = $region13
    $region12: #{tpu_custom_call.1} parent=1 // pred_region
      _
    $region13: #{tpu_custom_call.1} parent=1 // pred_fallthru
      _
    // Predicated region
    $region14: #{tpu_custom_call.1} parent=1 // pred_check
      _
    $region15: #{tpu_custom_call.1} parent=1 // pred_check_branch
      %41 = sbr.rel (0) target = $region17
    $region16: #{tpu_custom_call.1} parent=1 // pred_region
      _
    $region17: #{tpu_custom_call.1} parent=1 // pred_fallthru
      _
    // Predicated region
    $region18: #{tpu_custom_call.1} parent=1 // pred_check
      _
    $region19: #{tpu_custom_call.1} parent=1 // pred_check_branch
      %43 = sbr.rel (0) target = $region21
    $region20: #{tpu_custom_call.1} parent=1 // pred_region
      %s45 = ssub.s32 2048, 2048
      %46 = vsyncadd [#allocation6], %s45
      %s47 = sshll.u32 [#allocation7], 4
      %s48 = int_to_ptr.vmem [resolvable:$true] %s47
      %53 = dma.hbm_to_vmem [thread:$0]  %s4, 2048, %s48, [#allocation6], 128, 128, 8
    $region21: #{tpu_custom_call.1} parent=1 // pred_fallthru
      _
    // Predicated region
    $region22: #{tpu_custom_call.1} parent=1 // pred_check
      _
    $region23: #{tpu_custom_call.1} parent=1 // pred_check_branch
      %55 = sbr.rel (0) target = $region25
    $region24: #{tpu_custom_call.1} parent=1 // pred_region
      _
    $region25: #{tpu_custom_call.1} parent=1 // pred_fallthru
      _
    // Predicated region
    $region26: #{tpu_custom_call.1} parent=1 // pred_check
      _
    $region27: #{tpu_custom_call.1} parent=1 // pred_check_branch
      %57 = sbr.rel (0) target = $region29
    $region28: #{tpu_custom_call.1} parent=1 // pred_region
      %58 = dma.done [#allocation3], 2048
    $region29: #{tpu_custom_call.1} parent=1 // pred_fallthru
      _
    // Predicated region
    $region30: #{tpu_custom_call.1} parent=1 // pred_check
      _
    $region31: #{tpu_custom_call.1} parent=1 // pred_check_branch
      %60 = sbr.rel (0) target = $region33
    $region32: #{tpu_custom_call.1} parent=1 // pred_region
      %61 = dma.done [#allocation6], 2048
    $region33: #{tpu_custom_call.1} parent=1 // pred_fallthru
      _
    // Predicated region
    $region34: #{tpu_custom_call.1} parent=1 // pred_check
      _
    $region35: #{tpu_custom_call.1} parent=1 // pred_check_branch
      %63 = sbr.rel (0) target = $region37
    $region36: #{tpu_custom_call.1} parent=1 // pred_region
      %64 = dma.done [#allocation6], 2048
    $region37: #{tpu_custom_call.1} parent=1 // pred_fallthru
      _
    %v65 = vld [vmem:[#allocation2] sm:$0xff]
    %v66 = vld [vmem:[#allocation2 + $0x8] sm:$0xff]
    %v67 = vld [vmem:[#allocation2 + $0x10] sm:$0xff]
    %v68 = vld [vmem:[#allocation2 + $0x18] sm:$0xff]
    %v69 = vld [vmem:[#allocation2 + $0x20] sm:$0xff]
    %v70 = vld [vmem:[#allocation2 + $0x28] sm:$0xff]
    %v71 = vld [vmem:[#allocation2 + $0x30] sm:$0xff]
    %v72 = vld [vmem:[#allocation2 + $0x38] sm:$0xff]
    %v73 = vld [vmem:[#allocation2 + $0x40] sm:$0xff]
    %v74 = vld [vmem:[#allocation2 + $0x48] sm:$0xff]
    %v75 = vld [vmem:[#allocation2 + $0x50] sm:$0xff]
    %v76 = vld [vmem:[#allocation2 + $0x58] sm:$0xff]
    %v77 = vld [vmem:[#allocation2 + $0x60] sm:$0xff]
    %v78 = vld [vmem:[#allocation2 + $0x68] sm:$0xff]
    %v79 = vld [vmem:[#allocation2 + $0x70] sm:$0xff]
    %v80 = vld [vmem:[#allocation2 + $0x78] sm:$0xff]
    %v81 = vld [vmem:[#allocation5] sm:$0xff]
    %v82 = vld [vmem:[#allocation5 + $0x8] sm:$0xff]
    %v83 = vld [vmem:[#allocation5 + $0x10] sm:$0xff]
    %v84 = vld [vmem:[#allocation5 + $0x18] sm:$0xff]
    %v85 = vld [vmem:[#allocation5 + $0x20] sm:$0xff]
    %v86 = vld [vmem:[#allocation5 + $0x28] sm:$0xff]
    %v87 = vld [vmem:[#allocation5 + $0x30] sm:$0xff]
    %v88 = vld [vmem:[#allocation5 + $0x38] sm:$0xff]
    %v89 = vld [vmem:[#allocation5 + $0x40] sm:$0xff]
    %v90 = vld [vmem:[#allocation5 + $0x48] sm:$0xff]
    %v91 = vld [vmem:[#allocation5 + $0x50] sm:$0xff]
    %v92 = vld [vmem:[#allocation5 + $0x58] sm:$0xff]
    %v93 = vld [vmem:[#allocation5 + $0x60] sm:$0xff]
    %v94 = vld [vmem:[#allocation5 + $0x68] sm:$0xff]
    %v95 = vld [vmem:[#allocation5 + $0x70] sm:$0xff]
    %v96 = vld [vmem:[#allocation5 + $0x78] sm:$0xff]
    %97 = vmatprep.subr.mxu0 0.0
    %v98 = vand.u32 %v81, 4294901760
    %99 = vmatpush1.msra.mxu0 %v98
    %100 = vmatprep.subr.mxu0 0.0
    %v101 = vand.u32 %v82, 4294901760
    %102 = vmatpush1.msra.mxu0 %v101
    %103 = vmatprep.subr.mxu0 0.0
    %v104 = vand.u32 %v83, 4294901760
    %105 = vmatpush1.msra.mxu0 %v104
    %106 = vmatprep.subr.mxu0 0.0
    %v107 = vand.u32 %v84, 4294901760
    %108 = vmatpush1.msra.mxu0 %v107
    %109 = vmatprep.subr.mxu0 0.0
    %v110 = vand.u32 %v85, 4294901760
    %111 = vmatpush1.msra.mxu0 %v110
    %112 = vmatprep.subr.mxu0 0.0
    %v113 = vand.u32 %v86, 4294901760
    %114 = vmatpush1.msra.mxu0 %v113
    %115 = vmatprep.subr.mxu0 0.0
    %v116 = vand.u32 %v87, 4294901760
    %117 = vmatpush1.msra.mxu0 %v116
    %118 = vmatprep.subr.mxu0 0.0
    %v119 = vand.u32 %v88, 4294901760
    %120 = vmatpush1.msra.mxu0 %v119
    %121 = vmatprep.subr.mxu0 0.0
    %v122 = vand.u32 %v89, 4294901760
    %123 = vmatpush1.msra.mxu0 %v122
    %124 = vmatprep.subr.mxu0 0.0
    %v125 = vand.u32 %v90, 4294901760
    %126 = vmatpush1.msra.mxu0 %v125
    %127 = vmatprep.subr.mxu0 0.0
    %v128 = vand.u32 %v91, 4294901760
    %129 = vmatpush1.msra.mxu0 %v128
    %130 = vmatprep.subr.mxu0 0.0
    %v131 = vand.u32 %v92, 4294901760
    %132 = vmatpush1.msra.mxu0 %v131
    %133 = vmatprep.subr.mxu0 0.0
    %v134 = vand.u32 %v93, 4294901760
    %135 = vmatpush1.msra.mxu0 %v134
    %136 = vmatprep.subr.mxu0 0.0
    %v137 = vand.u32 %v94, 4294901760
    %138 = vmatpush1.msra.mxu0 %v137
    %139 = vmatprep.subr.mxu0 0.0
    %v140 = vand.u32 %v95, 4294901760
    %141 = vmatpush1.msra.mxu0 %v140
    %142 = vmatprep.subr.mxu0 0.0
    %v143 = vand.u32 %v96, 4294901760
    %144 = vmatpush1.msra.mxu0 %v143
    %145 = vmatprep.subr.mxu0 0.0
    %146 = vmatpush1.msra.mxu0 0.0
    %147 = vmatprep.subr.mxu0 0.0
    %148 = vmatpush1.msra.mxu0 0.0
    %149 = vmatprep.subr.mxu0 0.0
    %150 = vmatpush1.msra.mxu0 0.0
    %151 = vmatprep.subr.mxu0 0.0
    %152 = vmatpush1.msra.mxu0 0.0
    %153 = vmatprep.subr.mxu0 0.0
    %154 = vmatpush1.msra.mxu0 0.0
    %155 = vmatprep.subr.mxu0 0.0
    %156 = vmatpush1.msra.mxu0 0.0
    %157 = vmatprep.subr.mxu0 0.0
    %158 = vmatpush1.msra.mxu0 0.0
    %159 = vmatprep.subr.mxu0 0.0
    %160 = vmatpush1.msra.mxu0 0.0
    %161 = vmatprep.subr.mxu0 0.0
    %162 = vmatpush1.msra.mxu0 0.0
    %163 = vmatprep.subr.mxu0 0.0
    %164 = vmatpush1.msra.mxu0 0.0
    %165 = vmatprep.subr.mxu0 0.0
    %166 = vmatpush1.msra.mxu0 0.0
    %167 = vmatprep.subr.mxu0 0.0
    %168 = vmatpush1.msra.mxu0 0.0
    %169 = vmatprep.subr.mxu0 0.0
    %170 = vmatpush1.msra.mxu0 0.0
    %171 = vmatprep.subr.mxu0 0.0
    %172 = vmatpush1.msra.mxu0 0.0
    %173 = vmatprep.subr.mxu0 0.0
    %174 = vmatpush1.msra.mxu0 0.0
    %175 = vmatprep.subr.mxu0 0.0
    %176 = vmatpush1.msra.mxu0 0.0
    %177 = vmatprep.mubr.f32.mxu0 0.0
    %v178 = vand.u32 %v65, 4294901760
    %v179 = vsub.f32 %v65, %v178
    %v180 = vand.u32 %v179, 4294901760
    %v181 = vsub.f32 %v179, %v180
    %v182 = vand.u32 %v181, 4294901760
    %183 = vmatmul.mubr.f32.gmra.mrb[0].mxu0 %v182
    %v184 = vpop.f32.mrb[0].mxu0
    %v185 = vadd.f32 0.0, %v184
    %v186 = vpop.f32.mrb[0].mxu0
    %187 = vmatprep.mubr.f32.mxu0 0.0
    %v188 = vand.u32 %v66, 4294901760
    %v189 = vsub.f32 %v66, %v188
    %v190 = vand.u32 %v189, 4294901760
    %v191 = vsub.f32 %v189, %v190
    %v192 = vand.u32 %v191, 4294901760
    %193 = vmatmul.mubr.f32.gmra.mrb[0].mxu0 %v192
    %v194 = vpop.f32.mrb[0].mxu0
    %v195 = vadd.f32 0.0, %v194
    %v196 = vpop.f32.mrb[0].mxu0
    %197 = vmatprep.mubr.f32.mxu0 0.0
    %v198 = vand.u32 %v67, 4294901760
    %v199 = vsub.f32 %v67, %v198
    %v200 = vand.u32 %v199, 4294901760
    %v201 = vsub.f32 %v199, %v200
    %v202 = vand.u32 %v201, 4294901760
    %203 = vmatmul.mubr.f32.gmra.mrb[0].mxu0 %v202
    %v204 = vpop.f32.mrb[0].mxu0
    %v205 = vadd.f32 0.0, %v204
    %v206 = vpop.f32.mrb[0].mxu0
    %207 = vmatprep.mubr.f32.mxu0 0.0
    %v208 = vand.u32 %v68, 4294901760
    %v209 = vsub.f32 %v68, %v208
    %v210 = vand.u32 %v209, 4294901760
    %v211 = vsub.f32 %v209, %v210
    %v212 = vand.u32 %v211, 4294901760
    %213 = vmatmul.mubr.f32.gmra.mrb[0].mxu0 %v212
    %v214 = vpop.f32.mrb[0].mxu0
    %v215 = vadd.f32 0.0, %v214
    %v216 = vpop.f32.mrb[0].mxu0
    %217 = vmatprep.mubr.f32.mxu0 0.0
    %v218 = vand.u32 %v69, 4294901760
    %v219 = vsub.f32 %v69, %v218
    %v220 = vand.u32 %v219, 4294901760
    %v221 = vsub.f32 %v219, %v220
    %v222 = vand.u32 %v221, 4294901760
    %223 = vmatmul.mubr.f32.gmra.mrb[0].mxu0 %v222
    %v224 = vpop.f32.mrb[0].mxu0
    %v225 = vadd.f32 0.0, %v224
    %v226 = vpop.f32.mrb[0].mxu0
    %227 = vmatprep.mubr.f32.mxu0 0.0
    %v228 = vand.u32 %v70, 4294901760
    %v229 = vsub.f32 %v70, %v228
    %v230 = vand.u32 %v229, 4294901760
    %v231 = vsub.f32 %v229, %v230
    %v232 = vand.u32 %v231, 4294901760
    %233 = vmatmul.mubr.f32.gmra.mrb[0].mxu0 %v232
    %v234 = vpop.f32.mrb[0].mxu0
    %v235 = vadd.f32 0.0, %v234
    %v236 = vpop.f32.mrb[0].mxu0
    %237 = vmatprep.mubr.f32.mxu0 0.0
    %v238 = vand.u32 %v71, 4294901760
    %v239 = vsub.f32 %v71, %v238
    %v240 = vand.u32 %v239, 4294901760
    %v241 = vsub.f32 %v239, %v240
    %v242 = vand.u32 %v241, 4294901760
    %243 = vmatmul.mubr.f32.gmra.mrb[0].mxu0 %v242
    %v244 = vpop.f32.mrb[0].mxu0
    %v245 = vadd.f32 0.0, %v244
    %v246 = vpop.f32.mrb[0].mxu0
    %247 = vmatprep.mubr.f32.mxu0 0.0
    %v248 = vand.u32 %v72, 4294901760
    %v249 = vsub.f32 %v72, %v248
    %v250 = vand.u32 %v249, 4294901760
    %v251 = vsub.f32 %v249, %v250
    %v252 = vand.u32 %v251, 4294901760
    %253 = vmatmul.mubr.f32.gmra.mrb[0].mxu0 %v252
    %v254 = vpop.f32.mrb[0].mxu0
    %v255 = vadd.f32 0.0, %v254
    %v256 = vpop.f32.mrb[0].mxu0
    %257 = vmatprep.mubr.f32.mxu0 0.0
    %v258 = vand.u32 %v73, 4294901760
    %v259 = vsub.f32 %v73, %v258
    %v260 = vand.u32 %v259, 4294901760
    %v261 = vsub.f32 %v259, %v260
    %v262 = vand.u32 %v261, 4294901760
    %263 = vmatmul.mubr.f32.gmra.mrb[0].mxu0 %v262
    %v264 = vpop.f32.mrb[0].mxu0
    %v265 = vadd.f32 0.0, %v264
    %v266 = vpop.f32.mrb[0].mxu0
    %267 = vmatprep.mubr.f32.mxu0 0.0
    %v268 = vand.u32 %v74, 4294901760
    %v269 = vsub.f32 %v74, %v268
    %v270 = vand.u32 %v269, 4294901760
    %v271 = vsub.f32 %v269, %v270
    %v272 = vand.u32 %v271, 4294901760
    %273 = vmatmul.mubr.f32.gmra.mrb[0].mxu0 %v272
    %v274 = vpop.f32.mrb[0].mxu0
    %v275 = vadd.f32 0.0, %v274
    %v276 = vpop.f32.mrb[0].mxu0
    %277 = vmatprep.mubr.f32.mxu0 0.0
    %v278 = vand.u32 %v75, 4294901760
    %v279 = vsub.f32 %v75, %v278
    %v280 = vand.u32 %v279, 4294901760
    %v281 = vsub.f32 %v279, %v280
    %v282 = vand.u32 %v281, 4294901760
    %283 = vmatmul.mubr.f32.gmra.mrb[0].mxu0 %v282
    %v284 = vpop.f32.mrb[0].mxu0
    %v285 = vadd.f32 0.0, %v284
    %v286 = vpop.f32.mrb[0].mxu0
    %287 = vmatprep.mubr.f32.mxu0 0.0
    %v288 = vand.u32 %v76, 4294901760
    %v289 = vsub.f32 %v76, %v288
    %v290 = vand.u32 %v289, 4294901760
    %v291 = vsub.f32 %v289, %v290
    %v292 = vand.u32 %v291, 4294901760
    %293 = vmatmul.mubr.f32.gmra.mrb[0].mxu0 %v292
    %v294 = vpop.f32.mrb[0].mxu0
    %v295 = vadd.f32 0.0, %v294
    %v296 = vpop.f32.mrb[0].mxu0
    %297 = vmatprep.mubr.f32.mxu0 0.0
    %v298 = vand.u32 %v77, 4294901760
    %v299 = vsub.f32 %v77, %v298
    %v300 = vand.u32 %v299, 4294901760
    %v301 = vsub.f32 %v299, %v300
    %v302 = vand.u32 %v301, 4294901760
    %303 = vmatmul.mubr.f32.gmra.mrb[0].mxu0 %v302
    %v304 = vpop.f32.mrb[0].mxu0
    %v305 = vadd.f32 0.0, %v304
    %v306 = vpop.f32.mrb[0].mxu0
    %307 = vmatprep.mubr.f32.mxu0 0.0
    %v308 = vand.u32 %v78, 4294901760
    %v309 = vsub.f32 %v78, %v308
    %v310 = vand.u32 %v309, 4294901760
    %v311 = vsub.f32 %v309, %v310
    %v312 = vand.u32 %v311, 4294901760
    %313 = vmatmul.mubr.f32.gmra.mrb[0].mxu0 %v312
    %v314 = vpop.f32.mrb[0].mxu0
    %v315 = vadd.f32 0.0, %v314
    %v316 = vpop.f32.mrb[0].mxu0
    %317 = vmatprep.mubr.f32.mxu0 0.0
    %v318 = vand.u32 %v79, 4294901760
    %v319 = vsub.f32 %v79, %v318
    %v320 = vand.u32 %v319, 4294901760
    %v321 = vsub.f32 %v319, %v320
    %v322 = vand.u32 %v321, 4294901760
    %323 = vmatmul.mubr.f32.gmra.mrb[0].mxu0 %v322
    %v324 = vpop.f32.mrb[0].mxu0
    %v325 = vadd.f32 0.0, %v324
    %v326 = vpop.f32.mrb[0].mxu0
    %327 = vmatprep.mubr.f32.mxu0 0.0
    %v328 = vand.u32 %v80, 4294901760
    %v329 = vsub.f32 %v80, %v328
    %v330 = vand.u32 %v329, 4294901760
    %v331 = vsub.f32 %v329, %v330
    %v332 = vand.u32 %v331, 4294901760
    %333 = vmatmul.mubr.f32.gmra.mrb[0].mxu0 %v332
    %v334 = vpop.f32.mrb[0].mxu0
    %v335 = vadd.f32 0.0, %v334
    %v336 = vpop.f32.mrb[0].mxu0
    %337 = vdwg.mxu0
    %338 = vmatprep.subr.mxu0 0.0
    %v339 = vand.u32 %v81, 4294901760
    %v340 = vsub.f32 %v81, %v339
    %v341 = vand.u32 %v340, 4294901760
    %v342 = vsub.f32 %v340, %v341
    %v343 = vand.u32 %v342, 4294901760
    %344 = vmatpush1.msra.mxu0 %v343
    %345 = vmatprep.subr.mxu0 0.0
    %v346 = vand.u32 %v82, 4294901760
    %v347 = vsub.f32 %v82, %v346
    %v348 = vand.u32 %v347, 4294901760
    %v349 = vsub.f32 %v347, %v348
    %v350 = vand.u32 %v349, 4294901760
    %351 = vmatpush1.msra.mxu0 %v350
    %352 = vmatprep.subr.mxu0 0.0
    %v353 = vand.u32 %v83, 4294901760
    %v354 = vsub.f32 %v83, %v353
    %v355 = vand.u32 %v354, 4294901760
    %v356 = vsub.f32 %v354, %v355
    %v357 = vand.u32 %v356, 4294901760
    %358 = vmatpush1.msra.mxu0 %v357
    %359 = vmatprep.subr.mxu0 0.0
    %v360 = vand.u32 %v84, 4294901760
    %v361 = vsub.f32 %v84, %v360
    %v362 = vand.u32 %v361, 4294901760
    %v363 = vsub.f32 %v361, %v362
    %v364 = vand.u32 %v363, 4294901760
    %365 = vmatpush1.msra.mxu0 %v364
    %366 = vmatprep.subr.mxu0 0.0
    %v367 = vand.u32 %v85, 4294901760
    %v368 = vsub.f32 %v85, %v367
    %v369 = vand.u32 %v368, 4294901760
    %v370 = vsub.f32 %v368, %v369
    %v371 = vand.u32 %v370, 4294901760
    %372 = vmatpush1.msra.mxu0 %v371
    %373 = vmatprep.subr.mxu0 0.0
    %v374 = vand.u32 %v86, 4294901760
    %v375 = vsub.f32 %v86, %v374
    %v376 = vand.u32 %v375, 4294901760
    %v377 = vsub.f32 %v375, %v376
    %v378 = vand.u32 %v377, 4294901760
    %379 = vmatpush1.msra.mxu0 %v378
    %380 = vmatprep.subr.mxu0 0.0
    %v381 = vand.u32 %v87, 4294901760
    %v382 = vsub.f32 %v87, %v381
    %v383 = vand.u32 %v382, 4294901760
    %v384 = vsub.f32 %v382, %v383
    %v385 = vand.u32 %v384, 4294901760
    %386 = vmatpush1.msra.mxu0 %v385
    %387 = vmatprep.subr.mxu0 0.0
    %v388 = vand.u32 %v88, 4294901760
    %v389 = vsub.f32 %v88, %v388
    %v390 = vand.u32 %v389, 4294901760
    %v391 = vsub.f32 %v389, %v390
    %v392 = vand.u32 %v391, 4294901760
    %393 = vmatpush1.msra.mxu0 %v392
    %394 = vmatprep.subr.mxu0 0.0
    %v395 = vand.u32 %v89, 4294901760
    %v396 = vsub.f32 %v89, %v395
    %v397 = vand.u32 %v396, 4294901760
    %v398 = vsub.f32 %v396, %v397
    %v399 = vand.u32 %v398, 4294901760
    %400 = vmatpush1.msra.mxu0 %v399
    %401 = vmatprep.subr.mxu0 0.0
    %v402 = vand.u32 %v90, 4294901760
    %v403 = vsub.f32 %v90, %v402
    %v404 = vand.u32 %v403, 4294901760
    %v405 = vsub.f32 %v403, %v404
    %v406 = vand.u32 %v405, 4294901760
    %407 = vmatpush1.msra.mxu0 %v406
    %408 = vmatprep.subr.mxu0 0.0
    %v409 = vand.u32 %v91, 4294901760
    %v410 = vsub.f32 %v91, %v409
    %v411 = vand.u32 %v410, 4294901760
    %v412 = vsub.f32 %v410, %v411
    %v413 = vand.u32 %v412, 4294901760
    %414 = vmatpush1.msra.mxu0 %v413
    %415 = vmatprep.subr.mxu0 0.0
    %v416 = vand.u32 %v92, 4294901760
    %v417 = vsub.f32 %v92, %v416
    %v418 = vand.u32 %v417, 4294901760
    %v419 = vsub.f32 %v417, %v418
    %v420 = vand.u32 %v419, 4294901760
    %421 = vmatpush1.msra.mxu0 %v420
    %422 = vmatprep.subr.mxu0 0.0
    %v423 = vand.u32 %v93, 4294901760
    %v424 = vsub.f32 %v93, %v423
    %v425 = vand.u32 %v424, 4294901760
    %v426 = vsub.f32 %v424, %v425
    %v427 = vand.u32 %v426, 4294901760
    %428 = vmatpush1.msra.mxu0 %v427
    %429 = vmatprep.subr.mxu0 0.0
    %v430 = vand.u32 %v94, 4294901760
    %v431 = vsub.f32 %v94, %v430
    %v432 = vand.u32 %v431, 4294901760
    %v433 = vsub.f32 %v431, %v432
    %v434 = vand.u32 %v433, 4294901760
    %435 = vmatpush1.msra.mxu0 %v434
    %436 = vmatprep.subr.mxu0 0.0
    %v437 = vand.u32 %v95, 4294901760
    %v438 = vsub.f32 %v95, %v437
    %v439 = vand.u32 %v438, 4294901760
    %v440 = vsub.f32 %v438, %v439
    %v441 = vand.u32 %v440, 4294901760
    %442 = vmatpush1.msra.mxu0 %v441
    %443 = vmatprep.subr.mxu0 0.0
    %v444 = vand.u32 %v96, 4294901760
    %v445 = vsub.f32 %v96, %v444
    %v446 = vand.u32 %v445, 4294901760
    %v447 = vsub.f32 %v445, %v446
    %v448 = vand.u32 %v447, 4294901760
    %449 = vmatpush1.msra.mxu0 %v448
    %450 = vmatprep.subr.mxu0 0.0
    %451 = vmatpush1.msra.mxu0 0.0
    %452 = vmatprep.subr.mxu0 0.0
    %453 = vmatpush1.msra.mxu0 0.0
    %454 = vmatprep.subr.mxu0 0.0
    %455 = vmatpush1.msra.mxu0 0.0
    %456 = vmatprep.subr.mxu0 0.0
    %457 = vmatpush1.msra.mxu0 0.0
    %458 = vmatprep.subr.mxu0 0.0
    %459 = vmatpush1.msra.mxu0 0.0
    %460 = vmatprep.subr.mxu0 0.0
    %461 = vmatpush1.msra.mxu0 0.0
    %462 = vmatprep.subr.mxu0 0.0
    %463 = vmatpush1.msra.mxu0 0.0
    %464 = vmatprep.subr.mxu0 0.0
    %465 = vmatpush1.msra.mxu0 0.0
    %466 = vmatprep.subr.mxu0 0.0
    %467 = vmatpush1.msra.mxu0 0.0
    %468 = vmatprep.subr.mxu0 0.0
    %469 = vmatpush1.msra.mxu0 0.0
    %470 = vmatprep.subr.mxu0 0.0
    %471 = vmatpush1.msra.mxu0 0.0
    %472 = vmatprep.subr.mxu0 0.0
    %473 = vmatpush1.msra.mxu0 0.0
    %474 = vmatprep.subr.mxu0 0.0
    %475 = vmatpush1.msra.mxu0 0.0
    %476 = vmatprep.subr.mxu0 0.0
    %477 = vmatpush1.msra.mxu0 0.0
    %478 = vmatprep.subr.mxu0 0.0
    %479 = vmatpush1.msra.mxu0 0.0
    %480 = vmatprep.subr.mxu0 0.0
    %481 = vmatpush1.msra.mxu0 0.0
    %482 = vmatprep.mubr.f32.mxu0 0.0
    %v483 = vand.u32 %v65, 4294901760
    %484 = vmatmul.mubr.f32.gmra.mrb[0].mxu0 %v483
    %v485 = vpop.f32.mrb[0].mxu0
    %v486 = vadd.f32 %v185, %v485
    %v487 = vpop.f32.mrb[0].mxu0
    %488 = vmatprep.mubr.f32.mxu0 0.0
    %v489 = vand.u32 %v66, 4294901760
    %490 = vmatmul.mubr.f32.gmra.mrb[0].mxu0 %v489
    %v491 = vpop.f32.mrb[0].mxu0
    %v492 = vadd.f32 %v195, %v491
    %v493 = vpop.f32.mrb[0].mxu0
    %494 = vmatprep.mubr.f32.mxu0 0.0
    %v495 = vand.u32 %v67, 4294901760
    %496 = vmatmul.mubr.f32.gmra.mrb[0].mxu0 %v495
    %v497 = vpop.f32.mrb[0].mxu0
    %v498 = vadd.f32 %v205, %v497
    %v499 = vpop.f32.mrb[0].mxu0
    %500 = vmatprep.mubr.f32.mxu0 0.0
    %v501 = vand.u32 %v68, 4294901760
    %502 = vmatmul.mubr.f32.gmra.mrb[0].mxu0 %v501
    %v503 = vpop.f32.mrb[0].mxu0
    %v504 = vadd.f32 %v215, %v503
    %v505 = vpop.f32.mrb[0].mxu0
    %506 = vmatprep.mubr.f32.mxu0 0.0
    %v507 = vand.u32 %v69, 4294901760
    %508 = vmatmul.mubr.f32.gmra.mrb[0].mxu0 %v507
    %v509 = vpop.f32.mrb[0].mxu0
    %v510 = vadd.f32 %v225, %v509
    %v511 = vpop.f32.mrb[0].mxu0
    %512 = vmatprep.mubr.f32.mxu0 0.0
    %v513 = vand.u32 %v70, 4294901760
    %514 = vmatmul.mubr.f32.gmra.mrb[0].mxu0 %v513
    %v515 = vpop.f32.mrb[0].mxu0
    %v516 = vadd.f32 %v235, %v515
    %v517 = vpop.f32.mrb[0].mxu0
    %518 = vmatprep.mubr.f32.mxu0 0.0
    %v519 = vand.u32 %v71, 4294901760
    %520 = vmatmul.mubr.f32.gmra.mrb[0].mxu0 %v519
    %v521 = vpop.f32.mrb[0].mxu0
    %v522 = vadd.f32 %v245, %v521
    %v523 = vpop.f32.mrb[0].mxu0
    %524 = vmatprep.mubr.f32.mxu0 0.0
    %v525 = vand.u32 %v72, 4294901760
    %526 = vmatmul.mubr.f32.gmra.mrb[0].mxu0 %v525
    %v527 = vpop.f32.mrb[0].mxu0
    %v528 = vadd.f32 %v255, %v527
    %v529 = vpop.f32.mrb[0].mxu0
    %530 = vmatprep.mubr.f32.mxu0 0.0
    %v531 = vand.u32 %v73, 4294901760
    %532 = vmatmul.mubr.f32.gmra.mrb[0].mxu0 %v531
    %v533 = vpop.f32.mrb[0].mxu0
    %v534 = vadd.f32 %v265, %v533
    %v535 = vpop.f32.mrb[0].mxu0
    %536 = vmatprep.mubr.f32.mxu0 0.0
    %v537 = vand.u32 %v74, 4294901760
    %538 = vmatmul.mubr.f32.gmra.mrb[0].mxu0 %v537
    %v539 = vpop.f32.mrb[0].mxu0
    %v540 = vadd.f32 %v275, %v539
    %v541 = vpop.f32.mrb[0].mxu0
    %542 = vmatprep.mubr.f32.mxu0 0.0
    %v543 = vand.u32 %v75, 4294901760
    %544 = vmatmul.mubr.f32.gmra.mrb[0].mxu0 %v543
    %v545 = vpop.f32.mrb[0].mxu0
    %v546 = vadd.f32 %v285, %v545
    %v547 = vpop.f32.mrb[0].mxu0
    %548 = vmatprep.mubr.f32.mxu0 0.0
    %v549 = vand.u32 %v76, 4294901760
    %550 = vmatmul.mubr.f32.gmra.mrb[0].mxu0 %v549
    %v551 = vpop.f32.mrb[0].mxu0
    %v552 = vadd.f32 %v295, %v551
    %v553 = vpop.f32.mrb[0].mxu0
    %554 = vmatprep.mubr.f32.mxu0 0.0
    %v555 = vand.u32 %v77, 4294901760
    %556 = vmatmul.mubr.f32.gmra.mrb[0].mxu0 %v555
    %v557 = vpop.f32.mrb[0].mxu0
    %v558 = vadd.f32 %v305, %v557
    %v559 = vpop.f32.mrb[0].mxu0
    %560 = vmatprep.mubr.f32.mxu0 0.0
    %v561 = vand.u32 %v78, 4294901760
    %562 = vmatmul.mubr.f32.gmra.mrb[0].mxu0 %v561
    %v563 = vpop.f32.mrb[0].mxu0
    %v564 = vadd.f32 %v315, %v563
    %v565 = vpop.f32.mrb[0].mxu0
    %566 = vmatprep.mubr.f32.mxu0 0.0
    %v567 = vand.u32 %v79, 4294901760
    %568 = vmatmul.mubr.f32.gmra.mrb[0].mxu0 %v567
    %v569 = vpop.f32.mrb[0].mxu0
    %v570 = vadd.f32 %v325, %v569
    %v571 = vpop.f32.mrb[0].mxu0
    %572 = vmatprep.mubr.f32.mxu0 0.0
    %v573 = vand.u32 %v80, 4294901760
    %574 = vmatmul.mubr.f32.gmra.mrb[0].mxu0 %v573
    %v575 = vpop.f32.mrb[0].mxu0
    %v576 = vadd.f32 %v335, %v575
    %v577 = vpop.f32.mrb[0].mxu0
    %578 = vdwg.mxu0
    %579 = vmatprep.subr.mxu0 0.0
    %v580 = vand.u32 %v81, 4294901760
    %v581 = vsub.f32 %v81, %v580
    %582 = vmatpush1.msra.mxu0 %v581
    %583 = vmatprep.subr.mxu0 0.0
    %v584 = vand.u32 %v82, 4294901760
    %v585 = vsub.f32 %v82, %v584
    %586 = vmatpush1.msra.mxu0 %v585
    %587 = vmatprep.subr.mxu0 0.0
    %v588 = vand.u32 %v83, 4294901760
    %v589 = vsub.f32 %v83, %v588
    %590 = vmatpush1.msra.mxu0 %v589
    %591 = vmatprep.subr.mxu0 0.0
    %v592 = vand.u32 %v84, 4294901760
    %v593 = vsub.f32 %v84, %v592
    %594 = vmatpush1.msra.mxu0 %v593
    %595 = vmatprep.subr.mxu0 0.0
    %v596 = vand.u32 %v85, 4294901760
    %v597 = vsub.f32 %v85, %v596
    %598 = vmatpush1.msra.mxu0 %v597
    %599 = vmatprep.subr.mxu0 0.0
    %v600 = vand.u32 %v86, 4294901760
    %v601 = vsub.f32 %v86, %v600
    %602 = vmatpush1.msra.mxu0 %v601
    %603 = vmatprep.subr.mxu0 0.0
    %v604 = vand.u32 %v87, 4294901760
    %v605 = vsub.f32 %v87, %v604
    %606 = vmatpush1.msra.mxu0 %v605
    %607 = vmatprep.subr.mxu0 0.0
    %v608 = vand.u32 %v88, 4294901760
    %v609 = vsub.f32 %v88, %v608
    %610 = vmatpush1.msra.mxu0 %v609
    %611 = vmatprep.subr.mxu0 0.0
    %v612 = vand.u32 %v89, 4294901760
    %v613 = vsub.f32 %v89, %v612
    %614 = vmatpush1.msra.mxu0 %v613
    %615 = vmatprep.subr.mxu0 0.0
    %v616 = vand.u32 %v90, 4294901760
    %v617 = vsub.f32 %v90, %v616
    %618 = vmatpush1.msra.mxu0 %v617
    %619 = vmatprep.subr.mxu0 0.0
    %v620 = vand.u32 %v91, 4294901760
    %v621 = vsub.f32 %v91, %v620
    %622 = vmatpush1.msra.mxu0 %v621
    %623 = vmatprep.subr.mxu0 0.0
    %v624 = vand.u32 %v92, 4294901760
    %v625 = vsub.f32 %v92, %v624
    %626 = vmatpush1.msra.mxu0 %v625
    %627 = vmatprep.subr.mxu0 0.0
    %v628 = vand.u32 %v93, 4294901760
    %v629 = vsub.f32 %v93, %v628
    %630 = vmatpush1.msra.mxu0 %v629
    %631 = vmatprep.subr.mxu0 0.0
    %v632 = vand.u32 %v94, 4294901760
    %v633 = vsub.f32 %v94, %v632
    %634 = vmatpush1.msra.mxu0 %v633
    %635 = vmatprep.subr.mxu0 0.0
    %v636 = vand.u32 %v95, 4294901760
    %v637 = vsub.f32 %v95, %v636
    %638 = vmatpush1.msra.mxu0 %v637
    %639 = vmatprep.subr.mxu0 0.0
    %v640 = vand.u32 %v96, 4294901760
    %v641 = vsub.f32 %v96, %v640
    %642 = vmatpush1.msra.mxu0 %v641
    %643 = vmatprep.subr.mxu0 0.0
    %644 = vmatpush1.msra.mxu0 0.0
    %645 = vmatprep.subr.mxu0 0.0
    %646 = vmatpush1.msra.mxu0 0.0
    %647 = vmatprep.subr.mxu0 0.0
    %648 = vmatpush1.msra.mxu0 0.0
    %649 = vmatprep.subr.mxu0 0.0
    %650 = vmatpush1.msra.mxu0 0.0
    %651 = vmatprep.subr.mxu0 0.0
    %652 = vmatpush1.msra.mxu0 0.0
    %653 = vmatprep.subr.mxu0 0.0
    %654 = vmatpush1.msra.mxu0 0.0
    %655 = vmatprep.subr.mxu0 0.0
    %656 = vmatpush1.msra.mxu0 0.0
    %657 = vmatprep.subr.mxu0 0.0
    %658 = vmatpush1.msra.mxu0 0.0
    %659 = vmatprep.subr.mxu0 0.0
    %660 = vmatpush1.msra.mxu0 0.0
    %661 = vmatprep.subr.mxu0 0.0
    %662 = vmatpush1.msra.mxu0 0.0
    %663 = vmatprep.subr.mxu0 0.0
    %664 = vmatpush1.msra.mxu0 0.0
    %665 = vmatprep.subr.mxu0 0.0
    %666 = vmatpush1.msra.mxu0 0.0
    %667 = vmatprep.subr.mxu0 0.0
    %668 = vmatpush1.msra.mxu0 0.0
    %669 = vmatprep.subr.mxu0 0.0
    %670 = vmatpush1.msra.mxu0 0.0
    %671 = vmatprep.subr.mxu0 0.0
    %672 = vmatpush1.msra.mxu0 0.0
    %673 = vmatprep.subr.mxu0 0.0
    %674 = vmatpush1.msra.mxu0 0.0
    %675 = vmatprep.mubr.f32.mxu0 0.0
    %v676 = vand.u32 %v65, 4294901760
    %v677 = vsub.f32 %v65, %v676
    %678 = vmatmul.mubr.f32.gmra.mrb[0].mxu0 %v677
    %v679 = vpop.f32.mrb[0].mxu0
    %v680 = vadd.f32 %v486, %v679
    %v681 = vpop.f32.mrb[0].mxu0
    %682 = vmatprep.mubr.f32.mxu0 0.0
    %v683 = vand.u32 %v66, 4294901760
    %v684 = vsub.f32 %v66, %v683
    %685 = vmatmul.mubr.f32.gmra.mrb[0].mxu0 %v684
    %v686 = vpop.f32.mrb[0].mxu0
    %v687 = vadd.f32 %v492, %v686
    %v688 = vpop.f32.mrb[0].mxu0
    %689 = vmatprep.mubr.f32.mxu0 0.0
    %v690 = vand.u32 %v67, 4294901760
    %v691 = vsub.f32 %v67, %v690
    %692 = vmatmul.mubr.f32.gmra.mrb[0].mxu0 %v691
    %v693 = vpop.f32.mrb[0].mxu0
    %v694 = vadd.f32 %v498, %v693
    %v695 = vpop.f32.mrb[0].mxu0
    %696 = vmatprep.mubr.f32.mxu0 0.0
    %v697 = vand.u32 %v68, 4294901760
    %v698 = vsub.f32 %v68, %v697
    %699 = vmatmul.mubr.f32.gmra.mrb[0].mxu0 %v698
    %v700 = vpop.f32.mrb[0].mxu0
    %v701 = vadd.f32 %v504, %v700
    %v702 = vpop.f32.mrb[0].mxu0
    %703 = vmatprep.mubr.f32.mxu0 0.0
    %v704 = vand.u32 %v69, 4294901760
    %v705 = vsub.f32 %v69, %v704
    %706 = vmatmul.mubr.f32.gmra.mrb[0].mxu0 %v705
    %v707 = vpop.f32.mrb[0].mxu0
    %v708 = vadd.f32 %v510, %v707
    %v709 = vpop.f32.mrb[0].mxu0
    %710 = vmatprep.mubr.f32.mxu0 0.0
    %v711 = vand.u32 %v70, 4294901760
    %v712 = vsub.f32 %v70, %v711
    %713 = vmatmul.mubr.f32.gmra.mrb[0].mxu0 %v712
    %v714 = vpop.f32.mrb[0].mxu0
    %v715 = vadd.f32 %v516, %v714
    %v716 = vpop.f32.mrb[0].mxu0
    %717 = vmatprep.mubr.f32.mxu0 0.0
    %v718 = vand.u32 %v71, 4294901760
    %v719 = vsub.f32 %v71, %v718
    %720 = vmatmul.mubr.f32.gmra.mrb[0].mxu0 %v719
    %v721 = vpop.f32.mrb[0].mxu0
    %v722 = vadd.f32 %v522, %v721
    %v723 = vpop.f32.mrb[0].mxu0
    %724 = vmatprep.mubr.f32.mxu0 0.0
    %v725 = vand.u32 %v72, 4294901760
    %v726 = vsub.f32 %v72, %v725
    %727 = vmatmul.mubr.f32.gmra.mrb[0].mxu0 %v726
    %v728 = vpop.f32.mrb[0].mxu0
    %v729 = vadd.f32 %v528, %v728
    %v730 = vpop.f32.mrb[0].mxu0
    %731 = vmatprep.mubr.f32.mxu0 0.0
    %v732 = vand.u32 %v73, 4294901760
    %v733 = vsub.f32 %v73, %v732
    %734 = vmatmul.mubr.f32.gmra.mrb[0].mxu0 %v733
    %v735 = vpop.f32.mrb[0].mxu0
    %v736 = vadd.f32 %v534, %v735
    %v737 = vpop.f32.mrb[0].mxu0
    %738 = vmatprep.mubr.f32.mxu0 0.0
    %v739 = vand.u32 %v74, 4294901760
    %v740 = vsub.f32 %v74, %v739
    %741 = vmatmul.mubr.f32.gmra.mrb[0].mxu0 %v740
    %v742 = vpop.f32.mrb[0].mxu0
    %v743 = vadd.f32 %v540, %v742
    %v744 = vpop.f32.mrb[0].mxu0
    %745 = vmatprep.mubr.f32.mxu0 0.0
    %v746 = vand.u32 %v75, 4294901760
    %v747 = vsub.f32 %v75, %v746
    %748 = vmatmul.mubr.f32.gmra.mrb[0].mxu0 %v747
    %v749 = vpop.f32.mrb[0].mxu0
    %v750 = vadd.f32 %v546, %v749
    %v751 = vpop.f32.mrb[0].mxu0
    %752 = vmatprep.mubr.f32.mxu0 0.0
    %v753 = vand.u32 %v76, 4294901760
    %v754 = vsub.f32 %v76, %v753
    %755 = vmatmul.mubr.f32.gmra.mrb[0].mxu0 %v754
    %v756 = vpop.f32.mrb[0].mxu0
    %v757 = vadd.f32 %v552, %v756
    %v758 = vpop.f32.mrb[0].mxu0
    %759 = vmatprep.mubr.f32.mxu0 0.0
    %v760 = vand.u32 %v77, 4294901760
    %v761 = vsub.f32 %v77, %v760
    %762 = vmatmul.mubr.f32.gmra.mrb[0].mxu0 %v761
    %v763 = vpop.f32.mrb[0].mxu0
    %v764 = vadd.f32 %v558, %v763
    %v765 = vpop.f32.mrb[0].mxu0
    %766 = vmatprep.mubr.f32.mxu0 0.0
    %v767 = vand.u32 %v78, 4294901760
    %v768 = vsub.f32 %v78, %v767
    %769 = vmatmul.mubr.f32.gmra.mrb[0].mxu0 %v768
    %v770 = vpop.f32.mrb[0].mxu0
    %v771 = vadd.f32 %v564, %v770
    %v772 = vpop.f32.mrb[0].mxu0
    %773 = vmatprep.mubr.f32.mxu0 0.0
    %v774 = vand.u32 %v79, 4294901760
    %v775 = vsub.f32 %v79, %v774
    %776 = vmatmul.mubr.f32.gmra.mrb[0].mxu0 %v775
    %v777 = vpop.f32.mrb[0].mxu0
    %v778 = vadd.f32 %v570, %v777
    %v779 = vpop.f32.mrb[0].mxu0
    %780 = vmatprep.mubr.f32.mxu0 0.0
    %v781 = vand.u32 %v80, 4294901760
    %v782 = vsub.f32 %v80, %v781
    %783 = vmatmul.mubr.f32.gmra.mrb[0].mxu0 %v782
    %v784 = vpop.f32.mrb[0].mxu0
    %v785 = vadd.f32 %v576, %v784
    %v786 = vpop.f32.mrb[0].mxu0
    %787 = vdwg.mxu0
    %788 = vmatprep.subr.mxu0 0.0
    %v789 = vand.u32 %v81, 4294901760
    %790 = vmatpush1.msra.mxu0 %v789
    %791 = vmatprep.subr.mxu0 0.0
    %v792 = vand.u32 %v82, 4294901760
    %793 = vmatpush1.msra.mxu0 %v792
    %794 = vmatprep.subr.mxu0 0.0
    %v795 = vand.u32 %v83, 4294901760
    %796 = vmatpush1.msra.mxu0 %v795
    %797 = vmatprep.subr.mxu0 0.0
    %v798 = vand.u32 %v84, 4294901760
    %799 = vmatpush1.msra.mxu0 %v798
    %800 = vmatprep.subr.mxu0 0.0
    %v801 = vand.u32 %v85, 4294901760
    %802 = vmatpush1.msra.mxu0 %v801
    %803 = vmatprep.subr.mxu0 0.0
    %v804 = vand.u32 %v86, 4294901760
    %805 = vmatpush1.msra.mxu0 %v804
    %806 = vmatprep.subr.mxu0 0.0
    %v807 = vand.u32 %v87, 4294901760
    %808 = vmatpush1.msra.mxu0 %v807
    %809 = vmatprep.subr.mxu0 0.0
    %v810 = vand.u32 %v88, 4294901760
    %811 = vmatpush1.msra.mxu0 %v810
    %812 = vmatprep.subr.mxu0 0.0
    %v813 = vand.u32 %v89, 4294901760
    %814 = vmatpush1.msra.mxu0 %v813
    %815 = vmatprep.subr.mxu0 0.0
    %v816 = vand.u32 %v90, 4294901760
    %817 = vmatpush1.msra.mxu0 %v816
    %818 = vmatprep.subr.mxu0 0.0
    %v819 = vand.u32 %v91, 4294901760
    %820 = vmatpush1.msra.mxu0 %v819
    %821 = vmatprep.subr.mxu0 0.0
    %v822 = vand.u32 %v92, 4294901760
    %823 = vmatpush1.msra.mxu0 %v822
    %824 = vmatprep.subr.mxu0 0.0
    %v825 = vand.u32 %v93, 4294901760
    %826 = vmatpush1.msra.mxu0 %v825
    %827 = vmatprep.subr.mxu0 0.0
    %v828 = vand.u32 %v94, 4294901760
    %829 = vmatpush1.msra.mxu0 %v828
    %830 = vmatprep.subr.mxu0 0.0
    %v831 = vand.u32 %v95, 4294901760
    %832 = vmatpush1.msra.mxu0 %v831
    %833 = vmatprep.subr.mxu0 0.0
    %v834 = vand.u32 %v96, 4294901760
    %835 = vmatpush1.msra.mxu0 %v834
    %836 = vmatprep.subr.mxu0 0.0
    %837 = vmatpush1.msra.mxu0 0.0
    %838 = vmatprep.subr.mxu0 0.0
    %839 = vmatpush1.msra.mxu0 0.0
    %840 = vmatprep.subr.mxu0 0.0
    %841 = vmatpush1.msra.mxu0 0.0
    %842 = vmatprep.subr.mxu0 0.0
    %843 = vmatpush1.msra.mxu0 0.0
    %844 = vmatprep.subr.mxu0 0.0
    %845 = vmatpush1.msra.mxu0 0.0
    %846 = vmatprep.subr.mxu0 0.0
    %847 = vmatpush1.msra.mxu0 0.0
    %848 = vmatprep.subr.mxu0 0.0
    %849 = vmatpush1.msra.mxu0 0.0
    %850 = vmatprep.subr.mxu0 0.0
    %851 = vmatpush1.msra.mxu0 0.0
    %852 = vmatprep.subr.mxu0 0.0
    %853 = vmatpush1.msra.mxu0 0.0
    %854 = vmatprep.subr.mxu0 0.0
    %855 = vmatpush1.msra.mxu0 0.0
    %856 = vmatprep.subr.mxu0 0.0
    %857 = vmatpush1.msra.mxu0 0.0
    %858 = vmatprep.subr.mxu0 0.0
    %859 = vmatpush1.msra.mxu0 0.0
    %860 = vmatprep.subr.mxu0 0.0
    %861 = vmatpush1.msra.mxu0 0.0
    %862 = vmatprep.subr.mxu0 0.0
    %863 = vmatpush1.msra.mxu0 0.0
    %864 = vmatprep.subr.mxu0 0.0
    %865 = vmatpush1.msra.mxu0 0.0
    %866 = vmatprep.subr.mxu0 0.0
    %867 = vmatpush1.msra.mxu0 0.0
    %868 = vmatprep.mubr.f32.mxu0 0.0
    %v869 = vand.u32 %v65, 4294901760
    %v870 = vsub.f32 %v65, %v869
    %v871 = vand.u32 %v870, 4294901760
    %872 = vmatmul.mubr.f32.gmra.mrb[0].mxu0 %v871
    %v873 = vpop.f32.mrb[0].mxu0
    %v874 = vadd.f32 %v680, %v873
    %v875 = vpop.f32.mrb[0].mxu0
    %876 = vmatprep.mubr.f32.mxu0 0.0
    %v877 = vand.u32 %v66, 4294901760
    %v878 = vsub.f32 %v66, %v877
    %v879 = vand.u32 %v878, 4294901760
    %880 = vmatmul.mubr.f32.gmra.mrb[0].mxu0 %v879
    %v881 = vpop.f32.mrb[0].mxu0
    %v882 = vadd.f32 %v687, %v881
    %v883 = vpop.f32.mrb[0].mxu0
    %884 = vmatprep.mubr.f32.mxu0 0.0
    %v885 = vand.u32 %v67, 4294901760
    %v886 = vsub.f32 %v67, %v885
    %v887 = vand.u32 %v886, 4294901760
    %888 = vmatmul.mubr.f32.gmra.mrb[0].mxu0 %v887
    %v889 = vpop.f32.mrb[0].mxu0
    %v890 = vadd.f32 %v694, %v889
    %v891 = vpop.f32.mrb[0].mxu0
    %892 = vmatprep.mubr.f32.mxu0 0.0
    %v893 = vand.u32 %v68, 4294901760
    %v894 = vsub.f32 %v68, %v893
    %v895 = vand.u32 %v894, 4294901760
    %896 = vmatmul.mubr.f32.gmra.mrb[0].mxu0 %v895
    %v897 = vpop.f32.mrb[0].mxu0
    %v898 = vadd.f32 %v701, %v897
    %v899 = vpop.f32.mrb[0].mxu0
    %900 = vmatprep.mubr.f32.mxu0 0.0
    %v901 = vand.u32 %v69, 4294901760
    %v902 = vsub.f32 %v69, %v901
    %v903 = vand.u32 %v902, 4294901760
    %904 = vmatmul.mubr.f32.gmra.mrb[0].mxu0 %v903
    %v905 = vpop.f32.mrb[0].mxu0
    %v906 = vadd.f32 %v708, %v905
    %v907 = vpop.f32.mrb[0].mxu0
    %908 = vmatprep.mubr.f32.mxu0 0.0
    %v909 = vand.u32 %v70, 4294901760
    %v910 = vsub.f32 %v70, %v909
    %v911 = vand.u32 %v910, 4294901760
    %912 = vmatmul.mubr.f32.gmra.mrb[0].mxu0 %v911
    %v913 = vpop.f32.mrb[0].mxu0
    %v914 = vadd.f32 %v715, %v913
    %v915 = vpop.f32.mrb[0].mxu0
    %916 = vmatprep.mubr.f32.mxu0 0.0
    %v917 = vand.u32 %v71, 4294901760
    %v918 = vsub.f32 %v71, %v917
    %v919 = vand.u32 %v918, 4294901760
    %920 = vmatmul.mubr.f32.gmra.mrb[0].mxu0 %v919
    %v921 = vpop.f32.mrb[0].mxu0
    %v922 = vadd.f32 %v722, %v921
    %v923 = vpop.f32.mrb[0].mxu0
    %924 = vmatprep.mubr.f32.mxu0 0.0
    %v925 = vand.u32 %v72, 4294901760
    %v926 = vsub.f32 %v72, %v925
    %v927 = vand.u32 %v926, 4294901760
    %928 = vmatmul.mubr.f32.gmra.mrb[0].mxu0 %v927
    %v929 = vpop.f32.mrb[0].mxu0
    %v930 = vadd.f32 %v729, %v929
    %v931 = vpop.f32.mrb[0].mxu0
    %932 = vmatprep.mubr.f32.mxu0 0.0
    %v933 = vand.u32 %v73, 4294901760
    %v934 = vsub.f32 %v73, %v933
    %v935 = vand.u32 %v934, 4294901760
    %936 = vmatmul.mubr.f32.gmra.mrb[0].mxu0 %v935
    %v937 = vpop.f32.mrb[0].mxu0
    %v938 = vadd.f32 %v736, %v937
    %v939 = vpop.f32.mrb[0].mxu0
    %940 = vmatprep.mubr.f32.mxu0 0.0
    %v941 = vand.u32 %v74, 4294901760
    %v942 = vsub.f32 %v74, %v941
    %v943 = vand.u32 %v942, 4294901760
    %944 = vmatmul.mubr.f32.gmra.mrb[0].mxu0 %v943
    %v945 = vpop.f32.mrb[0].mxu0
    %v946 = vadd.f32 %v743, %v945
    %v947 = vpop.f32.mrb[0].mxu0
    %948 = vmatprep.mubr.f32.mxu0 0.0
    %v949 = vand.u32 %v75, 4294901760
    %v950 = vsub.f32 %v75, %v949
    %v951 = vand.u32 %v950, 4294901760
    %952 = vmatmul.mubr.f32.gmra.mrb[0].mxu0 %v951
    %v953 = vpop.f32.mrb[0].mxu0
    %v954 = vadd.f32 %v750, %v953
    %v955 = vpop.f32.mrb[0].mxu0
    %956 = vmatprep.mubr.f32.mxu0 0.0
    %v957 = vand.u32 %v76, 4294901760
    %v958 = vsub.f32 %v76, %v957
    %v959 = vand.u32 %v958, 4294901760
    %960 = vmatmul.mubr.f32.gmra.mrb[0].mxu0 %v959
    %v961 = vpop.f32.mrb[0].mxu0
    %v962 = vadd.f32 %v757, %v961
    %v963 = vpop.f32.mrb[0].mxu0
    %964 = vmatprep.mubr.f32.mxu0 0.0
    %v965 = vand.u32 %v77, 4294901760
    %v966 = vsub.f32 %v77, %v965
    %v967 = vand.u32 %v966, 4294901760
    %968 = vmatmul.mubr.f32.gmra.mrb[0].mxu0 %v967
    %v969 = vpop.f32.mrb[0].mxu0
    %v970 = vadd.f32 %v764, %v969
    %v971 = vpop.f32.mrb[0].mxu0
    %972 = vmatprep.mubr.f32.mxu0 0.0
    %v973 = vand.u32 %v78, 4294901760
    %v974 = vsub.f32 %v78, %v973
    %v975 = vand.u32 %v974, 4294901760
    %976 = vmatmul.mubr.f32.gmra.mrb[0].mxu0 %v975
    %v977 = vpop.f32.mrb[0].mxu0
    %v978 = vadd.f32 %v771, %v977
    %v979 = vpop.f32.mrb[0].mxu0
    %980 = vmatprep.mubr.f32.mxu0 0.0
    %v981 = vand.u32 %v79, 4294901760
    %v982 = vsub.f32 %v79, %v981
    %v983 = vand.u32 %v982, 4294901760
    %984 = vmatmul.mubr.f32.gmra.mrb[0].mxu0 %v983
    %v985 = vpop.f32.mrb[0].mxu0
    %v986 = vadd.f32 %v778, %v985
    %v987 = vpop.f32.mrb[0].mxu0
    %988 = vmatprep.mubr.f32.mxu0 0.0
    %v989 = vand.u32 %v80, 4294901760
    %v990 = vsub.f32 %v80, %v989
    %v991 = vand.u32 %v990, 4294901760
    %992 = vmatmul.mubr.f32.gmra.mrb[0].mxu0 %v991
    %v993 = vpop.f32.mrb[0].mxu0
    %v994 = vadd.f32 %v785, %v993
    %v995 = vpop.f32.mrb[0].mxu0
    %996 = vdwg.mxu0
    %997 = vmatprep.subr.mxu0 0.0
    %v998 = vand.u32 %v81, 4294901760
    %v999 = vsub.f32 %v81, %v998
    %v1000 = vand.u32 %v999, 4294901760
    %1001 = vmatpush1.msra.mxu0 %v1000
    %1002 = vmatprep.subr.mxu0 0.0
    %v1003 = vand.u32 %v82, 4294901760
    %v1004 = vsub.f32 %v82, %v1003
    %v1005 = vand.u32 %v1004, 4294901760
    %1006 = vmatpush1.msra.mxu0 %v1005
    %1007 = vmatprep.subr.mxu0 0.0
    %v1008 = vand.u32 %v83, 4294901760
    %v1009 = vsub.f32 %v83, %v1008
    %v1010 = vand.u32 %v1009, 4294901760
    %1011 = vmatpush1.msra.mxu0 %v1010
    %1012 = vmatprep.subr.mxu0 0.0
    %v1013 = vand.u32 %v84, 4294901760
    %v1014 = vsub.f32 %v84, %v1013
    %v1015 = vand.u32 %v1014, 4294901760
    %1016 = vmatpush1.msra.mxu0 %v1015
    %1017 = vmatprep.subr.mxu0 0.0
    %v1018 = vand.u32 %v85, 4294901760
    %v1019 = vsub.f32 %v85, %v1018
    %v1020 = vand.u32 %v1019, 4294901760
    %1021 = vmatpush1.msra.mxu0 %v1020
    %1022 = vmatprep.subr.mxu0 0.0
    %v1023 = vand.u32 %v86, 4294901760
    %v1024 = vsub.f32 %v86, %v1023
    %v1025 = vand.u32 %v1024, 4294901760
    %1026 = vmatpush1.msra.mxu0 %v1025
    %1027 = vmatprep.subr.mxu0 0.0
    %v1028 = vand.u32 %v87, 4294901760
    %v1029 = vsub.f32 %v87, %v1028
    %v1030 = vand.u32 %v1029, 4294901760
    %1031 = vmatpush1.msra.mxu0 %v1030
    %1032 = vmatprep.subr.mxu0 0.0
    %v1033 = vand.u32 %v88, 4294901760
    %v1034 = vsub.f32 %v88, %v1033
    %v1035 = vand.u32 %v1034, 4294901760
    %1036 = vmatpush1.msra.mxu0 %v1035
    %1037 = vmatprep.subr.mxu0 0.0
    %v1038 = vand.u32 %v89, 4294901760
    %v1039 = vsub.f32 %v89, %v1038
    %v1040 = vand.u32 %v1039, 4294901760
    %1041 = vmatpush1.msra.mxu0 %v1040
    %1042 = vmatprep.subr.mxu0 0.0
    %v1043 = vand.u32 %v90, 4294901760
    %v1044 = vsub.f32 %v90, %v1043
    %v1045 = vand.u32 %v1044, 4294901760
    %1046 = vmatpush1.msra.mxu0 %v1045
    %1047 = vmatprep.subr.mxu0 0.0
    %v1048 = vand.u32 %v91, 4294901760
    %v1049 = vsub.f32 %v91, %v1048
    %v1050 = vand.u32 %v1049, 4294901760
    %1051 = vmatpush1.msra.mxu0 %v1050
    %1052 = vmatprep.subr.mxu0 0.0
    %v1053 = vand.u32 %v92, 4294901760
    %v1054 = vsub.f32 %v92, %v1053
    %v1055 = vand.u32 %v1054, 4294901760
    %1056 = vmatpush1.msra.mxu0 %v1055
    %1057 = vmatprep.subr.mxu0 0.0
    %v1058 = vand.u32 %v93, 4294901760
    %v1059 = vsub.f32 %v93, %v1058
    %v1060 = vand.u32 %v1059, 4294901760
    %1061 = vmatpush1.msra.mxu0 %v1060
    %1062 = vmatprep.subr.mxu0 0.0
    %v1063 = vand.u32 %v94, 4294901760
    %v1064 = vsub.f32 %v94, %v1063
    %v1065 = vand.u32 %v1064, 4294901760
    %1066 = vmatpush1.msra.mxu0 %v1065
    %1067 = vmatprep.subr.mxu0 0.0
    %v1068 = vand.u32 %v95, 4294901760
    %v1069 = vsub.f32 %v95, %v1068
    %v1070 = vand.u32 %v1069, 4294901760
    %1071 = vmatpush1.msra.mxu0 %v1070
    %1072 = vmatprep.subr.mxu0 0.0
    %v1073 = vand.u32 %v96, 4294901760
    %v1074 = vsub.f32 %v96, %v1073
    %v1075 = vand.u32 %v1074, 4294901760
    %1076 = vmatpush1.msra.mxu0 %v1075
    %1077 = vmatprep.subr.mxu0 0.0
    %1078 = vmatpush1.msra.mxu0 0.0
    %1079 = vmatprep.subr.mxu0 0.0
    %1080 = vmatpush1.msra.mxu0 0.0
    %1081 = vmatprep.subr.mxu0 0.0
    %1082 = vmatpush1.msra.mxu0 0.0
    %1083 = vmatprep.subr.mxu0 0.0
    %1084 = vmatpush1.msra.mxu0 0.0
    %1085 = vmatprep.subr.mxu0 0.0
    %1086 = vmatpush1.msra.mxu0 0.0
    %1087 = vmatprep.subr.mxu0 0.0
    %1088 = vmatpush1.msra.mxu0 0.0
    %1089 = vmatprep.subr.mxu0 0.0
    %1090 = vmatpush1.msra.mxu0 0.0
    %1091 = vmatprep.subr.mxu0 0.0
    %1092 = vmatpush1.msra.mxu0 0.0
    %1093 = vmatprep.subr.mxu0 0.0
    %1094 = vmatpush1.msra.mxu0 0.0
    %1095 = vmatprep.subr.mxu0 0.0
    %1096 = vmatpush1.msra.mxu0 0.0
    %1097 = vmatprep.subr.mxu0 0.0
    %1098 = vmatpush1.msra.mxu0 0.0
    %1099 = vmatprep.subr.mxu0 0.0
    %1100 = vmatpush1.msra.mxu0 0.0
    %1101 = vmatprep.subr.mxu0 0.0
    %1102 = vmatpush1.msra.mxu0 0.0
    %1103 = vmatprep.subr.mxu0 0.0
    %1104 = vmatpush1.msra.mxu0 0.0
    %1105 = vmatprep.subr.mxu0 0.0
    %1106 = vmatpush1.msra.mxu0 0.0
    %1107 = vmatprep.subr.mxu0 0.0
    %1108 = vmatpush1.msra.mxu0 0.0
    %1109 = vmatprep.mubr.f32.mxu0 0.0
    %v1110 = vand.u32 %v65, 4294901760
    %1111 = vmatmul.mubr.f32.gmra.mrb[0].mxu0 %v1110
    %v1112 = vpop.f32.mrb[0].mxu0
    %v1113 = vadd.f32 %v874, %v1112
    %v1114 = vpop.f32.mrb[0].mxu0
    %1115 = vmatprep.mubr.f32.mxu0 0.0
    %v1116 = vand.u32 %v66, 4294901760
    %1117 = vmatmul.mubr.f32.gmra.mrb[0].mxu0 %v1116
    %v1118 = vpop.f32.mrb[0].mxu0
    %v1119 = vadd.f32 %v882, %v1118
    %v1120 = vpop.f32.mrb[0].mxu0
    %1121 = vmatprep.mubr.f32.mxu0 0.0
    %v1122 = vand.u32 %v67, 4294901760
    %1123 = vmatmul.mubr.f32.gmra.mrb[0].mxu0 %v1122
    %v1124 = vpop.f32.mrb[0].mxu0
    %v1125 = vadd.f32 %v890, %v1124
    %v1126 = vpop.f32.mrb[0].mxu0
    %1127 = vmatprep.mubr.f32.mxu0 0.0
    %v1128 = vand.u32 %v68, 4294901760
    %1129 = vmatmul.mubr.f32.gmra.mrb[0].mxu0 %v1128
    %v1130 = vpop.f32.mrb[0].mxu0
    %v1131 = vadd.f32 %v898, %v1130
    %v1132 = vpop.f32.mrb[0].mxu0
    %1133 = vmatprep.mubr.f32.mxu0 0.0
    %v1134 = vand.u32 %v69, 4294901760
    %1135 = vmatmul.mubr.f32.gmra.mrb[0].mxu0 %v1134
    %v1136 = vpop.f32.mrb[0].mxu0
    %v1137 = vadd.f32 %v906, %v1136
    %v1138 = vpop.f32.mrb[0].mxu0
    %1139 = vmatprep.mubr.f32.mxu0 0.0
    %v1140 = vand.u32 %v70, 4294901760
    %1141 = vmatmul.mubr.f32.gmra.mrb[0].mxu0 %v1140
    %v1142 = vpop.f32.mrb[0].mxu0
    %v1143 = vadd.f32 %v914, %v1142
    %v1144 = vpop.f32.mrb[0].mxu0
    %1145 = vmatprep.mubr.f32.mxu0 0.0
    %v1146 = vand.u32 %v71, 4294901760
    %1147 = vmatmul.mubr.f32.gmra.mrb[0].mxu0 %v1146
    %v1148 = vpop.f32.mrb[0].mxu0
    %v1149 = vadd.f32 %v922, %v1148
    %v1150 = vpop.f32.mrb[0].mxu0
    %1151 = vmatprep.mubr.f32.mxu0 0.0
    %v1152 = vand.u32 %v72, 4294901760
    %1153 = vmatmul.mubr.f32.gmra.mrb[0].mxu0 %v1152
    %v1154 = vpop.f32.mrb[0].mxu0
    %v1155 = vadd.f32 %v930, %v1154
    %v1156 = vpop.f32.mrb[0].mxu0
    %1157 = vmatprep.mubr.f32.mxu0 0.0
    %v1158 = vand.u32 %v73, 4294901760
    %1159 = vmatmul.mubr.f32.gmra.mrb[0].mxu0 %v1158
    %v1160 = vpop.f32.mrb[0].mxu0
    %v1161 = vadd.f32 %v938, %v1160
    %v1162 = vpop.f32.mrb[0].mxu0
    %1163 = vmatprep.mubr.f32.mxu0 0.0
    %v1164 = vand.u32 %v74, 4294901760
    %1165 = vmatmul.mubr.f32.gmra.mrb[0].mxu0 %v1164
    %v1166 = vpop.f32.mrb[0].mxu0
    %v1167 = vadd.f32 %v946, %v1166
    %v1168 = vpop.f32.mrb[0].mxu0
    %1169 = vmatprep.mubr.f32.mxu0 0.0
    %v1170 = vand.u32 %v75, 4294901760
    %1171 = vmatmul.mubr.f32.gmra.mrb[0].mxu0 %v1170
    %v1172 = vpop.f32.mrb[0].mxu0
    %v1173 = vadd.f32 %v954, %v1172
    %v1174 = vpop.f32.mrb[0].mxu0
    %1175 = vmatprep.mubr.f32.mxu0 0.0
    %v1176 = vand.u32 %v76, 4294901760
    %1177 = vmatmul.mubr.f32.gmra.mrb[0].mxu0 %v1176
    %v1178 = vpop.f32.mrb[0].mxu0
    %v1179 = vadd.f32 %v962, %v1178
    %v1180 = vpop.f32.mrb[0].mxu0
    %1181 = vmatprep.mubr.f32.mxu0 0.0
    %v1182 = vand.u32 %v77, 4294901760
    %1183 = vmatmul.mubr.f32.gmra.mrb[0].mxu0 %v1182
    %v1184 = vpop.f32.mrb[0].mxu0
    %v1185 = vadd.f32 %v970, %v1184
    %v1186 = vpop.f32.mrb[0].mxu0
    %1187 = vmatprep.mubr.f32.mxu0 0.0
    %v1188 = vand.u32 %v78, 4294901760
    %1189 = vmatmul.mubr.f32.gmra.mrb[0].mxu0 %v1188
    %v1190 = vpop.f32.mrb[0].mxu0
    %v1191 = vadd.f32 %v978, %v1190
    %v1192 = vpop.f32.mrb[0].mxu0
    %1193 = vmatprep.mubr.f32.mxu0 0.0
    %v1194 = vand.u32 %v79, 4294901760
    %1195 = vmatmul.mubr.f32.gmra.mrb[0].mxu0 %v1194
    %v1196 = vpop.f32.mrb[0].mxu0
    %v1197 = vadd.f32 %v986, %v1196
    %v1198 = vpop.f32.mrb[0].mxu0
    %1199 = vmatprep.mubr.f32.mxu0 0.0
    %v1200 = vand.u32 %v80, 4294901760
    %1201 = vmatmul.mubr.f32.gmra.mrb[0].mxu0 %v1200
    %v1202 = vpop.f32.mrb[0].mxu0
    %v1203 = vadd.f32 %v994, %v1202
    %v1204 = vpop.f32.mrb[0].mxu0
    %1205 = vdwg.mxu0
    %1206 = vmatprep.subr.mxu0 0.0
    %v1207 = vand.u32 %v81, 4294901760
    %1208 = vmatpush1.msra.mxu0 %v1207
    %1209 = vmatprep.subr.mxu0 0.0
    %v1210 = vand.u32 %v82, 4294901760
    %1211 = vmatpush1.msra.mxu0 %v1210
    %1212 = vmatprep.subr.mxu0 0.0
    %v1213 = vand.u32 %v83, 4294901760
    %1214 = vmatpush1.msra.mxu0 %v1213
    %1215 = vmatprep.subr.mxu0 0.0
    %v1216 = vand.u32 %v84, 4294901760
    %1217 = vmatpush1.msra.mxu0 %v1216
    %1218 = vmatprep.subr.mxu0 0.0
    %v1219 = vand.u32 %v85, 4294901760
    %1220 = vmatpush1.msra.mxu0 %v1219
    %1221 = vmatprep.subr.mxu0 0.0
    %v1222 = vand.u32 %v86, 4294901760
    %1223 = vmatpush1.msra.mxu0 %v1222
    %1224 = vmatprep.subr.mxu0 0.0
    %v1225 = vand.u32 %v87, 4294901760
    %1226 = vmatpush1.msra.mxu0 %v1225
    %1227 = vmatprep.subr.mxu0 0.0
    %v1228 = vand.u32 %v88, 4294901760
    %1229 = vmatpush1.msra.mxu0 %v1228
    %1230 = vmatprep.subr.mxu0 0.0
    %v1231 = vand.u32 %v89, 4294901760
    %1232 = vmatpush1.msra.mxu0 %v1231
    %1233 = vmatprep.subr.mxu0 0.0
    %v1234 = vand.u32 %v90, 4294901760
    %1235 = vmatpush1.msra.mxu0 %v1234
    %1236 = vmatprep.subr.mxu0 0.0
    %v1237 = vand.u32 %v91, 4294901760
    %1238 = vmatpush1.msra.mxu0 %v1237
    %1239 = vmatprep.subr.mxu0 0.0
    %v1240 = vand.u32 %v92, 4294901760
    %1241 = vmatpush1.msra.mxu0 %v1240
    %1242 = vmatprep.subr.mxu0 0.0
    %v1243 = vand.u32 %v93, 4294901760
    %1244 = vmatpush1.msra.mxu0 %v1243
    %1245 = vmatprep.subr.mxu0 0.0
    %v1246 = vand.u32 %v94, 4294901760
    %1247 = vmatpush1.msra.mxu0 %v1246
    %1248 = vmatprep.subr.mxu0 0.0
    %v1249 = vand.u32 %v95, 4294901760
    %1250 = vmatpush1.msra.mxu0 %v1249
    %1251 = vmatprep.subr.mxu0 0.0
    %v1252 = vand.u32 %v96, 4294901760
    %1253 = vmatpush1.msra.mxu0 %v1252
    %1254 = vmatprep.subr.mxu0 0.0
    %1255 = vmatpush1.msra.mxu0 0.0
    %1256 = vmatprep.subr.mxu0 0.0
    %1257 = vmatpush1.msra.mxu0 0.0
    %1258 = vmatprep.subr.mxu0 0.0
    %1259 = vmatpush1.msra.mxu0 0.0
    %1260 = vmatprep.subr.mxu0 0.0
    %1261 = vmatpush1.msra.mxu0 0.0
    %1262 = vmatprep.subr.mxu0 0.0
    %1263 = vmatpush1.msra.mxu0 0.0
    %1264 = vmatprep.subr.mxu0 0.0
    %1265 = vmatpush1.msra.mxu0 0.0
    %1266 = vmatprep.subr.mxu0 0.0
    %1267 = vmatpush1.msra.mxu0 0.0
    %1268 = vmatprep.subr.mxu0 0.0
    %1269 = vmatpush1.msra.mxu0 0.0
    %1270 = vmatprep.subr.mxu0 0.0
    %1271 = vmatpush1.msra.mxu0 0.0
    %1272 = vmatprep.subr.mxu0 0.0
    %1273 = vmatpush1.msra.mxu0 0.0
    %1274 = vmatprep.subr.mxu0 0.0
    %1275 = vmatpush1.msra.mxu0 0.0
    %1276 = vmatprep.subr.mxu0 0.0
    %1277 = vmatpush1.msra.mxu0 0.0
    %1278 = vmatprep.subr.mxu0 0.0
    %1279 = vmatpush1.msra.mxu0 0.0
    %1280 = vmatprep.subr.mxu0 0.0
    %1281 = vmatpush1.msra.mxu0 0.0
    %1282 = vmatprep.subr.mxu0 0.0
    %1283 = vmatpush1.msra.mxu0 0.0
    %1284 = vmatprep.subr.mxu0 0.0
    %1285 = vmatpush1.msra.mxu0 0.0
    %1286 = vmatprep.mubr.f32.mxu0 0.0
    %v1287 = vand.u32 %v65, 4294901760
    %1288 = vmatmul.mubr.f32.gmra.mrb[0].mxu0 %v1287
    %v1289 = vpop.f32.mrb[0].mxu0
    %v1290 = vadd.f32 %v1113, %v1289
    %v1291 = vpop.f32.mrb[0].mxu0
    %1292 = vmatprep.mubr.f32.mxu0 0.0
    %v1293 = vand.u32 %v66, 4294901760
    %1294 = vmatmul.mubr.f32.gmra.mrb[0].mxu0 %v1293
    %v1295 = vpop.f32.mrb[0].mxu0
    %v1296 = vadd.f32 %v1119, %v1295
    %v1297 = vpop.f32.mrb[0].mxu0
    %1298 = vmatprep.mubr.f32.mxu0 0.0
    %v1299 = vand.u32 %v67, 4294901760
    %1300 = vmatmul.mubr.f32.gmra.mrb[0].mxu0 %v1299
    %v1301 = vpop.f32.mrb[0].mxu0
    %v1302 = vadd.f32 %v1125, %v1301
    %v1303 = vpop.f32.mrb[0].mxu0
    %1304 = vmatprep.mubr.f32.mxu0 0.0
    %v1305 = vand.u32 %v68, 4294901760
    %1306 = vmatmul.mubr.f32.gmra.mrb[0].mxu0 %v1305
    %v1307 = vpop.f32.mrb[0].mxu0
    %v1308 = vadd.f32 %v1131, %v1307
    %v1309 = vpop.f32.mrb[0].mxu0
    %1310 = vmatprep.mubr.f32.mxu0 0.0
    %v1311 = vand.u32 %v69, 4294901760
    %1312 = vmatmul.mubr.f32.gmra.mrb[0].mxu0 %v1311
    %v1313 = vpop.f32.mrb[0].mxu0
    %v1314 = vadd.f32 %v1137, %v1313
    %v1315 = vpop.f32.mrb[0].mxu0
    %1316 = vmatprep.mubr.f32.mxu0 0.0
    %v1317 = vand.u32 %v70, 4294901760
    %1318 = vmatmul.mubr.f32.gmra.mrb[0].mxu0 %v1317
    %v1319 = vpop.f32.mrb[0].mxu0
    %v1320 = vadd.f32 %v1143, %v1319
    %v1321 = vpop.f32.mrb[0].mxu0
    %1322 = vmatprep.mubr.f32.mxu0 0.0
    %v1323 = vand.u32 %v71, 4294901760
    %1324 = vmatmul.mubr.f32.gmra.mrb[0].mxu0 %v1323
    %v1325 = vpop.f32.mrb[0].mxu0
    %v1326 = vadd.f32 %v1149, %v1325
    %v1327 = vpop.f32.mrb[0].mxu0
    %1328 = vmatprep.mubr.f32.mxu0 0.0
    %v1329 = vand.u32 %v72, 4294901760
    %1330 = vmatmul.mubr.f32.gmra.mrb[0].mxu0 %v1329
    %v1331 = vpop.f32.mrb[0].mxu0
    %v1332 = vadd.f32 %v1155, %v1331
    %v1333 = vpop.f32.mrb[0].mxu0
    %1334 = vmatprep.mubr.f32.mxu0 0.0
    %v1335 = vand.u32 %v73, 4294901760
    %1336 = vmatmul.mubr.f32.gmra.mrb[0].mxu0 %v1335
    %v1337 = vpop.f32.mrb[0].mxu0
    %v1338 = vadd.f32 %v1161, %v1337
    %v1339 = vpop.f32.mrb[0].mxu0
    %1340 = vmatprep.mubr.f32.mxu0 0.0
    %v1341 = vand.u32 %v74, 4294901760
    %1342 = vmatmul.mubr.f32.gmra.mrb[0].mxu0 %v1341
    %v1343 = vpop.f32.mrb[0].mxu0
    %v1344 = vadd.f32 %v1167, %v1343
    %v1345 = vpop.f32.mrb[0].mxu0
    %1346 = vmatprep.mubr.f32.mxu0 0.0
    %v1347 = vand.u32 %v75, 4294901760
    %1348 = vmatmul.mubr.f32.gmra.mrb[0].mxu0 %v1347
    %v1349 = vpop.f32.mrb[0].mxu0
    %v1350 = vadd.f32 %v1173, %v1349
    %v1351 = vpop.f32.mrb[0].mxu0
    %1352 = vmatprep.mubr.f32.mxu0 0.0
    %v1353 = vand.u32 %v76, 4294901760
    %1354 = vmatmul.mubr.f32.gmra.mrb[0].mxu0 %v1353
    %v1355 = vpop.f32.mrb[0].mxu0
    %v1356 = vadd.f32 %v1179, %v1355
    %v1357 = vpop.f32.mrb[0].mxu0
    %1358 = vmatprep.mubr.f32.mxu0 0.0
    %v1359 = vand.u32 %v77, 4294901760
    %1360 = vmatmul.mubr.f32.gmra.mrb[0].mxu0 %v1359
    %v1361 = vpop.f32.mrb[0].mxu0
    %v1362 = vadd.f32 %v1185, %v1361
    %v1363 = vpop.f32.mrb[0].mxu0
    %1364 = vmatprep.mubr.f32.mxu0 0.0
    %v1365 = vand.u32 %v78, 4294901760
    %1366 = vmatmul.mubr.f32.gmra.mrb[0].mxu0 %v1365
    %v1367 = vpop.f32.mrb[0].mxu0
    %v1368 = vadd.f32 %v1191, %v1367
    %v1369 = vpop.f32.mrb[0].mxu0
    %1370 = vmatprep.mubr.f32.mxu0 0.0
    %v1371 = vand.u32 %v79, 4294901760
    %1372 = vmatmul.mubr.f32.gmra.mrb[0].mxu0 %v1371
    %v1373 = vpop.f32.mrb[0].mxu0
    %v1374 = vadd.f32 %v1197, %v1373
    %v1375 = vpop.f32.mrb[0].mxu0
    %1376 = vmatprep.mubr.f32.mxu0 0.0
    %v1377 = vand.u32 %v80, 4294901760
    %1378 = vmatmul.mubr.f32.gmra.mrb[0].mxu0 %v1377
    %v1379 = vpop.f32.mrb[0].mxu0
    %v1380 = vadd.f32 %v1203, %v1379
    %v1381 = vpop.f32.mrb[0].mxu0
    %1382 = vdwg.mxu0
    %v1383 = vsub.f32 %v65, %v1290
    %v1384 = vsub.f32 %v66, %v1296
    %v1385 = vsub.f32 %v67, %v1302
    %v1386 = vsub.f32 %v68, %v1308
    %v1387 = vsub.f32 %v69, %v1314
    %v1388 = vsub.f32 %v70, %v1320
    %v1389 = vsub.f32 %v71, %v1326
    %v1390 = vsub.f32 %v72, %v1332
    %v1391 = vsub.f32 %v73, %v1338
    %v1392 = vsub.f32 %v74, %v1344
    %v1393 = vsub.f32 %v75, %v1350
    %v1394 = vsub.f32 %v76, %v1356
    %v1395 = vsub.f32 %v77, %v1362
    %v1396 = vsub.f32 %v78, %v1368
    %v1397 = vsub.f32 %v79, %v1374
    %v1398 = vsub.f32 %v80, %v1380
    %v1399 = vmul.f32 %v1383, %v1383
    %v1400 = vmul.f32 %v1384, %v1384
    %v1401 = vmul.f32 %v1385, %v1385
    %v1402 = vmul.f32 %v1386, %v1386
    %v1403 = vmul.f32 %v1387, %v1387
    %v1404 = vmul.f32 %v1388, %v1388
    %v1405 = vmul.f32 %v1389, %v1389
    %v1406 = vmul.f32 %v1390, %v1390
    %v1407 = vmul.f32 %v1391, %v1391
    %v1408 = vmul.f32 %v1392, %v1392
    %v1409 = vmul.f32 %v1393, %v1393
    %v1410 = vmul.f32 %v1394, %v1394
    %v1411 = vmul.f32 %v1395, %v1395
    %v1412 = vmul.f32 %v1396, %v1396
    %v1413 = vmul.f32 %v1397, %v1397
    %v1414 = vmul.f32 %v1398, %v1398
    %1415 = vmatprep.subr.mxu0 0.0
    %v1416 = vand.u32 %v81, 4294901760
    %1417 = vmatpush1.msra.mxu0 %v1416
    %1418 = vmatprep.subr.mxu0 0.0
    %v1419 = vand.u32 %v82, 4294901760
    %1420 = vmatpush1.msra.mxu0 %v1419
    %1421 = vmatprep.subr.mxu0 0.0
    %v1422 = vand.u32 %v83, 4294901760
    %1423 = vmatpush1.msra.mxu0 %v1422
    %1424 = vmatprep.subr.mxu0 0.0
    %v1425 = vand.u32 %v84, 4294901760
    %1426 = vmatpush1.msra.mxu0 %v1425
    %1427 = vmatprep.subr.mxu0 0.0
    %v1428 = vand.u32 %v85, 4294901760
    %1429 = vmatpush1.msra.mxu0 %v1428
    %1430 = vmatprep.subr.mxu0 0.0
    %v1431 = vand.u32 %v86, 4294901760
    %1432 = vmatpush1.msra.mxu0 %v1431
    %1433 = vmatprep.subr.mxu0 0.0
    %v1434 = vand.u32 %v87, 4294901760
    %1435 = vmatpush1.msra.mxu0 %v1434
    %1436 = vmatprep.subr.mxu0 0.0
    %v1437 = vand.u32 %v88, 4294901760
    %1438 = vmatpush1.msra.mxu0 %v1437
    %1439 = vmatprep.subr.mxu0 0.0
    %v1440 = vand.u32 %v89, 4294901760
    %1441 = vmatpush1.msra.mxu0 %v1440
    %1442 = vmatprep.subr.mxu0 0.0
    %v1443 = vand.u32 %v90, 4294901760
    %1444 = vmatpush1.msra.mxu0 %v1443
    %1445 = vmatprep.subr.mxu0 0.0
    %v1446 = vand.u32 %v91, 4294901760
    %1447 = vmatpush1.msra.mxu0 %v1446
    %1448 = vmatprep.subr.mxu0 0.0
    %v1449 = vand.u32 %v92, 4294901760
    %1450 = vmatpush1.msra.mxu0 %v1449
    %1451 = vmatprep.subr.mxu0 0.0
    %v1452 = vand.u32 %v93, 4294901760
    %1453 = vmatpush1.msra.mxu0 %v1452
    %1454 = vmatprep.subr.mxu0 0.0
    %v1455 = vand.u32 %v94, 4294901760
    %1456 = vmatpush1.msra.mxu0 %v1455
    %1457 = vmatprep.subr.mxu0 0.0
    %v1458 = vand.u32 %v95, 4294901760
    %1459 = vmatpush1.msra.mxu0 %v1458
    %1460 = vmatprep.subr.mxu0 0.0
    %v1461 = vand.u32 %v96, 4294901760
    %1462 = vmatpush1.msra.mxu0 %v1461
    %1463 = vmatprep.subr.mxu0 0.0
    %1464 = vmatpush1.msra.mxu0 0.0
    %1465 = vmatprep.subr.mxu0 0.0
    %1466 = vmatpush1.msra.mxu0 0.0
    %1467 = vmatprep.subr.mxu0 0.0
    %1468 = vmatpush1.msra.mxu0 0.0
    %1469 = vmatprep.subr.mxu0 0.0
    %1470 = vmatpush1.msra.mxu0 0.0
    %1471 = vmatprep.subr.mxu0 0.0
    %1472 = vmatpush1.msra.mxu0 0.0
    %1473 = vmatprep.subr.mxu0 0.0
    %1474 = vmatpush1.msra.mxu0 0.0
    %1475 = vmatprep.subr.mxu0 0.0
    %1476 = vmatpush1.msra.mxu0 0.0
    %1477 = vmatprep.subr.mxu0 0.0
    %1478 = vmatpush1.msra.mxu0 0.0
    %1479 = vmatprep.subr.mxu0 0.0
    %1480 = vmatpush1.msra.mxu0 0.0
    %1481 = vmatprep.subr.mxu0 0.0
    %1482 = vmatpush1.msra.mxu0 0.0
    %1483 = vmatprep.subr.mxu0 0.0
    %1484 = vmatpush1.msra.mxu0 0.0
    %1485 = vmatprep.subr.mxu0 0.0
    %1486 = vmatpush1.msra.mxu0 0.0
    %1487 = vmatprep.subr.mxu0 0.0
    %1488 = vmatpush1.msra.mxu0 0.0
    %1489 = vmatprep.subr.mxu0 0.0
    %1490 = vmatpush1.msra.mxu0 0.0
    %1491 = vmatprep.subr.mxu0 0.0
    %1492 = vmatpush1.msra.mxu0 0.0
    %1493 = vmatprep.subr.mxu0 0.0
    %1494 = vmatpush1.msra.mxu0 0.0
    %1495 = vmatprep.mubr.f32.mxu0 0.0
    %v1496 = vand.u32 %v1399, 4294901760
    %v1497 = vsub.f32 %v1399, %v1496
    %v1498 = vand.u32 %v1497, 4294901760
    %v1499 = vsub.f32 %v1497, %v1498
    %v1500 = vand.u32 %v1499, 4294901760
    %1501 = vmatmul.mubr.f32.gmra.mrb[0].mxu0 %v1500
    %v1502 = vpop.f32.mrb[0].mxu0
    %v1503 = vadd.f32 1e-05, %v1502
    %v1504 = vpop.f32.mrb[0].mxu0
    %1505 = vmatprep.mubr.f32.mxu0 0.0
    %v1506 = vand.u32 %v1400, 4294901760
    %v1507 = vsub.f32 %v1400, %v1506
    %v1508 = vand.u32 %v1507, 4294901760
    %v1509 = vsub.f32 %v1507, %v1508
    %v1510 = vand.u32 %v1509, 4294901760
    %1511 = vmatmul.mubr.f32.gmra.mrb[0].mxu0 %v1510
    %v1512 = vpop.f32.mrb[0].mxu0
    %v1513 = vadd.f32 1e-05, %v1512
    %v1514 = vpop.f32.mrb[0].mxu0
    %1515 = vmatprep.mubr.f32.mxu0 0.0
    %v1516 = vand.u32 %v1401, 4294901760
    %v1517 = vsub.f32 %v1401, %v1516
    %v1518 = vand.u32 %v1517, 4294901760
    %v1519 = vsub.f32 %v1517, %v1518
    %v1520 = vand.u32 %v1519, 4294901760
    %1521 = vmatmul.mubr.f32.gmra.mrb[0].mxu0 %v1520
    %v1522 = vpop.f32.mrb[0].mxu0
    %v1523 = vadd.f32 1e-05, %v1522
    %v1524 = vpop.f32.mrb[0].mxu0
    %1525 = vmatprep.mubr.f32.mxu0 0.0
    %v1526 = vand.u32 %v1402, 4294901760
    %v1527 = vsub.f32 %v1402, %v1526
    %v1528 = vand.u32 %v1527, 4294901760
    %v1529 = vsub.f32 %v1527, %v1528
    %v1530 = vand.u32 %v1529, 4294901760
    %1531 = vmatmul.mubr.f32.gmra.mrb[0].mxu0 %v1530
    %v1532 = vpop.f32.mrb[0].mxu0
    %v1533 = vadd.f32 1e-05, %v1532
    %v1534 = vpop.f32.mrb[0].mxu0
    %1535 = vmatprep.mubr.f32.mxu0 0.0
    %v1536 = vand.u32 %v1403, 4294901760
    %v1537 = vsub.f32 %v1403, %v1536
    %v1538 = vand.u32 %v1537, 4294901760
    %v1539 = vsub.f32 %v1537, %v1538
    %v1540 = vand.u32 %v1539, 4294901760
    %1541 = vmatmul.mubr.f32.gmra.mrb[0].mxu0 %v1540
    %v1542 = vpop.f32.mrb[0].mxu0
    %v1543 = vadd.f32 1e-05, %v1542
    %v1544 = vpop.f32.mrb[0].mxu0
    %1545 = vmatprep.mubr.f32.mxu0 0.0
    %v1546 = vand.u32 %v1404, 4294901760
    %v1547 = vsub.f32 %v1404, %v1546
    %v1548 = vand.u32 %v1547, 4294901760
    %v1549 = vsub.f32 %v1547, %v1548
    %v1550 = vand.u32 %v1549, 4294901760
    %1551 = vmatmul.mubr.f32.gmra.mrb[0].mxu0 %v1550
    %v1552 = vpop.f32.mrb[0].mxu0
    %v1553 = vadd.f32 1e-05, %v1552
    %v1554 = vpop.f32.mrb[0].mxu0
    %1555 = vmatprep.mubr.f32.mxu0 0.0
    %v1556 = vand.u32 %v1405, 4294901760
    %v1557 = vsub.f32 %v1405, %v1556
    %v1558 = vand.u32 %v1557, 4294901760
    %v1559 = vsub.f32 %v1557, %v1558
    %v1560 = vand.u32 %v1559, 4294901760
    %1561 = vmatmul.mubr.f32.gmra.mrb[0].mxu0 %v1560
    %v1562 = vpop.f32.mrb[0].mxu0
    %v1563 = vadd.f32 1e-05, %v1562
    %v1564 = vpop.f32.mrb[0].mxu0
    %1565 = vmatprep.mubr.f32.mxu0 0.0
    %v1566 = vand.u32 %v1406, 4294901760
    %v1567 = vsub.f32 %v1406, %v1566
    %v1568 = vand.u32 %v1567, 4294901760
    %v1569 = vsub.f32 %v1567, %v1568
    %v1570 = vand.u32 %v1569, 4294901760
    %1571 = vmatmul.mubr.f32.gmra.mrb[0].mxu0 %v1570
    %v1572 = vpop.f32.mrb[0].mxu0
    %v1573 = vadd.f32 1e-05, %v1572
    %v1574 = vpop.f32.mrb[0].mxu0
    %1575 = vmatprep.mubr.f32.mxu0 0.0
    %v1576 = vand.u32 %v1407, 4294901760
    %v1577 = vsub.f32 %v1407, %v1576
    %v1578 = vand.u32 %v1577, 4294901760
    %v1579 = vsub.f32 %v1577, %v1578
    %v1580 = vand.u32 %v1579, 4294901760
    %1581 = vmatmul.mubr.f32.gmra.mrb[0].mxu0 %v1580
    %v1582 = vpop.f32.mrb[0].mxu0
    %v1583 = vadd.f32 1e-05, %v1582
    %v1584 = vpop.f32.mrb[0].mxu0
    %1585 = vmatprep.mubr.f32.mxu0 0.0
    %v1586 = vand.u32 %v1408, 4294901760
    %v1587 = vsub.f32 %v1408, %v1586
    %v1588 = vand.u32 %v1587, 4294901760
    %v1589 = vsub.f32 %v1587, %v1588
    %v1590 = vand.u32 %v1589, 4294901760
    %1591 = vmatmul.mubr.f32.gmra.mrb[0].mxu0 %v1590
    %v1592 = vpop.f32.mrb[0].mxu0
    %v1593 = vadd.f32 1e-05, %v1592
    %v1594 = vpop.f32.mrb[0].mxu0
    %1595 = vmatprep.mubr.f32.mxu0 0.0
    %v1596 = vand.u32 %v1409, 4294901760
    %v1597 = vsub.f32 %v1409, %v1596
    %v1598 = vand.u32 %v1597, 4294901760
    %v1599 = vsub.f32 %v1597, %v1598
    %v1600 = vand.u32 %v1599, 4294901760
    %1601 = vmatmul.mubr.f32.gmra.mrb[0].mxu0 %v1600
    %v1602 = vpop.f32.mrb[0].mxu0
    %v1603 = vadd.f32 1e-05, %v1602
    %v1604 = vpop.f32.mrb[0].mxu0
    %1605 = vmatprep.mubr.f32.mxu0 0.0
    %v1606 = vand.u32 %v1410, 4294901760
    %v1607 = vsub.f32 %v1410, %v1606
    %v1608 = vand.u32 %v1607, 4294901760
    %v1609 = vsub.f32 %v1607, %v1608
    %v1610 = vand.u32 %v1609, 4294901760
    %1611 = vmatmul.mubr.f32.gmra.mrb[0].mxu0 %v1610
    %v1612 = vpop.f32.mrb[0].mxu0
    %v1613 = vadd.f32 1e-05, %v1612
    %v1614 = vpop.f32.mrb[0].mxu0
    %1615 = vmatprep.mubr.f32.mxu0 0.0
    %v1616 = vand.u32 %v1411, 4294901760
    %v1617 = vsub.f32 %v1411, %v1616
    %v1618 = vand.u32 %v1617, 4294901760
    %v1619 = vsub.f32 %v1617, %v1618
    %v1620 = vand.u32 %v1619, 4294901760
    %1621 = vmatmul.mubr.f32.gmra.mrb[0].mxu0 %v1620
    %v1622 = vpop.f32.mrb[0].mxu0
    %v1623 = vadd.f32 1e-05, %v1622
    %v1624 = vpop.f32.mrb[0].mxu0
    %1625 = vmatprep.mubr.f32.mxu0 0.0
    %v1626 = vand.u32 %v1412, 4294901760
    %v1627 = vsub.f32 %v1412, %v1626
    %v1628 = vand.u32 %v1627, 4294901760
    %v1629 = vsub.f32 %v1627, %v1628
    %v1630 = vand.u32 %v1629, 4294901760
    %1631 = vmatmul.mubr.f32.gmra.mrb[0].mxu0 %v1630
    %v1632 = vpop.f32.mrb[0].mxu0
    %v1633 = vadd.f32 1e-05, %v1632
    %v1634 = vpop.f32.mrb[0].mxu0
    %1635 = vmatprep.mubr.f32.mxu0 0.0
    %v1636 = vand.u32 %v1413, 4294901760
    %v1637 = vsub.f32 %v1413, %v1636
    %v1638 = vand.u32 %v1637, 4294901760
    %v1639 = vsub.f32 %v1637, %v1638
    %v1640 = vand.u32 %v1639, 4294901760
    %1641 = vmatmul.mubr.f32.gmra.mrb[0].mxu0 %v1640
    %v1642 = vpop.f32.mrb[0].mxu0
    %v1643 = vadd.f32 1e-05, %v1642
    %v1644 = vpop.f32.mrb[0].mxu0
    %1645 = vmatprep.mubr.f32.mxu0 0.0
    %v1646 = vand.u32 %v1414, 4294901760
    %v1647 = vsub.f32 %v1414, %v1646
    %v1648 = vand.u32 %v1647, 4294901760
    %v1649 = vsub.f32 %v1647, %v1648
    %v1650 = vand.u32 %v1649, 4294901760
    %1651 = vmatmul.mubr.f32.gmra.mrb[0].mxu0 %v1650
    %v1652 = vpop.f32.mrb[0].mxu0
    %v1653 = vadd.f32 1e-05, %v1652
    %v1654 = vpop.f32.mrb[0].mxu0
    %1655 = vdwg.mxu0
    %1656 = vmatprep.subr.mxu0 0.0
    %v1657 = vand.u32 %v81, 4294901760
    %v1658 = vsub.f32 %v81, %v1657
    %v1659 = vand.u32 %v1658, 4294901760
    %v1660 = vsub.f32 %v1658, %v1659
    %v1661 = vand.u32 %v1660, 4294901760
    %1662 = vmatpush1.msra.mxu0 %v1661
    %1663 = vmatprep.subr.mxu0 0.0
    %v1664 = vand.u32 %v82, 4294901760
    %v1665 = vsub.f32 %v82, %v1664
    %v1666 = vand.u32 %v1665, 4294901760
    %v1667 = vsub.f32 %v1665, %v1666
    %v1668 = vand.u32 %v1667, 4294901760
    %1669 = vmatpush1.msra.mxu0 %v1668
    %1670 = vmatprep.subr.mxu0 0.0
    %v1671 = vand.u32 %v83, 4294901760
    %v1672 = vsub.f32 %v83, %v1671
    %v1673 = vand.u32 %v1672, 4294901760
    %v1674 = vsub.f32 %v1672, %v1673
    %v1675 = vand.u32 %v1674, 4294901760
    %1676 = vmatpush1.msra.mxu0 %v1675
    %1677 = vmatprep.subr.mxu0 0.0
    %v1678 = vand.u32 %v84, 4294901760
    %v1679 = vsub.f32 %v84, %v1678
    %v1680 = vand.u32 %v1679, 4294901760
    %v1681 = vsub.f32 %v1679, %v1680
    %v1682 = vand.u32 %v1681, 4294901760
    %1683 = vmatpush1.msra.mxu0 %v1682
    %1684 = vmatprep.subr.mxu0 0.0
    %v1685 = vand.u32 %v85, 4294901760
    %v1686 = vsub.f32 %v85, %v1685
    %v1687 = vand.u32 %v1686, 4294901760
    %v1688 = vsub.f32 %v1686, %v1687
    %v1689 = vand.u32 %v1688, 4294901760
    %1690 = vmatpush1.msra.mxu0 %v1689
    %1691 = vmatprep.subr.mxu0 0.0
    %v1692 = vand.u32 %v86, 4294901760
    %v1693 = vsub.f32 %v86, %v1692
    %v1694 = vand.u32 %v1693, 4294901760
    %v1695 = vsub.f32 %v1693, %v1694
    %v1696 = vand.u32 %v1695, 4294901760
    %1697 = vmatpush1.msra.mxu0 %v1696
    %1698 = vmatprep.subr.mxu0 0.0
    %v1699 = vand.u32 %v87, 4294901760
    %v1700 = vsub.f32 %v87, %v1699
    %v1701 = vand.u32 %v1700, 4294901760
    %v1702 = vsub.f32 %v1700, %v1701
    %v1703 = vand.u32 %v1702, 4294901760
    %1704 = vmatpush1.msra.mxu0 %v1703
    %1705 = vmatprep.subr.mxu0 0.0
    %v1706 = vand.u32 %v88, 4294901760
    %v1707 = vsub.f32 %v88, %v1706
    %v1708 = vand.u32 %v1707, 4294901760
    %v1709 = vsub.f32 %v1707, %v1708
    %v1710 = vand.u32 %v1709, 4294901760
    %1711 = vmatpush1.msra.mxu0 %v1710
    %1712 = vmatprep.subr.mxu0 0.0
    %v1713 = vand.u32 %v89, 4294901760
    %v1714 = vsub.f32 %v89, %v1713
    %v1715 = vand.u32 %v1714, 4294901760
    %v1716 = vsub.f32 %v1714, %v1715
    %v1717 = vand.u32 %v1716, 4294901760
    %1718 = vmatpush1.msra.mxu0 %v1717
    %1719 = vmatprep.subr.mxu0 0.0
    %v1720 = vand.u32 %v90, 4294901760
    %v1721 = vsub.f32 %v90, %v1720
    %v1722 = vand.u32 %v1721, 4294901760
    %v1723 = vsub.f32 %v1721, %v1722
    %v1724 = vand.u32 %v1723, 4294901760
    %1725 = vmatpush1.msra.mxu0 %v1724
    %1726 = vmatprep.subr.mxu0 0.0
    %v1727 = vand.u32 %v91, 4294901760
    %v1728 = vsub.f32 %v91, %v1727
    %v1729 = vand.u32 %v1728, 4294901760
    %v1730 = vsub.f32 %v1728, %v1729
    %v1731 = vand.u32 %v1730, 4294901760
    %1732 = vmatpush1.msra.mxu0 %v1731
    %1733 = vmatprep.subr.mxu0 0.0
    %v1734 = vand.u32 %v92, 4294901760
    %v1735 = vsub.f32 %v92, %v1734
    %v1736 = vand.u32 %v1735, 4294901760
    %v1737 = vsub.f32 %v1735, %v1736
    %v1738 = vand.u32 %v1737, 4294901760
    %1739 = vmatpush1.msra.mxu0 %v1738
    %1740 = vmatprep.subr.mxu0 0.0
    %v1741 = vand.u32 %v93, 4294901760
    %v1742 = vsub.f32 %v93, %v1741
    %v1743 = vand.u32 %v1742, 4294901760
    %v1744 = vsub.f32 %v1742, %v1743
    %v1745 = vand.u32 %v1744, 4294901760
    %1746 = vmatpush1.msra.mxu0 %v1745
    %1747 = vmatprep.subr.mxu0 0.0
    %v1748 = vand.u32 %v94, 4294901760
    %v1749 = vsub.f32 %v94, %v1748
    %v1750 = vand.u32 %v1749, 4294901760
    %v1751 = vsub.f32 %v1749, %v1750
    %v1752 = vand.u32 %v1751, 4294901760
    %1753 = vmatpush1.msra.mxu0 %v1752
    %1754 = vmatprep.subr.mxu0 0.0
    %v1755 = vand.u32 %v95, 4294901760
    %v1756 = vsub.f32 %v95, %v1755
    %v1757 = vand.u32 %v1756, 4294901760
    %v1758 = vsub.f32 %v1756, %v1757
    %v1759 = vand.u32 %v1758, 4294901760
    %1760 = vmatpush1.msra.mxu0 %v1759
    %1761 = vmatprep.subr.mxu0 0.0
    %v1762 = vand.u32 %v96, 4294901760
    %v1763 = vsub.f32 %v96, %v1762
    %v1764 = vand.u32 %v1763, 4294901760
    %v1765 = vsub.f32 %v1763, %v1764
    %v1766 = vand.u32 %v1765, 4294901760
    %1767 = vmatpush1.msra.mxu0 %v1766
    %1768 = vmatprep.subr.mxu0 0.0
    %1769 = vmatpush1.msra.mxu0 0.0
    %1770 = vmatprep.subr.mxu0 0.0
    %1771 = vmatpush1.msra.mxu0 0.0
    %1772 = vmatprep.subr.mxu0 0.0
    %1773 = vmatpush1.msra.mxu0 0.0
    %1774 = vmatprep.subr.mxu0 0.0
    %1775 = vmatpush1.msra.mxu0 0.0
    %1776 = vmatprep.subr.mxu0 0.0
    %1777 = vmatpush1.msra.mxu0 0.0
    %1778 = vmatprep.subr.mxu0 0.0
    %1779 = vmatpush1.msra.mxu0 0.0
    %1780 = vmatprep.subr.mxu0 0.0
    %1781 = vmatpush1.msra.mxu0 0.0
    %1782 = vmatprep.subr.mxu0 0.0
    %1783 = vmatpush1.msra.mxu0 0.0
    %1784 = vmatprep.subr.mxu0 0.0
    %1785 = vmatpush1.msra.mxu0 0.0
    %1786 = vmatprep.subr.mxu0 0.0
    %1787 = vmatpush1.msra.mxu0 0.0
    %1788 = vmatprep.subr.mxu0 0.0
    %1789 = vmatpush1.msra.mxu0 0.0
    %1790 = vmatprep.subr.mxu0 0.0
    %1791 = vmatpush1.msra.mxu0 0.0
    %1792 = vmatprep.subr.mxu0 0.0
    %1793 = vmatpush1.msra.mxu0 0.0
    %1794 = vmatprep.subr.mxu0 0.0
    %1795 = vmatpush1.msra.mxu0 0.0
    %1796 = vmatprep.subr.mxu0 0.0
    %1797 = vmatpush1.msra.mxu0 0.0
    %1798 = vmatprep.subr.mxu0 0.0
    %1799 = vmatpush1.msra.mxu0 0.0
    %1800 = vmatprep.mubr.f32.mxu0 0.0
    %v1801 = vand.u32 %v1399, 4294901760
    %1802 = vmatmul.mubr.f32.gmra.mrb[0].mxu0 %v1801
    %v1803 = vpop.f32.mrb[0].mxu0
    %v1804 = vadd.f32 %v1503, %v1803
    %v1805 = vpop.f32.mrb[0].mxu0
    %1806 = vmatprep.mubr.f32.mxu0 0.0
    %v1807 = vand.u32 %v1400, 4294901760
    %1808 = vmatmul.mubr.f32.gmra.mrb[0].mxu0 %v1807
    %v1809 = vpop.f32.mrb[0].mxu0
    %v1810 = vadd.f32 %v1513, %v1809
    %v1811 = vpop.f32.mrb[0].mxu0
    %1812 = vmatprep.mubr.f32.mxu0 0.0
    %v1813 = vand.u32 %v1401, 4294901760
    %1814 = vmatmul.mubr.f32.gmra.mrb[0].mxu0 %v1813
    %v1815 = vpop.f32.mrb[0].mxu0
    %v1816 = vadd.f32 %v1523, %v1815
    %v1817 = vpop.f32.mrb[0].mxu0
    %1818 = vmatprep.mubr.f32.mxu0 0.0
    %v1819 = vand.u32 %v1402, 4294901760
    %1820 = vmatmul.mubr.f32.gmra.mrb[0].mxu0 %v1819
    %v1821 = vpop.f32.mrb[0].mxu0
    %v1822 = vadd.f32 %v1533, %v1821
    %v1823 = vpop.f32.mrb[0].mxu0
    %1824 = vmatprep.mubr.f32.mxu0 0.0
    %v1825 = vand.u32 %v1403, 4294901760
    %1826 = vmatmul.mubr.f32.gmra.mrb[0].mxu0 %v1825
    %v1827 = vpop.f32.mrb[0].mxu0
    %v1828 = vadd.f32 %v1543, %v1827
    %v1829 = vpop.f32.mrb[0].mxu0
    %1830 = vmatprep.mubr.f32.mxu0 0.0
    %v1831 = vand.u32 %v1404, 4294901760
    %1832 = vmatmul.mubr.f32.gmra.mrb[0].mxu0 %v1831
    %v1833 = vpop.f32.mrb[0].mxu0
    %v1834 = vadd.f32 %v1553, %v1833
    %v1835 = vpop.f32.mrb[0].mxu0
    %1836 = vmatprep.mubr.f32.mxu0 0.0
    %v1837 = vand.u32 %v1405, 4294901760
    %1838 = vmatmul.mubr.f32.gmra.mrb[0].mxu0 %v1837
    %v1839 = vpop.f32.mrb[0].mxu0
    %v1840 = vadd.f32 %v1563, %v1839
    %v1841 = vpop.f32.mrb[0].mxu0
    %1842 = vmatprep.mubr.f32.mxu0 0.0
    %v1843 = vand.u32 %v1406, 4294901760
    %1844 = vmatmul.mubr.f32.gmra.mrb[0].mxu0 %v1843
    %v1845 = vpop.f32.mrb[0].mxu0
    %v1846 = vadd.f32 %v1573, %v1845
    %v1847 = vpop.f32.mrb[0].mxu0
    %1848 = vmatprep.mubr.f32.mxu0 0.0
    %v1849 = vand.u32 %v1407, 4294901760
    %1850 = vmatmul.mubr.f32.gmra.mrb[0].mxu0 %v1849
    %v1851 = vpop.f32.mrb[0].mxu0
    %v1852 = vadd.f32 %v1583, %v1851
    %v1853 = vpop.f32.mrb[0].mxu0
    %1854 = vmatprep.mubr.f32.mxu0 0.0
    %v1855 = vand.u32 %v1408, 4294901760
    %1856 = vmatmul.mubr.f32.gmra.mrb[0].mxu0 %v1855
    %v1857 = vpop.f32.mrb[0].mxu0
    %v1858 = vadd.f32 %v1593, %v1857
    %v1859 = vpop.f32.mrb[0].mxu0
    %1860 = vmatprep.mubr.f32.mxu0 0.0
    %v1861 = vand.u32 %v1409, 4294901760
    %1862 = vmatmul.mubr.f32.gmra.mrb[0].mxu0 %v1861
    %v1863 = vpop.f32.mrb[0].mxu0
    %v1864 = vadd.f32 %v1603, %v1863
    %v1865 = vpop.f32.mrb[0].mxu0
    %1866 = vmatprep.mubr.f32.mxu0 0.0
    %v1867 = vand.u32 %v1410, 4294901760
    %1868 = vmatmul.mubr.f32.gmra.mrb[0].mxu0 %v1867
    %v1869 = vpop.f32.mrb[0].mxu0
    %v1870 = vadd.f32 %v1613, %v1869
    %v1871 = vpop.f32.mrb[0].mxu0
    %1872 = vmatprep.mubr.f32.mxu0 0.0
    %v1873 = vand.u32 %v1411, 4294901760
    %1874 = vmatmul.mubr.f32.gmra.mrb[0].mxu0 %v1873
    %v1875 = vpop.f32.mrb[0].mxu0
    %v1876 = vadd.f32 %v1623, %v1875
    %v1877 = vpop.f32.mrb[0].mxu0
    %1878 = vmatprep.mubr.f32.mxu0 0.0
    %v1879 = vand.u32 %v1412, 4294901760
    %1880 = vmatmul.mubr.f32.gmra.mrb[0].mxu0 %v1879
    %v1881 = vpop.f32.mrb[0].mxu0
    %v1882 = vadd.f32 %v1633, %v1881
    %v1883 = vpop.f32.mrb[0].mxu0
    %1884 = vmatprep.mubr.f32.mxu0 0.0
    %v1885 = vand.u32 %v1413, 4294901760
    %1886 = vmatmul.mubr.f32.gmra.mrb[0].mxu0 %v1885
    %v1887 = vpop.f32.mrb[0].mxu0
    %v1888 = vadd.f32 %v1643, %v1887
    %v1889 = vpop.f32.mrb[0].mxu0
    %1890 = vmatprep.mubr.f32.mxu0 0.0
    %v1891 = vand.u32 %v1414, 4294901760
    %1892 = vmatmul.mubr.f32.gmra.mrb[0].mxu0 %v1891
    %v1893 = vpop.f32.mrb[0].mxu0
    %v1894 = vadd.f32 %v1653, %v1893
    %v1895 = vpop.f32.mrb[0].mxu0
    %1896 = vdwg.mxu0
    %1897 = vmatprep.subr.mxu0 0.0
    %v1898 = vand.u32 %v81, 4294901760
    %v1899 = vsub.f32 %v81, %v1898
    %1900 = vmatpush1.msra.mxu0 %v1899
    %1901 = vmatprep.subr.mxu0 0.0
    %v1902 = vand.u32 %v82, 4294901760
    %v1903 = vsub.f32 %v82, %v1902
    %1904 = vmatpush1.msra.mxu0 %v1903
    %1905 = vmatprep.subr.mxu0 0.0
    %v1906 = vand.u32 %v83, 4294901760
    %v1907 = vsub.f32 %v83, %v1906
    %1908 = vmatpush1.msra.mxu0 %v1907
    %1909 = vmatprep.subr.mxu0 0.0
    %v1910 = vand.u32 %v84, 4294901760
    %v1911 = vsub.f32 %v84, %v1910
    %1912 = vmatpush1.msra.mxu0 %v1911
    %1913 = vmatprep.subr.mxu0 0.0
    %v1914 = vand.u32 %v85, 4294901760
    %v1915 = vsub.f32 %v85, %v1914
    %1916 = vmatpush1.msra.mxu0 %v1915
    %1917 = vmatprep.subr.mxu0 0.0
    %v1918 = vand.u32 %v86, 4294901760
    %v1919 = vsub.f32 %v86, %v1918
    %1920 = vmatpush1.msra.mxu0 %v1919
    %1921 = vmatprep.subr.mxu0 0.0
    %v1922 = vand.u32 %v87, 4294901760
    %v1923 = vsub.f32 %v87, %v1922
    %1924 = vmatpush1.msra.mxu0 %v1923
    %1925 = vmatprep.subr.mxu0 0.0
    %v1926 = vand.u32 %v88, 4294901760
    %v1927 = vsub.f32 %v88, %v1926
    %1928 = vmatpush1.msra.mxu0 %v1927
    %1929 = vmatprep.subr.mxu0 0.0
    %v1930 = vand.u32 %v89, 4294901760
    %v1931 = vsub.f32 %v89, %v1930
    %1932 = vmatpush1.msra.mxu0 %v1931
    %1933 = vmatprep.subr.mxu0 0.0
    %v1934 = vand.u32 %v90, 4294901760
    %v1935 = vsub.f32 %v90, %v1934
    %1936 = vmatpush1.msra.mxu0 %v1935
    %1937 = vmatprep.subr.mxu0 0.0
    %v1938 = vand.u32 %v91, 4294901760
    %v1939 = vsub.f32 %v91, %v1938
    %1940 = vmatpush1.msra.mxu0 %v1939
    %1941 = vmatprep.subr.mxu0 0.0
    %v1942 = vand.u32 %v92, 4294901760
    %v1943 = vsub.f32 %v92, %v1942
    %1944 = vmatpush1.msra.mxu0 %v1943
    %1945 = vmatprep.subr.mxu0 0.0
    %v1946 = vand.u32 %v93, 4294901760
    %v1947 = vsub.f32 %v93, %v1946
    %1948 = vmatpush1.msra.mxu0 %v1947
    %1949 = vmatprep.subr.mxu0 0.0
    %v1950 = vand.u32 %v94, 4294901760
    %v1951 = vsub.f32 %v94, %v1950
    %1952 = vmatpush1.msra.mxu0 %v1951
    %1953 = vmatprep.subr.mxu0 0.0
    %v1954 = vand.u32 %v95, 4294901760
    %v1955 = vsub.f32 %v95, %v1954
    %1956 = vmatpush1.msra.mxu0 %v1955
    %1957 = vmatprep.subr.mxu0 0.0
    %v1958 = vand.u32 %v96, 4294901760
    %v1959 = vsub.f32 %v96, %v1958
    %1960 = vmatpush1.msra.mxu0 %v1959
    %1961 = vmatprep.subr.mxu0 0.0
    %1962 = vmatpush1.msra.mxu0 0.0
    %1963 = vmatprep.subr.mxu0 0.0
    %1964 = vmatpush1.msra.mxu0 0.0
    %1965 = vmatprep.subr.mxu0 0.0
    %1966 = vmatpush1.msra.mxu0 0.0
    %1967 = vmatprep.subr.mxu0 0.0
    %1968 = vmatpush1.msra.mxu0 0.0
    %1969 = vmatprep.subr.mxu0 0.0
    %1970 = vmatpush1.msra.mxu0 0.0
    %1971 = vmatprep.subr.mxu0 0.0
    %1972 = vmatpush1.msra.mxu0 0.0
    %1973 = vmatprep.subr.mxu0 0.0
    %1974 = vmatpush1.msra.mxu0 0.0
    %1975 = vmatprep.subr.mxu0 0.0
    %1976 = vmatpush1.msra.mxu0 0.0
    %1977 = vmatprep.subr.mxu0 0.0
    %1978 = vmatpush1.msra.mxu0 0.0
    %1979 = vmatprep.subr.mxu0 0.0
    %1980 = vmatpush1.msra.mxu0 0.0
    %1981 = vmatprep.subr.mxu0 0.0
    %1982 = vmatpush1.msra.mxu0 0.0
    %1983 = vmatprep.subr.mxu0 0.0
    %1984 = vmatpush1.msra.mxu0 0.0
    %1985 = vmatprep.subr.mxu0 0.0
    %1986 = vmatpush1.msra.mxu0 0.0
    %1987 = vmatprep.subr.mxu0 0.0
    %1988 = vmatpush1.msra.mxu0 0.0
    %1989 = vmatprep.subr.mxu0 0.0
    %1990 = vmatpush1.msra.mxu0 0.0
    %1991 = vmatprep.subr.mxu0 0.0
    %1992 = vmatpush1.msra.mxu0 0.0
    %1993 = vmatprep.mubr.f32.mxu0 0.0
    %v1994 = vand.u32 %v1399, 4294901760
    %v1995 = vsub.f32 %v1399, %v1994
    %1996 = vmatmul.mubr.f32.gmra.mrb[0].mxu0 %v1995
    %v1997 = vpop.f32.mrb[0].mxu0
    %v1998 = vadd.f32 %v1804, %v1997
    %v1999 = vpop.f32.mrb[0].mxu0
    %2000 = vmatprep.mubr.f32.mxu0 0.0
    %v2001 = vand.u32 %v1400, 4294901760
    %v2002 = vsub.f32 %v1400, %v2001
    %2003 = vmatmul.mubr.f32.gmra.mrb[0].mxu0 %v2002
    %v2004 = vpop.f32.mrb[0].mxu0
    %v2005 = vadd.f32 %v1810, %v2004
    %v2006 = vpop.f32.mrb[0].mxu0
    %2007 = vmatprep.mubr.f32.mxu0 0.0
    %v2008 = vand.u32 %v1401, 4294901760
    %v2009 = vsub.f32 %v1401, %v2008
    %2010 = vmatmul.mubr.f32.gmra.mrb[0].mxu0 %v2009
    %v2011 = vpop.f32.mrb[0].mxu0
    %v2012 = vadd.f32 %v1816, %v2011
    %v2013 = vpop.f32.mrb[0].mxu0
    %2014 = vmatprep.mubr.f32.mxu0 0.0
    %v2015 = vand.u32 %v1402, 4294901760
    %v2016 = vsub.f32 %v1402, %v2015
    %2017 = vmatmul.mubr.f32.gmra.mrb[0].mxu0 %v2016
    %v2018 = vpop.f32.mrb[0].mxu0
    %v2019 = vadd.f32 %v1822, %v2018
    %v2020 = vpop.f32.mrb[0].mxu0
    %2021 = vmatprep.mubr.f32.mxu0 0.0
    %v2022 = vand.u32 %v1403, 4294901760
    %v2023 = vsub.f32 %v1403, %v2022
    %2024 = vmatmul.mubr.f32.gmra.mrb[0].mxu0 %v2023
    %v2025 = vpop.f32.mrb[0].mxu0
    %v2026 = vadd.f32 %v1828, %v2025
    %v2027 = vpop.f32.mrb[0].mxu0
    %2028 = vmatprep.mubr.f32.mxu0 0.0
    %v2029 = vand.u32 %v1404, 4294901760
    %v2030 = vsub.f32 %v1404, %v2029
    %2031 = vmatmul.mubr.f32.gmra.mrb[0].mxu0 %v2030
    %v2032 = vpop.f32.mrb[0].mxu0
    %v2033 = vadd.f32 %v1834, %v2032
    %v2034 = vpop.f32.mrb[0].mxu0
    %2035 = vmatprep.mubr.f32.mxu0 0.0
    %v2036 = vand.u32 %v1405, 4294901760
    %v2037 = vsub.f32 %v1405, %v2036
    %2038 = vmatmul.mubr.f32.gmra.mrb[0].mxu0 %v2037
    %v2039 = vpop.f32.mrb[0].mxu0
    %v2040 = vadd.f32 %v1840, %v2039
    %v2041 = vpop.f32.mrb[0].mxu0
    %2042 = vmatprep.mubr.f32.mxu0 0.0
    %v2043 = vand.u32 %v1406, 4294901760
    %v2044 = vsub.f32 %v1406, %v2043
    %2045 = vmatmul.mubr.f32.gmra.mrb[0].mxu0 %v2044
    %v2046 = vpop.f32.mrb[0].mxu0
    %v2047 = vadd.f32 %v1846, %v2046
    %v2048 = vpop.f32.mrb[0].mxu0
    %2049 = vmatprep.mubr.f32.mxu0 0.0
    %v2050 = vand.u32 %v1407, 4294901760
    %v2051 = vsub.f32 %v1407, %v2050
    %2052 = vmatmul.mubr.f32.gmra.mrb[0].mxu0 %v2051
    %v2053 = vpop.f32.mrb[0].mxu0
    %v2054 = vadd.f32 %v1852, %v2053
    %v2055 = vpop.f32.mrb[0].mxu0
    %2056 = vmatprep.mubr.f32.mxu0 0.0
    %v2057 = vand.u32 %v1408, 4294901760
    %v2058 = vsub.f32 %v1408, %v2057
    %2059 = vmatmul.mubr.f32.gmra.mrb[0].mxu0 %v2058
    %v2060 = vpop.f32.mrb[0].mxu0
    %v2061 = vadd.f32 %v1858, %v2060
    %v2062 = vpop.f32.mrb[0].mxu0
    %2063 = vmatprep.mubr.f32.mxu0 0.0
    %v2064 = vand.u32 %v1409, 4294901760
    %v2065 = vsub.f32 %v1409, %v2064
    %2066 = vmatmul.mubr.f32.gmra.mrb[0].mxu0 %v2065
    %v2067 = vpop.f32.mrb[0].mxu0
    %v2068 = vadd.f32 %v1864, %v2067
    %v2069 = vpop.f32.mrb[0].mxu0
    %2070 = vmatprep.mubr.f32.mxu0 0.0
    %v2071 = vand.u32 %v1410, 4294901760
    %v2072 = vsub.f32 %v1410, %v2071
    %2073 = vmatmul.mubr.f32.gmra.mrb[0].mxu0 %v2072
    %v2074 = vpop.f32.mrb[0].mxu0
    %v2075 = vadd.f32 %v1870, %v2074
    %v2076 = vpop.f32.mrb[0].mxu0
    %2077 = vmatprep.mubr.f32.mxu0 0.0
    %v2078 = vand.u32 %v1411, 4294901760
    %v2079 = vsub.f32 %v1411, %v2078
    %2080 = vmatmul.mubr.f32.gmra.mrb[0].mxu0 %v2079
    %v2081 = vpop.f32.mrb[0].mxu0
    %v2082 = vadd.f32 %v1876, %v2081
    %v2083 = vpop.f32.mrb[0].mxu0
    %2084 = vmatprep.mubr.f32.mxu0 0.0
    %v2085 = vand.u32 %v1412, 4294901760
    %v2086 = vsub.f32 %v1412, %v2085
    %2087 = vmatmul.mubr.f32.gmra.mrb[0].mxu0 %v2086
    %v2088 = vpop.f32.mrb[0].mxu0
    %v2089 = vadd.f32 %v1882, %v2088
    %v2090 = vpop.f32.mrb[0].mxu0
    %2091 = vmatprep.mubr.f32.mxu0 0.0
    %v2092 = vand.u32 %v1413, 4294901760
    %v2093 = vsub.f32 %v1413, %v2092
    %2094 = vmatmul.mubr.f32.gmra.mrb[0].mxu0 %v2093
    %v2095 = vpop.f32.mrb[0].mxu0
    %v2096 = vadd.f32 %v1888, %v2095
    %v2097 = vpop.f32.mrb[0].mxu0
    %2098 = vmatprep.mubr.f32.mxu0 0.0
    %v2099 = vand.u32 %v1414, 4294901760
    %v2100 = vsub.f32 %v1414, %v2099
    %2101 = vmatmul.mubr.f32.gmra.mrb[0].mxu0 %v2100
    %v2102 = vpop.f32.mrb[0].mxu0
    %v2103 = vadd.f32 %v1894, %v2102
    %v2104 = vpop.f32.mrb[0].mxu0
    %2105 = vdwg.mxu0
    %2106 = vmatprep.subr.mxu0 0.0
    %v2107 = vand.u32 %v81, 4294901760
    %2108 = vmatpush1.msra.mxu0 %v2107
    %2109 = vmatprep.subr.mxu0 0.0
    %v2110 = vand.u32 %v82, 4294901760
    %2111 = vmatpush1.msra.mxu0 %v2110
    %2112 = vmatprep.subr.mxu0 0.0
    %v2113 = vand.u32 %v83, 4294901760
    %2114 = vmatpush1.msra.mxu0 %v2113
    %2115 = vmatprep.subr.mxu0 0.0
    %v2116 = vand.u32 %v84, 4294901760
    %2117 = vmatpush1.msra.mxu0 %v2116
    %2118 = vmatprep.subr.mxu0 0.0
    %v2119 = vand.u32 %v85, 4294901760
    %2120 = vmatpush1.msra.mxu0 %v2119
    %2121 = vmatprep.subr.mxu0 0.0
    %v2122 = vand.u32 %v86, 4294901760
    %2123 = vmatpush1.msra.mxu0 %v2122
    %2124 = vmatprep.subr.mxu0 0.0
    %v2125 = vand.u32 %v87, 4294901760
    %2126 = vmatpush1.msra.mxu0 %v2125
    %2127 = vmatprep.subr.mxu0 0.0
    %v2128 = vand.u32 %v88, 4294901760
    %2129 = vmatpush1.msra.mxu0 %v2128
    %2130 = vmatprep.subr.mxu0 0.0
    %v2131 = vand.u32 %v89, 4294901760
    %2132 = vmatpush1.msra.mxu0 %v2131
    %2133 = vmatprep.subr.mxu0 0.0
    %v2134 = vand.u32 %v90, 4294901760
    %2135 = vmatpush1.msra.mxu0 %v2134
    %2136 = vmatprep.subr.mxu0 0.0
    %v2137 = vand.u32 %v91, 4294901760
    %2138 = vmatpush1.msra.mxu0 %v2137
    %2139 = vmatprep.subr.mxu0 0.0
    %v2140 = vand.u32 %v92, 4294901760
    %2141 = vmatpush1.msra.mxu0 %v2140
    %2142 = vmatprep.subr.mxu0 0.0
    %v2143 = vand.u32 %v93, 4294901760
    %2144 = vmatpush1.msra.mxu0 %v2143
    %2145 = vmatprep.subr.mxu0 0.0
    %v2146 = vand.u32 %v94, 4294901760
    %2147 = vmatpush1.msra.mxu0 %v2146
    %2148 = vmatprep.subr.mxu0 0.0
    %v2149 = vand.u32 %v95, 4294901760
    %2150 = vmatpush1.msra.mxu0 %v2149
    %2151 = vmatprep.subr.mxu0 0.0
    %v2152 = vand.u32 %v96, 4294901760
    %2153 = vmatpush1.msra.mxu0 %v2152
    %2154 = vmatprep.subr.mxu0 0.0
    %2155 = vmatpush1.msra.mxu0 0.0
    %2156 = vmatprep.subr.mxu0 0.0
    %2157 = vmatpush1.msra.mxu0 0.0
    %2158 = vmatprep.subr.mxu0 0.0
    %2159 = vmatpush1.msra.mxu0 0.0
    %2160 = vmatprep.subr.mxu0 0.0
    %2161 = vmatpush1.msra.mxu0 0.0
    %2162 = vmatprep.subr.mxu0 0.0
    %2163 = vmatpush1.msra.mxu0 0.0
    %2164 = vmatprep.subr.mxu0 0.0
    %2165 = vmatpush1.msra.mxu0 0.0
    %2166 = vmatprep.subr.mxu0 0.0
    %2167 = vmatpush1.msra.mxu0 0.0
    %2168 = vmatprep.subr.mxu0 0.0
    %2169 = vmatpush1.msra.mxu0 0.0
    %2170 = vmatprep.subr.mxu0 0.0
    %2171 = vmatpush1.msra.mxu0 0.0
    %2172 = vmatprep.subr.mxu0 0.0
    %2173 = vmatpush1.msra.mxu0 0.0
    %2174 = vmatprep.subr.mxu0 0.0
    %2175 = vmatpush1.msra.mxu0 0.0
    %2176 = vmatprep.subr.mxu0 0.0
    %2177 = vmatpush1.msra.mxu0 0.0
    %2178 = vmatprep.subr.mxu0 0.0
    %2179 = vmatpush1.msra.mxu0 0.0
    %2180 = vmatprep.subr.mxu0 0.0
    %2181 = vmatpush1.msra.mxu0 0.0
    %2182 = vmatprep.subr.mxu0 0.0
    %2183 = vmatpush1.msra.mxu0 0.0
    %2184 = vmatprep.subr.mxu0 0.0
    %2185 = vmatpush1.msra.mxu0 0.0
    %2186 = vmatprep.mubr.f32.mxu0 0.0
    %v2187 = vand.u32 %v1399, 4294901760
    %v2188 = vsub.f32 %v1399, %v2187
    %v2189 = vand.u32 %v2188, 4294901760
    %2190 = vmatmul.mubr.f32.gmra.mrb[0].mxu0 %v2189
    %v2191 = vpop.f32.mrb[0].mxu0
    %v2192 = vadd.f32 %v1998, %v2191
    %v2193 = vpop.f32.mrb[0].mxu0
    %2194 = vmatprep.mubr.f32.mxu0 0.0
    %v2195 = vand.u32 %v1400, 4294901760
    %v2196 = vsub.f32 %v1400, %v2195
    %v2197 = vand.u32 %v2196, 4294901760
    %2198 = vmatmul.mubr.f32.gmra.mrb[0].mxu0 %v2197
    %v2199 = vpop.f32.mrb[0].mxu0
    %v2200 = vadd.f32 %v2005, %v2199
    %v2201 = vpop.f32.mrb[0].mxu0
    %2202 = vmatprep.mubr.f32.mxu0 0.0
    %v2203 = vand.u32 %v1401, 4294901760
    %v2204 = vsub.f32 %v1401, %v2203
    %v2205 = vand.u32 %v2204, 4294901760
    %2206 = vmatmul.mubr.f32.gmra.mrb[0].mxu0 %v2205
    %v2207 = vpop.f32.mrb[0].mxu0
    %v2208 = vadd.f32 %v2012, %v2207
    %v2209 = vpop.f32.mrb[0].mxu0
    %2210 = vmatprep.mubr.f32.mxu0 0.0
    %v2211 = vand.u32 %v1402, 4294901760
    %v2212 = vsub.f32 %v1402, %v2211
    %v2213 = vand.u32 %v2212, 4294901760
    %2214 = vmatmul.mubr.f32.gmra.mrb[0].mxu0 %v2213
    %v2215 = vpop.f32.mrb[0].mxu0
    %v2216 = vadd.f32 %v2019, %v2215
    %v2217 = vpop.f32.mrb[0].mxu0
    %2218 = vmatprep.mubr.f32.mxu0 0.0
    %v2219 = vand.u32 %v1403, 4294901760
    %v2220 = vsub.f32 %v1403, %v2219
    %v2221 = vand.u32 %v2220, 4294901760
    %2222 = vmatmul.mubr.f32.gmra.mrb[0].mxu0 %v2221
    %v2223 = vpop.f32.mrb[0].mxu0
    %v2224 = vadd.f32 %v2026, %v2223
    %v2225 = vpop.f32.mrb[0].mxu0
    %2226 = vmatprep.mubr.f32.mxu0 0.0
    %v2227 = vand.u32 %v1404, 4294901760
    %v2228 = vsub.f32 %v1404, %v2227
    %v2229 = vand.u32 %v2228, 4294901760
    %2230 = vmatmul.mubr.f32.gmra.mrb[0].mxu0 %v2229
    %v2231 = vpop.f32.mrb[0].mxu0
    %v2232 = vadd.f32 %v2033, %v2231
    %v2233 = vpop.f32.mrb[0].mxu0
    %2234 = vmatprep.mubr.f32.mxu0 0.0
    %v2235 = vand.u32 %v1405, 4294901760
    %v2236 = vsub.f32 %v1405, %v2235
    %v2237 = vand.u32 %v2236, 4294901760
    %2238 = vmatmul.mubr.f32.gmra.mrb[0].mxu0 %v2237
    %v2239 = vpop.f32.mrb[0].mxu0
    %v2240 = vadd.f32 %v2040, %v2239
    %v2241 = vpop.f32.mrb[0].mxu0
    %2242 = vmatprep.mubr.f32.mxu0 0.0
    %v2243 = vand.u32 %v1406, 4294901760
    %v2244 = vsub.f32 %v1406, %v2243
    %v2245 = vand.u32 %v2244, 4294901760
    %2246 = vmatmul.mubr.f32.gmra.mrb[0].mxu0 %v2245
    %v2247 = vpop.f32.mrb[0].mxu0
    %v2248 = vadd.f32 %v2047, %v2247
    %v2249 = vpop.f32.mrb[0].mxu0
    %2250 = vmatprep.mubr.f32.mxu0 0.0
    %v2251 = vand.u32 %v1407, 4294901760
    %v2252 = vsub.f32 %v1407, %v2251
    %v2253 = vand.u32 %v2252, 4294901760
    %2254 = vmatmul.mubr.f32.gmra.mrb[0].mxu0 %v2253
    %v2255 = vpop.f32.mrb[0].mxu0
    %v2256 = vadd.f32 %v2054, %v2255
    %v2257 = vpop.f32.mrb[0].mxu0
    %2258 = vmatprep.mubr.f32.mxu0 0.0
    %v2259 = vand.u32 %v1408, 4294901760
    %v2260 = vsub.f32 %v1408, %v2259
    %v2261 = vand.u32 %v2260, 4294901760
    %2262 = vmatmul.mubr.f32.gmra.mrb[0].mxu0 %v2261
    %v2263 = vpop.f32.mrb[0].mxu0
    %v2264 = vadd.f32 %v2061, %v2263
    %v2265 = vpop.f32.mrb[0].mxu0
    %2266 = vmatprep.mubr.f32.mxu0 0.0
    %v2267 = vand.u32 %v1409, 4294901760
    %v2268 = vsub.f32 %v1409, %v2267
    %v2269 = vand.u32 %v2268, 4294901760
    %2270 = vmatmul.mubr.f32.gmra.mrb[0].mxu0 %v2269
    %v2271 = vpop.f32.mrb[0].mxu0
    %v2272 = vadd.f32 %v2068, %v2271
    %v2273 = vpop.f32.mrb[0].mxu0
    %2274 = vmatprep.mubr.f32.mxu0 0.0
    %v2275 = vand.u32 %v1410, 4294901760
    %v2276 = vsub.f32 %v1410, %v2275
    %v2277 = vand.u32 %v2276, 4294901760
    %2278 = vmatmul.mubr.f32.gmra.mrb[0].mxu0 %v2277
    %v2279 = vpop.f32.mrb[0].mxu0
    %v2280 = vadd.f32 %v2075, %v2279
    %v2281 = vpop.f32.mrb[0].mxu0
    %2282 = vmatprep.mubr.f32.mxu0 0.0
    %v2283 = vand.u32 %v1411, 4294901760
    %v2284 = vsub.f32 %v1411, %v2283
    %v2285 = vand.u32 %v2284, 4294901760
    %2286 = vmatmul.mubr.f32.gmra.mrb[0].mxu0 %v2285
    %v2287 = vpop.f32.mrb[0].mxu0
    %v2288 = vadd.f32 %v2082, %v2287
    %v2289 = vpop.f32.mrb[0].mxu0
    %2290 = vmatprep.mubr.f32.mxu0 0.0
    %v2291 = vand.u32 %v1412, 4294901760
    %v2292 = vsub.f32 %v1412, %v2291
    %v2293 = vand.u32 %v2292, 4294901760
    %2294 = vmatmul.mubr.f32.gmra.mrb[0].mxu0 %v2293
    %v2295 = vpop.f32.mrb[0].mxu0
    %v2296 = vadd.f32 %v2089, %v2295
    %v2297 = vpop.f32.mrb[0].mxu0
    %2298 = vmatprep.mubr.f32.mxu0 0.0
    %v2299 = vand.u32 %v1413, 4294901760
    %v2300 = vsub.f32 %v1413, %v2299
    %v2301 = vand.u32 %v2300, 4294901760
    %2302 = vmatmul.mubr.f32.gmra.mrb[0].mxu0 %v2301
    %v2303 = vpop.f32.mrb[0].mxu0
    %v2304 = vadd.f32 %v2096, %v2303
    %v2305 = vpop.f32.mrb[0].mxu0
    %2306 = vmatprep.mubr.f32.mxu0 0.0
    %v2307 = vand.u32 %v1414, 4294901760
    %v2308 = vsub.f32 %v1414, %v2307
    %v2309 = vand.u32 %v2308, 4294901760
    %2310 = vmatmul.mubr.f32.gmra.mrb[0].mxu0 %v2309
    %v2311 = vpop.f32.mrb[0].mxu0
    %v2312 = vadd.f32 %v2103, %v2311
    %v2313 = vpop.f32.mrb[0].mxu0
    %2314 = vdwg.mxu0
    %2315 = vmatprep.subr.mxu0 0.0
    %v2316 = vand.u32 %v81, 4294901760
    %v2317 = vsub.f32 %v81, %v2316
    %v2318 = vand.u32 %v2317, 4294901760
    %2319 = vmatpush1.msra.mxu0 %v2318
    %2320 = vmatprep.subr.mxu0 0.0
    %v2321 = vand.u32 %v82, 4294901760
    %v2322 = vsub.f32 %v82, %v2321
    %v2323 = vand.u32 %v2322, 4294901760
    %2324 = vmatpush1.msra.mxu0 %v2323
    %2325 = vmatprep.subr.mxu0 0.0
    %v2326 = vand.u32 %v83, 4294901760
    %v2327 = vsub.f32 %v83, %v2326
    %v2328 = vand.u32 %v2327, 4294901760
    %2329 = vmatpush1.msra.mxu0 %v2328
    %2330 = vmatprep.subr.mxu0 0.0
    %v2331 = vand.u32 %v84, 4294901760
    %v2332 = vsub.f32 %v84, %v2331
    %v2333 = vand.u32 %v2332, 4294901760
    %2334 = vmatpush1.msra.mxu0 %v2333
    %2335 = vmatprep.subr.mxu0 0.0
    %v2336 = vand.u32 %v85, 4294901760
    %v2337 = vsub.f32 %v85, %v2336
    %v2338 = vand.u32 %v2337, 4294901760
    %2339 = vmatpush1.msra.mxu0 %v2338
    %2340 = vmatprep.subr.mxu0 0.0
    %v2341 = vand.u32 %v86, 4294901760
    %v2342 = vsub.f32 %v86, %v2341
    %v2343 = vand.u32 %v2342, 4294901760
    %2344 = vmatpush1.msra.mxu0 %v2343
    %2345 = vmatprep.subr.mxu0 0.0
    %v2346 = vand.u32 %v87, 4294901760
    %v2347 = vsub.f32 %v87, %v2346
    %v2348 = vand.u32 %v2347, 4294901760
    %2349 = vmatpush1.msra.mxu0 %v2348
    %2350 = vmatprep.subr.mxu0 0.0
    %v2351 = vand.u32 %v88, 4294901760
    %v2352 = vsub.f32 %v88, %v2351
    %v2353 = vand.u32 %v2352, 4294901760
    %2354 = vmatpush1.msra.mxu0 %v2353
    %2355 = vmatprep.subr.mxu0 0.0
    %v2356 = vand.u32 %v89, 4294901760
    %v2357 = vsub.f32 %v89, %v2356
    %v2358 = vand.u32 %v2357, 4294901760
    %2359 = vmatpush1.msra.mxu0 %v2358
    %2360 = vmatprep.subr.mxu0 0.0
    %v2361 = vand.u32 %v90, 4294901760
    %v2362 = vsub.f32 %v90, %v2361
    %v2363 = vand.u32 %v2362, 4294901760
    %2364 = vmatpush1.msra.mxu0 %v2363
    %2365 = vmatprep.subr.mxu0 0.0
    %v2366 = vand.u32 %v91, 4294901760
    %v2367 = vsub.f32 %v91, %v2366
    %v2368 = vand.u32 %v2367, 4294901760
    %2369 = vmatpush1.msra.mxu0 %v2368
    %2370 = vmatprep.subr.mxu0 0.0
    %v2371 = vand.u32 %v92, 4294901760
    %v2372 = vsub.f32 %v92, %v2371
    %v2373 = vand.u32 %v2372, 4294901760
    %2374 = vmatpush1.msra.mxu0 %v2373
    %2375 = vmatprep.subr.mxu0 0.0
    %v2376 = vand.u32 %v93, 4294901760
    %v2377 = vsub.f32 %v93, %v2376
    %v2378 = vand.u32 %v2377, 4294901760
    %2379 = vmatpush1.msra.mxu0 %v2378
    %2380 = vmatprep.subr.mxu0 0.0
    %v2381 = vand.u32 %v94, 4294901760
    %v2382 = vsub.f32 %v94, %v2381
    %v2383 = vand.u32 %v2382, 4294901760
    %2384 = vmatpush1.msra.mxu0 %v2383
    %2385 = vmatprep.subr.mxu0 0.0
    %v2386 = vand.u32 %v95, 4294901760
    %v2387 = vsub.f32 %v95, %v2386
    %v2388 = vand.u32 %v2387, 4294901760
    %2389 = vmatpush1.msra.mxu0 %v2388
    %2390 = vmatprep.subr.mxu0 0.0
    %v2391 = vand.u32 %v96, 4294901760
    %v2392 = vsub.f32 %v96, %v2391
    %v2393 = vand.u32 %v2392, 4294901760
    %2394 = vmatpush1.msra.mxu0 %v2393
    %2395 = vmatprep.subr.mxu0 0.0
    %2396 = vmatpush1.msra.mxu0 0.0
    %2397 = vmatprep.subr.mxu0 0.0
    %2398 = vmatpush1.msra.mxu0 0.0
    %2399 = vmatprep.subr.mxu0 0.0
    %2400 = vmatpush1.msra.mxu0 0.0
    %2401 = vmatprep.subr.mxu0 0.0
    %2402 = vmatpush1.msra.mxu0 0.0
    %2403 = vmatprep.subr.mxu0 0.0
    %2404 = vmatpush1.msra.mxu0 0.0
    %2405 = vmatprep.subr.mxu0 0.0
    %2406 = vmatpush1.msra.mxu0 0.0
    %2407 = vmatprep.subr.mxu0 0.0
    %2408 = vmatpush1.msra.mxu0 0.0
    %2409 = vmatprep.subr.mxu0 0.0
    %2410 = vmatpush1.msra.mxu0 0.0
    %2411 = vmatprep.subr.mxu0 0.0
    %2412 = vmatpush1.msra.mxu0 0.0
    %2413 = vmatprep.subr.mxu0 0.0
    %2414 = vmatpush1.msra.mxu0 0.0
    %2415 = vmatprep.subr.mxu0 0.0
    %2416 = vmatpush1.msra.mxu0 0.0
    %2417 = vmatprep.subr.mxu0 0.0
    %2418 = vmatpush1.msra.mxu0 0.0
    %2419 = vmatprep.subr.mxu0 0.0
    %2420 = vmatpush1.msra.mxu0 0.0
    %2421 = vmatprep.subr.mxu0 0.0
    %2422 = vmatpush1.msra.mxu0 0.0
    %2423 = vmatprep.subr.mxu0 0.0
    %2424 = vmatpush1.msra.mxu0 0.0
    %2425 = vmatprep.subr.mxu0 0.0
    %2426 = vmatpush1.msra.mxu0 0.0
    %2427 = vmatprep.mubr.f32.mxu0 0.0
    %v2428 = vand.u32 %v1399, 4294901760
    %2429 = vmatmul.mubr.f32.gmra.mrb[0].mxu0 %v2428
    %v2430 = vpop.f32.mrb[0].mxu0
    %v2431 = vadd.f32 %v2192, %v2430
    %v2432 = vpop.f32.mrb[0].mxu0
    %2433 = vmatprep.mubr.f32.mxu0 0.0
    %v2434 = vand.u32 %v1400, 4294901760
    %2435 = vmatmul.mubr.f32.gmra.mrb[0].mxu0 %v2434
    %v2436 = vpop.f32.mrb[0].mxu0
    %v2437 = vadd.f32 %v2200, %v2436
    %v2438 = vpop.f32.mrb[0].mxu0
    %2439 = vmatprep.mubr.f32.mxu0 0.0
    %v2440 = vand.u32 %v1401, 4294901760
    %2441 = vmatmul.mubr.f32.gmra.mrb[0].mxu0 %v2440
    %v2442 = vpop.f32.mrb[0].mxu0
    %v2443 = vadd.f32 %v2208, %v2442
    %v2444 = vpop.f32.mrb[0].mxu0
    %2445 = vmatprep.mubr.f32.mxu0 0.0
    %v2446 = vand.u32 %v1402, 4294901760
    %2447 = vmatmul.mubr.f32.gmra.mrb[0].mxu0 %v2446
    %v2448 = vpop.f32.mrb[0].mxu0
    %v2449 = vadd.f32 %v2216, %v2448
    %v2450 = vpop.f32.mrb[0].mxu0
    %2451 = vmatprep.mubr.f32.mxu0 0.0
    %v2452 = vand.u32 %v1403, 4294901760
    %2453 = vmatmul.mubr.f32.gmra.mrb[0].mxu0 %v2452
    %v2454 = vpop.f32.mrb[0].mxu0
    %v2455 = vadd.f32 %v2224, %v2454
    %v2456 = vpop.f32.mrb[0].mxu0
    %2457 = vmatprep.mubr.f32.mxu0 0.0
    %v2458 = vand.u32 %v1404, 4294901760
    %2459 = vmatmul.mubr.f32.gmra.mrb[0].mxu0 %v2458
    %v2460 = vpop.f32.mrb[0].mxu0
    %v2461 = vadd.f32 %v2232, %v2460
    %v2462 = vpop.f32.mrb[0].mxu0
    %2463 = vmatprep.mubr.f32.mxu0 0.0
    %v2464 = vand.u32 %v1405, 4294901760
    %2465 = vmatmul.mubr.f32.gmra.mrb[0].mxu0 %v2464
    %v2466 = vpop.f32.mrb[0].mxu0
    %v2467 = vadd.f32 %v2240, %v2466
    %v2468 = vpop.f32.mrb[0].mxu0
    %2469 = vmatprep.mubr.f32.mxu0 0.0
    %v2470 = vand.u32 %v1406, 4294901760
    %2471 = vmatmul.mubr.f32.gmra.mrb[0].mxu0 %v2470
    %v2472 = vpop.f32.mrb[0].mxu0
    %v2473 = vadd.f32 %v2248, %v2472
    %v2474 = vpop.f32.mrb[0].mxu0
    %2475 = vmatprep.mubr.f32.mxu0 0.0
    %v2476 = vand.u32 %v1407, 4294901760
    %2477 = vmatmul.mubr.f32.gmra.mrb[0].mxu0 %v2476
    %v2478 = vpop.f32.mrb[0].mxu0
    %v2479 = vadd.f32 %v2256, %v2478
    %v2480 = vpop.f32.mrb[0].mxu0
    %2481 = vmatprep.mubr.f32.mxu0 0.0
    %v2482 = vand.u32 %v1408, 4294901760
    %2483 = vmatmul.mubr.f32.gmra.mrb[0].mxu0 %v2482
    %v2484 = vpop.f32.mrb[0].mxu0
    %v2485 = vadd.f32 %v2264, %v2484
    %v2486 = vpop.f32.mrb[0].mxu0
    %2487 = vmatprep.mubr.f32.mxu0 0.0
    %v2488 = vand.u32 %v1409, 4294901760
    %2489 = vmatmul.mubr.f32.gmra.mrb[0].mxu0 %v2488
    %v2490 = vpop.f32.mrb[0].mxu0
    %v2491 = vadd.f32 %v2272, %v2490
    %v2492 = vpop.f32.mrb[0].mxu0
    %2493 = vmatprep.mubr.f32.mxu0 0.0
    %v2494 = vand.u32 %v1410, 4294901760
    %2495 = vmatmul.mubr.f32.gmra.mrb[0].mxu0 %v2494
    %v2496 = vpop.f32.mrb[0].mxu0
    %v2497 = vadd.f32 %v2280, %v2496
    %v2498 = vpop.f32.mrb[0].mxu0
    %2499 = vmatprep.mubr.f32.mxu0 0.0
    %v2500 = vand.u32 %v1411, 4294901760
    %2501 = vmatmul.mubr.f32.gmra.mrb[0].mxu0 %v2500
    %v2502 = vpop.f32.mrb[0].mxu0
    %v2503 = vadd.f32 %v2288, %v2502
    %v2504 = vpop.f32.mrb[0].mxu0
    %2505 = vmatprep.mubr.f32.mxu0 0.0
    %v2506 = vand.u32 %v1412, 4294901760
    %2507 = vmatmul.mubr.f32.gmra.mrb[0].mxu0 %v2506
    %v2508 = vpop.f32.mrb[0].mxu0
    %v2509 = vadd.f32 %v2296, %v2508
    %v2510 = vpop.f32.mrb[0].mxu0
    %2511 = vmatprep.mubr.f32.mxu0 0.0
    %v2512 = vand.u32 %v1413, 4294901760
    %2513 = vmatmul.mubr.f32.gmra.mrb[0].mxu0 %v2512
    %v2514 = vpop.f32.mrb[0].mxu0
    %v2515 = vadd.f32 %v2304, %v2514
    %v2516 = vpop.f32.mrb[0].mxu0
    %2517 = vmatprep.mubr.f32.mxu0 0.0
    %v2518 = vand.u32 %v1414, 4294901760
    %2519 = vmatmul.mubr.f32.gmra.mrb[0].mxu0 %v2518
    %v2520 = vpop.f32.mrb[0].mxu0
    %v2521 = vadd.f32 %v2312, %v2520
    %v2522 = vpop.f32.mrb[0].mxu0
    %2523 = vdwg.mxu0
    %2524 = vmatprep.subr.mxu0 0.0
    %v2525 = vand.u32 %v81, 4294901760
    %2526 = vmatpush1.msra.mxu0 %v2525
    %2527 = vmatprep.subr.mxu0 0.0
    %v2528 = vand.u32 %v82, 4294901760
    %2529 = vmatpush1.msra.mxu0 %v2528
    %2530 = vmatprep.subr.mxu0 0.0
    %v2531 = vand.u32 %v83, 4294901760
    %2532 = vmatpush1.msra.mxu0 %v2531
    %2533 = vmatprep.subr.mxu0 0.0
    %v2534 = vand.u32 %v84, 4294901760
    %2535 = vmatpush1.msra.mxu0 %v2534
    %2536 = vmatprep.subr.mxu0 0.0
    %v2537 = vand.u32 %v85, 4294901760
    %2538 = vmatpush1.msra.mxu0 %v2537
    %2539 = vmatprep.subr.mxu0 0.0
    %v2540 = vand.u32 %v86, 4294901760
    %2541 = vmatpush1.msra.mxu0 %v2540
    %2542 = vmatprep.subr.mxu0 0.0
    %v2543 = vand.u32 %v87, 4294901760
    %2544 = vmatpush1.msra.mxu0 %v2543
    %2545 = vmatprep.subr.mxu0 0.0
    %v2546 = vand.u32 %v88, 4294901760
    %2547 = vmatpush1.msra.mxu0 %v2546
    %2548 = vmatprep.subr.mxu0 0.0
    %v2549 = vand.u32 %v89, 4294901760
    %2550 = vmatpush1.msra.mxu0 %v2549
    %2551 = vmatprep.subr.mxu0 0.0
    %v2552 = vand.u32 %v90, 4294901760
    %2553 = vmatpush1.msra.mxu0 %v2552
    %2554 = vmatprep.subr.mxu0 0.0
    %v2555 = vand.u32 %v91, 4294901760
    %2556 = vmatpush1.msra.mxu0 %v2555
    %2557 = vmatprep.subr.mxu0 0.0
    %v2558 = vand.u32 %v92, 4294901760
    %2559 = vmatpush1.msra.mxu0 %v2558
    %2560 = vmatprep.subr.mxu0 0.0
    %v2561 = vand.u32 %v93, 4294901760
    %2562 = vmatpush1.msra.mxu0 %v2561
    %2563 = vmatprep.subr.mxu0 0.0
    %v2564 = vand.u32 %v94, 4294901760
    %2565 = vmatpush1.msra.mxu0 %v2564
    %2566 = vmatprep.subr.mxu0 0.0
    %v2567 = vand.u32 %v95, 4294901760
    %2568 = vmatpush1.msra.mxu0 %v2567
    %2569 = vmatprep.subr.mxu0 0.0
    %v2570 = vand.u32 %v96, 4294901760
    %2571 = vmatpush1.msra.mxu0 %v2570
    %2572 = vmatprep.subr.mxu0 0.0
    %2573 = vmatpush1.msra.mxu0 0.0
    %2574 = vmatprep.subr.mxu0 0.0
    %2575 = vmatpush1.msra.mxu0 0.0
    %2576 = vmatprep.subr.mxu0 0.0
    %2577 = vmatpush1.msra.mxu0 0.0
    %2578 = vmatprep.subr.mxu0 0.0
    %2579 = vmatpush1.msra.mxu0 0.0
    %2580 = vmatprep.subr.mxu0 0.0
    %2581 = vmatpush1.msra.mxu0 0.0
    %2582 = vmatprep.subr.mxu0 0.0
    %2583 = vmatpush1.msra.mxu0 0.0
    %2584 = vmatprep.subr.mxu0 0.0
    %2585 = vmatpush1.msra.mxu0 0.0
    %2586 = vmatprep.subr.mxu0 0.0
    %2587 = vmatpush1.msra.mxu0 0.0
    %2588 = vmatprep.subr.mxu0 0.0
    %2589 = vmatpush1.msra.mxu0 0.0
    %2590 = vmatprep.subr.mxu0 0.0
    %2591 = vmatpush1.msra.mxu0 0.0
    %2592 = vmatprep.subr.mxu0 0.0
    %2593 = vmatpush1.msra.mxu0 0.0
    %2594 = vmatprep.subr.mxu0 0.0
    %2595 = vmatpush1.msra.mxu0 0.0
    %2596 = vmatprep.subr.mxu0 0.0
    %2597 = vmatpush1.msra.mxu0 0.0
    %2598 = vmatprep.subr.mxu0 0.0
    %2599 = vmatpush1.msra.mxu0 0.0
    %2600 = vmatprep.subr.mxu0 0.0
    %2601 = vmatpush1.msra.mxu0 0.0
    %2602 = vmatprep.subr.mxu0 0.0
    %2603 = vmatpush1.msra.mxu0 0.0
    %2604 = vmatprep.mubr.f32.mxu0 0.0
    %v2605 = vand.u32 %v1399, 4294901760
    %2606 = vmatmul.mubr.f32.gmra.mrb[0].mxu0 %v2605
    %v2607 = vpop.f32.mrb[0].mxu0
    %v2608 = vadd.f32 %v2431, %v2607
    %v2609 = vpop.f32.mrb[0].mxu0
    %2610 = vmatprep.mubr.f32.mxu0 0.0
    %v2611 = vand.u32 %v1400, 4294901760
    %2612 = vmatmul.mubr.f32.gmra.mrb[0].mxu0 %v2611
    %v2613 = vpop.f32.mrb[0].mxu0
    %v2614 = vadd.f32 %v2437, %v2613
    %v2615 = vpop.f32.mrb[0].mxu0
    %2616 = vmatprep.mubr.f32.mxu0 0.0
    %v2617 = vand.u32 %v1401, 4294901760
    %2618 = vmatmul.mubr.f32.gmra.mrb[0].mxu0 %v2617
    %v2619 = vpop.f32.mrb[0].mxu0
    %v2620 = vadd.f32 %v2443, %v2619
    %v2621 = vpop.f32.mrb[0].mxu0
    %2622 = vmatprep.mubr.f32.mxu0 0.0
    %v2623 = vand.u32 %v1402, 4294901760
    %2624 = vmatmul.mubr.f32.gmra.mrb[0].mxu0 %v2623
    %v2625 = vpop.f32.mrb[0].mxu0
    %v2626 = vadd.f32 %v2449, %v2625
    %v2627 = vpop.f32.mrb[0].mxu0
    %2628 = vmatprep.mubr.f32.mxu0 0.0
    %v2629 = vand.u32 %v1403, 4294901760
    %2630 = vmatmul.mubr.f32.gmra.mrb[0].mxu0 %v2629
    %v2631 = vpop.f32.mrb[0].mxu0
    %v2632 = vadd.f32 %v2455, %v2631
    %v2633 = vpop.f32.mrb[0].mxu0
    %2634 = vmatprep.mubr.f32.mxu0 0.0
    %v2635 = vand.u32 %v1404, 4294901760
    %2636 = vmatmul.mubr.f32.gmra.mrb[0].mxu0 %v2635
    %v2637 = vpop.f32.mrb[0].mxu0
    %v2638 = vadd.f32 %v2461, %v2637
    %v2639 = vpop.f32.mrb[0].mxu0
    %2640 = vmatprep.mubr.f32.mxu0 0.0
    %v2641 = vand.u32 %v1405, 4294901760
    %2642 = vmatmul.mubr.f32.gmra.mrb[0].mxu0 %v2641
    %v2643 = vpop.f32.mrb[0].mxu0
    %v2644 = vadd.f32 %v2467, %v2643
    %v2645 = vpop.f32.mrb[0].mxu0
    %2646 = vmatprep.mubr.f32.mxu0 0.0
    %v2647 = vand.u32 %v1406, 4294901760
    %2648 = vmatmul.mubr.f32.gmra.mrb[0].mxu0 %v2647
    %v2649 = vpop.f32.mrb[0].mxu0
    %v2650 = vadd.f32 %v2473, %v2649
    %v2651 = vpop.f32.mrb[0].mxu0
    %2652 = vmatprep.mubr.f32.mxu0 0.0
    %v2653 = vand.u32 %v1407, 4294901760
    %2654 = vmatmul.mubr.f32.gmra.mrb[0].mxu0 %v2653
    %v2655 = vpop.f32.mrb[0].mxu0
    %v2656 = vadd.f32 %v2479, %v2655
    %v2657 = vpop.f32.mrb[0].mxu0
    %2658 = vmatprep.mubr.f32.mxu0 0.0
    %v2659 = vand.u32 %v1408, 4294901760
    %2660 = vmatmul.mubr.f32.gmra.mrb[0].mxu0 %v2659
    %v2661 = vpop.f32.mrb[0].mxu0
    %v2662 = vadd.f32 %v2485, %v2661
    %v2663 = vpop.f32.mrb[0].mxu0
    %2664 = vmatprep.mubr.f32.mxu0 0.0
    %v2665 = vand.u32 %v1409, 4294901760
    %2666 = vmatmul.mubr.f32.gmra.mrb[0].mxu0 %v2665
    %v2667 = vpop.f32.mrb[0].mxu0
    %v2668 = vadd.f32 %v2491, %v2667
    %v2669 = vpop.f32.mrb[0].mxu0
    %2670 = vmatprep.mubr.f32.mxu0 0.0
    %v2671 = vand.u32 %v1410, 4294901760
    %2672 = vmatmul.mubr.f32.gmra.mrb[0].mxu0 %v2671
    %v2673 = vpop.f32.mrb[0].mxu0
    %v2674 = vadd.f32 %v2497, %v2673
    %v2675 = vpop.f32.mrb[0].mxu0
    %2676 = vmatprep.mubr.f32.mxu0 0.0
    %v2677 = vand.u32 %v1411, 4294901760
    %2678 = vmatmul.mubr.f32.gmra.mrb[0].mxu0 %v2677
    %v2679 = vpop.f32.mrb[0].mxu0
    %v2680 = vadd.f32 %v2503, %v2679
    %v2681 = vpop.f32.mrb[0].mxu0
    %2682 = vmatprep.mubr.f32.mxu0 0.0
    %v2683 = vand.u32 %v1412, 4294901760
    %2684 = vmatmul.mubr.f32.gmra.mrb[0].mxu0 %v2683
    %v2685 = vpop.f32.mrb[0].mxu0
    %v2686 = vadd.f32 %v2509, %v2685
    %v2687 = vpop.f32.mrb[0].mxu0
    %2688 = vmatprep.mubr.f32.mxu0 0.0
    %v2689 = vand.u32 %v1413, 4294901760
    %2690 = vmatmul.mubr.f32.gmra.mrb[0].mxu0 %v2689
    %v2691 = vpop.f32.mrb[0].mxu0
    %v2692 = vadd.f32 %v2515, %v2691
    %v2693 = vpop.f32.mrb[0].mxu0
    %2694 = vmatprep.mubr.f32.mxu0 0.0
    %v2695 = vand.u32 %v1414, 4294901760
    %2696 = vmatmul.mubr.f32.gmra.mrb[0].mxu0 %v2695
    %v2697 = vpop.f32.mrb[0].mxu0
    %v2698 = vadd.f32 %v2521, %v2697
    %v2699 = vpop.f32.mrb[0].mxu0
    %2700 = vdwg.mxu0
    %v2701 = vrsqrt.pop %v2608
    %v2702 = vrsqrt.pop %v2614
    %v2703 = vrsqrt.pop %v2620
    %v2704 = vrsqrt.pop %v2626
    %v2705 = vrsqrt.pop %v2632
    %v2706 = vrsqrt.pop %v2638
    %v2707 = vrsqrt.pop %v2644
    %v2708 = vrsqrt.pop %v2650
    %v2709 = vrsqrt.pop %v2656
    %v2710 = vrsqrt.pop %v2662
    %v2711 = vrsqrt.pop %v2668
    %v2712 = vrsqrt.pop %v2674
    %v2713 = vrsqrt.pop %v2680
    %v2714 = vrsqrt.pop %v2686
    %v2715 = vrsqrt.pop %v2692
    %v2716 = vrsqrt.pop %v2698
    %v2717 = vmul.f32 %v1383, %v2701
    %v2718 = vmul.f32 %v1384, %v2702
    %v2719 = vmul.f32 %v1385, %v2703
    %v2720 = vmul.f32 %v1386, %v2704
    %v2721 = vmul.f32 %v1387, %v2705
    %v2722 = vmul.f32 %v1388, %v2706
    %v2723 = vmul.f32 %v1389, %v2707
    %v2724 = vmul.f32 %v1390, %v2708
    %v2725 = vmul.f32 %v1391, %v2709
    %v2726 = vmul.f32 %v1392, %v2710
    %v2727 = vmul.f32 %v1393, %v2711
    %v2728 = vmul.f32 %v1394, %v2712
    %v2729 = vmul.f32 %v1395, %v2713
    %v2730 = vmul.f32 %v1396, %v2714
    %v2731 = vmul.f32 %v1397, %v2715
    %v2732 = vmul.f32 %v1398, %v2716
    %v2733 = vld [vmem:[%s2] sm:$0x1]
    %v2735 = vlaneseq
    %v2736 = vshrl.u32 %v2735, 7
    %v2737 = vsub.s32 0, %v2736
    %v2738 = vrot.slane %v2733, %v2737
    %v2740 = vmul.f32 %v2717, %v2738
    %v2741 = vmul.f32 %v2718, %v2738
    %v2742 = vmul.f32 %v2719, %v2738
    %v2743 = vmul.f32 %v2720, %v2738
    %v2744 = vmul.f32 %v2721, %v2738
    %v2745 = vmul.f32 %v2722, %v2738
    %v2746 = vmul.f32 %v2723, %v2738
    %v2747 = vmul.f32 %v2724, %v2738
    %v2748 = vmul.f32 %v2725, %v2738
    %v2749 = vmul.f32 %v2726, %v2738
    %v2750 = vmul.f32 %v2727, %v2738
    %v2751 = vmul.f32 %v2728, %v2738
    %v2752 = vmul.f32 %v2729, %v2738
    %v2753 = vmul.f32 %v2730, %v2738
    %v2754 = vmul.f32 %v2731, %v2738
    %v2755 = vmul.f32 %v2732, %v2738
    %v2756 = vld [vmem:[%s3] sm:$0x1]
    %v2758 = vlaneseq
    %v2759 = vshrl.u32 %v2758, 7
    %v2760 = vsub.s32 0, %v2759
    %v2761 = vrot.slane %v2756, %v2760
    %v2763 = vadd.f32 %v2740, %v2761
    %v2764 = vadd.f32 %v2741, %v2761
    %v2765 = vadd.f32 %v2742, %v2761
    %v2766 = vadd.f32 %v2743, %v2761
    %v2767 = vadd.f32 %v2744, %v2761
    %v2768 = vadd.f32 %v2745, %v2761
    %v2769 = vadd.f32 %v2746, %v2761
    %v2770 = vadd.f32 %v2747, %v2761
    %v2771 = vadd.f32 %v2748, %v2761
    %v2772 = vadd.f32 %v2749, %v2761
    %v2773 = vadd.f32 %v2750, %v2761
    %v2774 = vadd.f32 %v2751, %v2761
    %v2775 = vadd.f32 %v2752, %v2761
    %v2776 = vadd.f32 %v2753, %v2761
    %v2777 = vadd.f32 %v2754, %v2761
    %v2778 = vadd.f32 %v2755, %v2761
    %v2779 = vld [vmem:[#allocation7] sm:$0xff]
    %v2780 = vld [vmem:[#allocation7 + $0x8] sm:$0xff]
    %v2781 = vld [vmem:[#allocation7 + $0x10] sm:$0xff]
    %v2782 = vld [vmem:[#allocation7 + $0x18] sm:$0xff]
    %v2783 = vld [vmem:[#allocation7 + $0x20] sm:$0xff]
    %v2784 = vld [vmem:[#allocation7 + $0x28] sm:$0xff]
    %v2785 = vld [vmem:[#allocation7 + $0x30] sm:$0xff]
    %v2786 = vld [vmem:[#allocation7 + $0x38] sm:$0xff]
    %v2787 = vld [vmem:[#allocation7 + $0x40] sm:$0xff]
    %v2788 = vld [vmem:[#allocation7 + $0x48] sm:$0xff]
    %v2789 = vld [vmem:[#allocation7 + $0x50] sm:$0xff]
    %v2790 = vld [vmem:[#allocation7 + $0x58] sm:$0xff]
    %v2791 = vld [vmem:[#allocation7 + $0x60] sm:$0xff]
    %v2792 = vld [vmem:[#allocation7 + $0x68] sm:$0xff]
    %v2793 = vld [vmem:[#allocation7 + $0x70] sm:$0xff]
    %v2794 = vld [vmem:[#allocation7 + $0x78] sm:$0xff]
    %v2795 = vld [vmem:[%s5] sm:$0x1]
    %v2797 = vlaneseq
    %v2798 = vshrl.u32 %v2797, 7
    %v2799 = vsub.s32 0, %v2798
    %v2800 = vrot.slane %v2795, %v2799
    %2802 = vmatprep.subr.mxu0 0.0
    %v2803 = vand.u32 %v2779, 4294901760
    %2804 = vmatpush1.msra.mxu0 %v2803
    %2805 = vmatprep.subr.mxu0 0.0
    %v2806 = vand.u32 %v2780, 4294901760
    %2807 = vmatpush1.msra.mxu0 %v2806
    %2808 = vmatprep.subr.mxu0 0.0
    %v2809 = vand.u32 %v2781, 4294901760
    %2810 = vmatpush1.msra.mxu0 %v2809
    %2811 = vmatprep.subr.mxu0 0.0
    %v2812 = vand.u32 %v2782, 4294901760
    %2813 = vmatpush1.msra.mxu0 %v2812
    %2814 = vmatprep.subr.mxu0 0.0
    %v2815 = vand.u32 %v2783, 4294901760
    %2816 = vmatpush1.msra.mxu0 %v2815
    %2817 = vmatprep.subr.mxu0 0.0
    %v2818 = vand.u32 %v2784, 4294901760
    %2819 = vmatpush1.msra.mxu0 %v2818
    %2820 = vmatprep.subr.mxu0 0.0
    %v2821 = vand.u32 %v2785, 4294901760
    %2822 = vmatpush1.msra.mxu0 %v2821
    %2823 = vmatprep.subr.mxu0 0.0
    %v2824 = vand.u32 %v2786, 4294901760
    %2825 = vmatpush1.msra.mxu0 %v2824
    %2826 = vmatprep.subr.mxu0 0.0
    %v2827 = vand.u32 %v2787, 4294901760
    %2828 = vmatpush1.msra.mxu0 %v2827
    %2829 = vmatprep.subr.mxu0 0.0
    %v2830 = vand.u32 %v2788, 4294901760
    %2831 = vmatpush1.msra.mxu0 %v2830
    %2832 = vmatprep.subr.mxu0 0.0
    %v2833 = vand.u32 %v2789, 4294901760
    %2834 = vmatpush1.msra.mxu0 %v2833
    %2835 = vmatprep.subr.mxu0 0.0
    %v2836 = vand.u32 %v2790, 4294901760
    %2837 = vmatpush1.msra.mxu0 %v2836
    %2838 = vmatprep.subr.mxu0 0.0
    %v2839 = vand.u32 %v2791, 4294901760
    %2840 = vmatpush1.msra.mxu0 %v2839
    %2841 = vmatprep.subr.mxu0 0.0
    %v2842 = vand.u32 %v2792, 4294901760
    %2843 = vmatpush1.msra.mxu0 %v2842
    %2844 = vmatprep.subr.mxu0 0.0
    %v2845 = vand.u32 %v2793, 4294901760
    %2846 = vmatpush1.msra.mxu0 %v2845
    %2847 = vmatprep.subr.mxu0 0.0
    %v2848 = vand.u32 %v2794, 4294901760
    %2849 = vmatpush1.msra.mxu0 %v2848
    %2850 = vmatprep.subr.mxu0 0.0
    %2851 = vmatpush1.msra.mxu0 0.0
    %2852 = vmatprep.subr.mxu0 0.0
    %2853 = vmatpush1.msra.mxu0 0.0
    %2854 = vmatprep.subr.mxu0 0.0
    %2855 = vmatpush1.msra.mxu0 0.0
    %2856 = vmatprep.subr.mxu0 0.0
    %2857 = vmatpush1.msra.mxu0 0.0
    %2858 = vmatprep.subr.mxu0 0.0
    %2859 = vmatpush1.msra.mxu0 0.0
    %2860 = vmatprep.subr.mxu0 0.0
    %2861 = vmatpush1.msra.mxu0 0.0
    %2862 = vmatprep.subr.mxu0 0.0
    %2863 = vmatpush1.msra.mxu0 0.0
    %2864 = vmatprep.subr.mxu0 0.0
    %2865 = vmatpush1.msra.mxu0 0.0
    %2866 = vmatprep.subr.mxu0 0.0
    %2867 = vmatpush1.msra.mxu0 0.0
    %2868 = vmatprep.subr.mxu0 0.0
    %2869 = vmatpush1.msra.mxu0 0.0
    %2870 = vmatprep.subr.mxu0 0.0
    %2871 = vmatpush1.msra.mxu0 0.0
    %2872 = vmatprep.subr.mxu0 0.0
    %2873 = vmatpush1.msra.mxu0 0.0
    %2874 = vmatprep.subr.mxu0 0.0
    %2875 = vmatpush1.msra.mxu0 0.0
    %2876 = vmatprep.subr.mxu0 0.0
    %2877 = vmatpush1.msra.mxu0 0.0
    %2878 = vmatprep.subr.mxu0 0.0
    %2879 = vmatpush1.msra.mxu0 0.0
    %2880 = vmatprep.subr.mxu0 0.0
    %2881 = vmatpush1.msra.mxu0 0.0
    %2882 = vmatprep.mubr.f32.mxu0 0.0
    %v2883 = vand.u32 %v2763, 4294901760
    %v2884 = vsub.f32 %v2763, %v2883
    %v2885 = vand.u32 %v2884, 4294901760
    %v2886 = vsub.f32 %v2884, %v2885
    %v2887 = vand.u32 %v2886, 4294901760
    %2888 = vmatmul.mubr.f32.gmra.mrb[0].mxu0 %v2887
    %v2889 = vpop.f32.mrb[0].mxu0
    %v2890 = vadd.f32 %v2800, %v2889
    %v2891 = vpop.f32.mrb[0].mxu0
    %2892 = vmatprep.mubr.f32.mxu0 0.0
    %v2893 = vand.u32 %v2764, 4294901760
    %v2894 = vsub.f32 %v2764, %v2893
    %v2895 = vand.u32 %v2894, 4294901760
    %v2896 = vsub.f32 %v2894, %v2895
    %v2897 = vand.u32 %v2896, 4294901760
    %2898 = vmatmul.mubr.f32.gmra.mrb[0].mxu0 %v2897
    %v2899 = vpop.f32.mrb[0].mxu0
    %v2900 = vadd.f32 %v2800, %v2899
    %v2901 = vpop.f32.mrb[0].mxu0
    %2902 = vmatprep.mubr.f32.mxu0 0.0
    %v2903 = vand.u32 %v2765, 4294901760
    %v2904 = vsub.f32 %v2765, %v2903
    %v2905 = vand.u32 %v2904, 4294901760
    %v2906 = vsub.f32 %v2904, %v2905
    %v2907 = vand.u32 %v2906, 4294901760
    %2908 = vmatmul.mubr.f32.gmra.mrb[0].mxu0 %v2907
    %v2909 = vpop.f32.mrb[0].mxu0
    %v2910 = vadd.f32 %v2800, %v2909
    %v2911 = vpop.f32.mrb[0].mxu0
    %2912 = vmatprep.mubr.f32.mxu0 0.0
    %v2913 = vand.u32 %v2766, 4294901760
    %v2914 = vsub.f32 %v2766, %v2913
    %v2915 = vand.u32 %v2914, 4294901760
    %v2916 = vsub.f32 %v2914, %v2915
    %v2917 = vand.u32 %v2916, 4294901760
    %2918 = vmatmul.mubr.f32.gmra.mrb[0].mxu0 %v2917
    %v2919 = vpop.f32.mrb[0].mxu0
    %v2920 = vadd.f32 %v2800, %v2919
    %v2921 = vpop.f32.mrb[0].mxu0
    %2922 = vmatprep.mubr.f32.mxu0 0.0
    %v2923 = vand.u32 %v2767, 4294901760
    %v2924 = vsub.f32 %v2767, %v2923
    %v2925 = vand.u32 %v2924, 4294901760
    %v2926 = vsub.f32 %v2924, %v2925
    %v2927 = vand.u32 %v2926, 4294901760
    %2928 = vmatmul.mubr.f32.gmra.mrb[0].mxu0 %v2927
    %v2929 = vpop.f32.mrb[0].mxu0
    %v2930 = vadd.f32 %v2800, %v2929
    %v2931 = vpop.f32.mrb[0].mxu0
    %2932 = vmatprep.mubr.f32.mxu0 0.0
    %v2933 = vand.u32 %v2768, 4294901760
    %v2934 = vsub.f32 %v2768, %v2933
    %v2935 = vand.u32 %v2934, 4294901760
    %v2936 = vsub.f32 %v2934, %v2935
    %v2937 = vand.u32 %v2936, 4294901760
    %2938 = vmatmul.mubr.f32.gmra.mrb[0].mxu0 %v2937
    %v2939 = vpop.f32.mrb[0].mxu0
    %v2940 = vadd.f32 %v2800, %v2939
    %v2941 = vpop.f32.mrb[0].mxu0
    %2942 = vmatprep.mubr.f32.mxu0 0.0
    %v2943 = vand.u32 %v2769, 4294901760
    %v2944 = vsub.f32 %v2769, %v2943
    %v2945 = vand.u32 %v2944, 4294901760
    %v2946 = vsub.f32 %v2944, %v2945
    %v2947 = vand.u32 %v2946, 4294901760
    %2948 = vmatmul.mubr.f32.gmra.mrb[0].mxu0 %v2947
    %v2949 = vpop.f32.mrb[0].mxu0
    %v2950 = vadd.f32 %v2800, %v2949
    %v2951 = vpop.f32.mrb[0].mxu0
    %2952 = vmatprep.mubr.f32.mxu0 0.0
    %v2953 = vand.u32 %v2770, 4294901760
    %v2954 = vsub.f32 %v2770, %v2953
    %v2955 = vand.u32 %v2954, 4294901760
    %v2956 = vsub.f32 %v2954, %v2955
    %v2957 = vand.u32 %v2956, 4294901760
    %2958 = vmatmul.mubr.f32.gmra.mrb[0].mxu0 %v2957
    %v2959 = vpop.f32.mrb[0].mxu0
    %v2960 = vadd.f32 %v2800, %v2959
    %v2961 = vpop.f32.mrb[0].mxu0
    %2962 = vmatprep.mubr.f32.mxu0 0.0
    %v2963 = vand.u32 %v2771, 4294901760
    %v2964 = vsub.f32 %v2771, %v2963
    %v2965 = vand.u32 %v2964, 4294901760
    %v2966 = vsub.f32 %v2964, %v2965
    %v2967 = vand.u32 %v2966, 4294901760
    %2968 = vmatmul.mubr.f32.gmra.mrb[0].mxu0 %v2967
    %v2969 = vpop.f32.mrb[0].mxu0
    %v2970 = vadd.f32 %v2800, %v2969
    %v2971 = vpop.f32.mrb[0].mxu0
    %2972 = vmatprep.mubr.f32.mxu0 0.0
    %v2973 = vand.u32 %v2772, 4294901760
    %v2974 = vsub.f32 %v2772, %v2973
    %v2975 = vand.u32 %v2974, 4294901760
    %v2976 = vsub.f32 %v2974, %v2975
    %v2977 = vand.u32 %v2976, 4294901760
    %2978 = vmatmul.mubr.f32.gmra.mrb[0].mxu0 %v2977
    %v2979 = vpop.f32.mrb[0].mxu0
    %v2980 = vadd.f32 %v2800, %v2979
    %v2981 = vpop.f32.mrb[0].mxu0
    %2982 = vmatprep.mubr.f32.mxu0 0.0
    %v2983 = vand.u32 %v2773, 4294901760
    %v2984 = vsub.f32 %v2773, %v2983
    %v2985 = vand.u32 %v2984, 4294901760
    %v2986 = vsub.f32 %v2984, %v2985
    %v2987 = vand.u32 %v2986, 4294901760
    %2988 = vmatmul.mubr.f32.gmra.mrb[0].mxu0 %v2987
    %v2989 = vpop.f32.mrb[0].mxu0
    %v2990 = vadd.f32 %v2800, %v2989
    %v2991 = vpop.f32.mrb[0].mxu0
    %2992 = vmatprep.mubr.f32.mxu0 0.0
    %v2993 = vand.u32 %v2774, 4294901760
    %v2994 = vsub.f32 %v2774, %v2993
    %v2995 = vand.u32 %v2994, 4294901760
    %v2996 = vsub.f32 %v2994, %v2995
    %v2997 = vand.u32 %v2996, 4294901760
    %2998 = vmatmul.mubr.f32.gmra.mrb[0].mxu0 %v2997
    %v2999 = vpop.f32.mrb[0].mxu0
    %v3000 = vadd.f32 %v2800, %v2999
    %v3001 = vpop.f32.mrb[0].mxu0
    %3002 = vmatprep.mubr.f32.mxu0 0.0
    %v3003 = vand.u32 %v2775, 4294901760
    %v3004 = vsub.f32 %v2775, %v3003
    %v3005 = vand.u32 %v3004, 4294901760
    %v3006 = vsub.f32 %v3004, %v3005
    %v3007 = vand.u32 %v3006, 4294901760
    %3008 = vmatmul.mubr.f32.gmra.mrb[0].mxu0 %v3007
    %v3009 = vpop.f32.mrb[0].mxu0
    %v3010 = vadd.f32 %v2800, %v3009
    %v3011 = vpop.f32.mrb[0].mxu0
    %3012 = vmatprep.mubr.f32.mxu0 0.0
    %v3013 = vand.u32 %v2776, 4294901760
    %v3014 = vsub.f32 %v2776, %v3013
    %v3015 = vand.u32 %v3014, 4294901760
    %v3016 = vsub.f32 %v3014, %v3015
    %v3017 = vand.u32 %v3016, 4294901760
    %3018 = vmatmul.mubr.f32.gmra.mrb[0].mxu0 %v3017
    %v3019 = vpop.f32.mrb[0].mxu0
    %v3020 = vadd.f32 %v2800, %v3019
    %v3021 = vpop.f32.mrb[0].mxu0
    %3022 = vmatprep.mubr.f32.mxu0 0.0
    %v3023 = vand.u32 %v2777, 4294901760
    %v3024 = vsub.f32 %v2777, %v3023
    %v3025 = vand.u32 %v3024, 4294901760
    %v3026 = vsub.f32 %v3024, %v3025
    %v3027 = vand.u32 %v3026, 4294901760
    %3028 = vmatmul.mubr.f32.gmra.mrb[0].mxu0 %v3027
    %v3029 = vpop.f32.mrb[0].mxu0
    %v3030 = vadd.f32 %v2800, %v3029
    %v3031 = vpop.f32.mrb[0].mxu0
    %3032 = vmatprep.mubr.f32.mxu0 0.0
    %v3033 = vand.u32 %v2778, 4294901760
    %v3034 = vsub.f32 %v2778, %v3033
    %v3035 = vand.u32 %v3034, 4294901760
    %v3036 = vsub.f32 %v3034, %v3035
    %v3037 = vand.u32 %v3036, 4294901760
    %3038 = vmatmul.mubr.f32.gmra.mrb[0].mxu0 %v3037
    %v3039 = vpop.f32.mrb[0].mxu0
    %v3040 = vadd.f32 %v2800, %v3039
    %v3041 = vpop.f32.mrb[0].mxu0
    %3042 = vdwg.mxu0
    %3043 = vmatprep.subr.mxu0 0.0
    %v3044 = vand.u32 %v2779, 4294901760
    %v3045 = vsub.f32 %v2779, %v3044
    %v3046 = vand.u32 %v3045, 4294901760
    %v3047 = vsub.f32 %v3045, %v3046
    %v3048 = vand.u32 %v3047, 4294901760
    %3049 = vmatpush1.msra.mxu0 %v3048
    %3050 = vmatprep.subr.mxu0 0.0
    %v3051 = vand.u32 %v2780, 4294901760
    %v3052 = vsub.f32 %v2780, %v3051
    %v3053 = vand.u32 %v3052, 4294901760
    %v3054 = vsub.f32 %v3052, %v3053
    %v3055 = vand.u32 %v3054, 4294901760
    %3056 = vmatpush1.msra.mxu0 %v3055
    %3057 = vmatprep.subr.mxu0 0.0
    %v3058 = vand.u32 %v2781, 4294901760
    %v3059 = vsub.f32 %v2781, %v3058
    %v3060 = vand.u32 %v3059, 4294901760
    %v3061 = vsub.f32 %v3059, %v3060
    %v3062 = vand.u32 %v3061, 4294901760
    %3063 = vmatpush1.msra.mxu0 %v3062
    %3064 = vmatprep.subr.mxu0 0.0
    %v3065 = vand.u32 %v2782, 4294901760
    %v3066 = vsub.f32 %v2782, %v3065
    %v3067 = vand.u32 %v3066, 4294901760
    %v3068 = vsub.f32 %v3066, %v3067
    %v3069 = vand.u32 %v3068, 4294901760
    %3070 = vmatpush1.msra.mxu0 %v3069
    %3071 = vmatprep.subr.mxu0 0.0
    %v3072 = vand.u32 %v2783, 4294901760
    %v3073 = vsub.f32 %v2783, %v3072
    %v3074 = vand.u32 %v3073, 4294901760
    %v3075 = vsub.f32 %v3073, %v3074
    %v3076 = vand.u32 %v3075, 4294901760
    %3077 = vmatpush1.msra.mxu0 %v3076
    %3078 = vmatprep.subr.mxu0 0.0
    %v3079 = vand.u32 %v2784, 4294901760
    %v3080 = vsub.f32 %v2784, %v3079
    %v3081 = vand.u32 %v3080, 4294901760
    %v3082 = vsub.f32 %v3080, %v3081
    %v3083 = vand.u32 %v3082, 4294901760
    %3084 = vmatpush1.msra.mxu0 %v3083
    %3085 = vmatprep.subr.mxu0 0.0
    %v3086 = vand.u32 %v2785, 4294901760
    %v3087 = vsub.f32 %v2785, %v3086
    %v3088 = vand.u32 %v3087, 4294901760
    %v3089 = vsub.f32 %v3087, %v3088
    %v3090 = vand.u32 %v3089, 4294901760
    %3091 = vmatpush1.msra.mxu0 %v3090
    %3092 = vmatprep.subr.mxu0 0.0
    %v3093 = vand.u32 %v2786, 4294901760
    %v3094 = vsub.f32 %v2786, %v3093
    %v3095 = vand.u32 %v3094, 4294901760
    %v3096 = vsub.f32 %v3094, %v3095
    %v3097 = vand.u32 %v3096, 4294901760
    %3098 = vmatpush1.msra.mxu0 %v3097
    %3099 = vmatprep.subr.mxu0 0.0
    %v3100 = vand.u32 %v2787, 4294901760
    %v3101 = vsub.f32 %v2787, %v3100
    %v3102 = vand.u32 %v3101, 4294901760
    %v3103 = vsub.f32 %v3101, %v3102
    %v3104 = vand.u32 %v3103, 4294901760
    %3105 = vmatpush1.msra.mxu0 %v3104
    %3106 = vmatprep.subr.mxu0 0.0
    %v3107 = vand.u32 %v2788, 4294901760
    %v3108 = vsub.f32 %v2788, %v3107
    %v3109 = vand.u32 %v3108, 4294901760
    %v3110 = vsub.f32 %v3108, %v3109
    %v3111 = vand.u32 %v3110, 4294901760
    %3112 = vmatpush1.msra.mxu0 %v3111
    %3113 = vmatprep.subr.mxu0 0.0
    %v3114 = vand.u32 %v2789, 4294901760
    %v3115 = vsub.f32 %v2789, %v3114
    %v3116 = vand.u32 %v3115, 4294901760
    %v3117 = vsub.f32 %v3115, %v3116
    %v3118 = vand.u32 %v3117, 4294901760
    %3119 = vmatpush1.msra.mxu0 %v3118
    %3120 = vmatprep.subr.mxu0 0.0
    %v3121 = vand.u32 %v2790, 4294901760
    %v3122 = vsub.f32 %v2790, %v3121
    %v3123 = vand.u32 %v3122, 4294901760
    %v3124 = vsub.f32 %v3122, %v3123
    %v3125 = vand.u32 %v3124, 4294901760
    %3126 = vmatpush1.msra.mxu0 %v3125
    %3127 = vmatprep.subr.mxu0 0.0
    %v3128 = vand.u32 %v2791, 4294901760
    %v3129 = vsub.f32 %v2791, %v3128
    %v3130 = vand.u32 %v3129, 4294901760
    %v3131 = vsub.f32 %v3129, %v3130
    %v3132 = vand.u32 %v3131, 4294901760
    %3133 = vmatpush1.msra.mxu0 %v3132
    %3134 = vmatprep.subr.mxu0 0.0
    %v3135 = vand.u32 %v2792, 4294901760
    %v3136 = vsub.f32 %v2792, %v3135
    %v3137 = vand.u32 %v3136, 4294901760
    %v3138 = vsub.f32 %v3136, %v3137
    %v3139 = vand.u32 %v3138, 4294901760
    %3140 = vmatpush1.msra.mxu0 %v3139
    %3141 = vmatprep.subr.mxu0 0.0
    %v3142 = vand.u32 %v2793, 4294901760
    %v3143 = vsub.f32 %v2793, %v3142
    %v3144 = vand.u32 %v3143, 4294901760
    %v3145 = vsub.f32 %v3143, %v3144
    %v3146 = vand.u32 %v3145, 4294901760
    %3147 = vmatpush1.msra.mxu0 %v3146
    %3148 = vmatprep.subr.mxu0 0.0
    %v3149 = vand.u32 %v2794, 4294901760
    %v3150 = vsub.f32 %v2794, %v3149
    %v3151 = vand.u32 %v3150, 4294901760
    %v3152 = vsub.f32 %v3150, %v3151
    %v3153 = vand.u32 %v3152, 4294901760
    %3154 = vmatpush1.msra.mxu0 %v3153
    %3155 = vmatprep.subr.mxu0 0.0
    %3156 = vmatpush1.msra.mxu0 0.0
    %3157 = vmatprep.subr.mxu0 0.0
    %3158 = vmatpush1.msra.mxu0 0.0
    %3159 = vmatprep.subr.mxu0 0.0
    %3160 = vmatpush1.msra.mxu0 0.0
    %3161 = vmatprep.subr.mxu0 0.0
    %3162 = vmatpush1.msra.mxu0 0.0
    %3163 = vmatprep.subr.mxu0 0.0
    %3164 = vmatpush1.msra.mxu0 0.0
    %3165 = vmatprep.subr.mxu0 0.0
    %3166 = vmatpush1.msra.mxu0 0.0
    %3167 = vmatprep.subr.mxu0 0.0
    %3168 = vmatpush1.msra.mxu0 0.0
    %3169 = vmatprep.subr.mxu0 0.0
    %3170 = vmatpush1.msra.mxu0 0.0
    %3171 = vmatprep.subr.mxu0 0.0
    %3172 = vmatpush1.msra.mxu0 0.0
    %3173 = vmatprep.subr.mxu0 0.0
    %3174 = vmatpush1.msra.mxu0 0.0
    %3175 = vmatprep.subr.mxu0 0.0
    %3176 = vmatpush1.msra.mxu0 0.0
    %3177 = vmatprep.subr.mxu0 0.0
    %3178 = vmatpush1.msra.mxu0 0.0
    %3179 = vmatprep.subr.mxu0 0.0
    %3180 = vmatpush1.msra.mxu0 0.0
    %3181 = vmatprep.subr.mxu0 0.0
    %3182 = vmatpush1.msra.mxu0 0.0
    %3183 = vmatprep.subr.mxu0 0.0
    %3184 = vmatpush1.msra.mxu0 0.0
    %3185 = vmatprep.subr.mxu0 0.0
    %3186 = vmatpush1.msra.mxu0 0.0
    %3187 = vmatprep.mubr.f32.mxu0 0.0
    %v3188 = vand.u32 %v2763, 4294901760
    %3189 = vmatmul.mubr.f32.gmra.mrb[0].mxu0 %v3188
    %v3190 = vpop.f32.mrb[0].mxu0
    %v3191 = vadd.f32 %v2890, %v3190
    %v3192 = vpop.f32.mrb[0].mxu0
    %3193 = vmatprep.mubr.f32.mxu0 0.0
    %v3194 = vand.u32 %v2764, 4294901760
    %3195 = vmatmul.mubr.f32.gmra.mrb[0].mxu0 %v3194
    %v3196 = vpop.f32.mrb[0].mxu0
    %v3197 = vadd.f32 %v2900, %v3196
    %v3198 = vpop.f32.mrb[0].mxu0
    %3199 = vmatprep.mubr.f32.mxu0 0.0
    %v3200 = vand.u32 %v2765, 4294901760
    %3201 = vmatmul.mubr.f32.gmra.mrb[0].mxu0 %v3200
    %v3202 = vpop.f32.mrb[0].mxu0
    %v3203 = vadd.f32 %v2910, %v3202
    %v3204 = vpop.f32.mrb[0].mxu0
    %3205 = vmatprep.mubr.f32.mxu0 0.0
    %v3206 = vand.u32 %v2766, 4294901760
    %3207 = vmatmul.mubr.f32.gmra.mrb[0].mxu0 %v3206
    %v3208 = vpop.f32.mrb[0].mxu0
    %v3209 = vadd.f32 %v2920, %v3208
    %v3210 = vpop.f32.mrb[0].mxu0
    %3211 = vmatprep.mubr.f32.mxu0 0.0
    %v3212 = vand.u32 %v2767, 4294901760
    %3213 = vmatmul.mubr.f32.gmra.mrb[0].mxu0 %v3212
    %v3214 = vpop.f32.mrb[0].mxu0
    %v3215 = vadd.f32 %v2930, %v3214
    %v3216 = vpop.f32.mrb[0].mxu0
    %3217 = vmatprep.mubr.f32.mxu0 0.0
    %v3218 = vand.u32 %v2768, 4294901760
    %3219 = vmatmul.mubr.f32.gmra.mrb[0].mxu0 %v3218
    %v3220 = vpop.f32.mrb[0].mxu0
    %v3221 = vadd.f32 %v2940, %v3220
    %v3222 = vpop.f32.mrb[0].mxu0
    %3223 = vmatprep.mubr.f32.mxu0 0.0
    %v3224 = vand.u32 %v2769, 4294901760
    %3225 = vmatmul.mubr.f32.gmra.mrb[0].mxu0 %v3224
    %v3226 = vpop.f32.mrb[0].mxu0
    %v3227 = vadd.f32 %v2950, %v3226
    %v3228 = vpop.f32.mrb[0].mxu0
    %3229 = vmatprep.mubr.f32.mxu0 0.0
    %v3230 = vand.u32 %v2770, 4294901760
    %3231 = vmatmul.mubr.f32.gmra.mrb[0].mxu0 %v3230
    %v3232 = vpop.f32.mrb[0].mxu0
    %v3233 = vadd.f32 %v2960, %v3232
    %v3234 = vpop.f32.mrb[0].mxu0
    %3235 = vmatprep.mubr.f32.mxu0 0.0
    %v3236 = vand.u32 %v2771, 4294901760
    %3237 = vmatmul.mubr.f32.gmra.mrb[0].mxu0 %v3236
    %v3238 = vpop.f32.mrb[0].mxu0
    %v3239 = vadd.f32 %v2970, %v3238
    %v3240 = vpop.f32.mrb[0].mxu0
    %3241 = vmatprep.mubr.f32.mxu0 0.0
    %v3242 = vand.u32 %v2772, 4294901760
    %3243 = vmatmul.mubr.f32.gmra.mrb[0].mxu0 %v3242
    %v3244 = vpop.f32.mrb[0].mxu0
    %v3245 = vadd.f32 %v2980, %v3244
    %v3246 = vpop.f32.mrb[0].mxu0
    %3247 = vmatprep.mubr.f32.mxu0 0.0
    %v3248 = vand.u32 %v2773, 4294901760
    %3249 = vmatmul.mubr.f32.gmra.mrb[0].mxu0 %v3248
    %v3250 = vpop.f32.mrb[0].mxu0
    %v3251 = vadd.f32 %v2990, %v3250
    %v3252 = vpop.f32.mrb[0].mxu0
    %3253 = vmatprep.mubr.f32.mxu0 0.0
    %v3254 = vand.u32 %v2774, 4294901760
    %3255 = vmatmul.mubr.f32.gmra.mrb[0].mxu0 %v3254
    %v3256 = vpop.f32.mrb[0].mxu0
    %v3257 = vadd.f32 %v3000, %v3256
    %v3258 = vpop.f32.mrb[0].mxu0
    %3259 = vmatprep.mubr.f32.mxu0 0.0
    %v3260 = vand.u32 %v2775, 4294901760
    %3261 = vmatmul.mubr.f32.gmra.mrb[0].mxu0 %v3260
    %v3262 = vpop.f32.mrb[0].mxu0
    %v3263 = vadd.f32 %v3010, %v3262
    %v3264 = vpop.f32.mrb[0].mxu0
    %3265 = vmatprep.mubr.f32.mxu0 0.0
    %v3266 = vand.u32 %v2776, 4294901760
    %3267 = vmatmul.mubr.f32.gmra.mrb[0].mxu0 %v3266
    %v3268 = vpop.f32.mrb[0].mxu0
    %v3269 = vadd.f32 %v3020, %v3268
    %v3270 = vpop.f32.mrb[0].mxu0
    %3271 = vmatprep.mubr.f32.mxu0 0.0
    %v3272 = vand.u32 %v2777, 4294901760
    %3273 = vmatmul.mubr.f32.gmra.mrb[0].mxu0 %v3272
    %v3274 = vpop.f32.mrb[0].mxu0
    %v3275 = vadd.f32 %v3030, %v3274
    %v3276 = vpop.f32.mrb[0].mxu0
    %3277 = vmatprep.mubr.f32.mxu0 0.0
    %v3278 = vand.u32 %v2778, 4294901760
    %3279 = vmatmul.mubr.f32.gmra.mrb[0].mxu0 %v3278
    %v3280 = vpop.f32.mrb[0].mxu0
    %v3281 = vadd.f32 %v3040, %v3280
    %v3282 = vpop.f32.mrb[0].mxu0
    %3283 = vdwg.mxu0
    %3284 = vmatprep.subr.mxu0 0.0
    %v3285 = vand.u32 %v2779, 4294901760
    %v3286 = vsub.f32 %v2779, %v3285
    %3287 = vmatpush1.msra.mxu0 %v3286
    %3288 = vmatprep.subr.mxu0 0.0
    %v3289 = vand.u32 %v2780, 4294901760
    %v3290 = vsub.f32 %v2780, %v3289
    %3291 = vmatpush1.msra.mxu0 %v3290
    %3292 = vmatprep.subr.mxu0 0.0
    %v3293 = vand.u32 %v2781, 4294901760
    %v3294 = vsub.f32 %v2781, %v3293
    %3295 = vmatpush1.msra.mxu0 %v3294
    %3296 = vmatprep.subr.mxu0 0.0
    %v3297 = vand.u32 %v2782, 4294901760
    %v3298 = vsub.f32 %v2782, %v3297
    %3299 = vmatpush1.msra.mxu0 %v3298
    %3300 = vmatprep.subr.mxu0 0.0
    %v3301 = vand.u32 %v2783, 4294901760
    %v3302 = vsub.f32 %v2783, %v3301
    %3303 = vmatpush1.msra.mxu0 %v3302
    %3304 = vmatprep.subr.mxu0 0.0
    %v3305 = vand.u32 %v2784, 4294901760
    %v3306 = vsub.f32 %v2784, %v3305
    %3307 = vmatpush1.msra.mxu0 %v3306
    %3308 = vmatprep.subr.mxu0 0.0
    %v3309 = vand.u32 %v2785, 4294901760
    %v3310 = vsub.f32 %v2785, %v3309
    %3311 = vmatpush1.msra.mxu0 %v3310
    %3312 = vmatprep.subr.mxu0 0.0
    %v3313 = vand.u32 %v2786, 4294901760
    %v3314 = vsub.f32 %v2786, %v3313
    %3315 = vmatpush1.msra.mxu0 %v3314
    %3316 = vmatprep.subr.mxu0 0.0
    %v3317 = vand.u32 %v2787, 4294901760
    %v3318 = vsub.f32 %v2787, %v3317
    %3319 = vmatpush1.msra.mxu0 %v3318
    %3320 = vmatprep.subr.mxu0 0.0
    %v3321 = vand.u32 %v2788, 4294901760
    %v3322 = vsub.f32 %v2788, %v3321
    %3323 = vmatpush1.msra.mxu0 %v3322
    %3324 = vmatprep.subr.mxu0 0.0
    %v3325 = vand.u32 %v2789, 4294901760
    %v3326 = vsub.f32 %v2789, %v3325
    %3327 = vmatpush1.msra.mxu0 %v3326
    %3328 = vmatprep.subr.mxu0 0.0
    %v3329 = vand.u32 %v2790, 4294901760
    %v3330 = vsub.f32 %v2790, %v3329
    %3331 = vmatpush1.msra.mxu0 %v3330
    %3332 = vmatprep.subr.mxu0 0.0
    %v3333 = vand.u32 %v2791, 4294901760
    %v3334 = vsub.f32 %v2791, %v3333
    %3335 = vmatpush1.msra.mxu0 %v3334
    %3336 = vmatprep.subr.mxu0 0.0
    %v3337 = vand.u32 %v2792, 4294901760
    %v3338 = vsub.f32 %v2792, %v3337
    %3339 = vmatpush1.msra.mxu0 %v3338
    %3340 = vmatprep.subr.mxu0 0.0
    %v3341 = vand.u32 %v2793, 4294901760
    %v3342 = vsub.f32 %v2793, %v3341
    %3343 = vmatpush1.msra.mxu0 %v3342
    %3344 = vmatprep.subr.mxu0 0.0
    %v3345 = vand.u32 %v2794, 4294901760
    %v3346 = vsub.f32 %v2794, %v3345
    %3347 = vmatpush1.msra.mxu0 %v3346
    %3348 = vmatprep.subr.mxu0 0.0
    %3349 = vmatpush1.msra.mxu0 0.0
    %3350 = vmatprep.subr.mxu0 0.0
    %3351 = vmatpush1.msra.mxu0 0.0
    %3352 = vmatprep.subr.mxu0 0.0
    %3353 = vmatpush1.msra.mxu0 0.0
    %3354 = vmatprep.subr.mxu0 0.0
    %3355 = vmatpush1.msra.mxu0 0.0
    %3356 = vmatprep.subr.mxu0 0.0
    %3357 = vmatpush1.msra.mxu0 0.0
    %3358 = vmatprep.subr.mxu0 0.0
    %3359 = vmatpush1.msra.mxu0 0.0
    %3360 = vmatprep.subr.mxu0 0.0
    %3361 = vmatpush1.msra.mxu0 0.0
    %3362 = vmatprep.subr.mxu0 0.0
    %3363 = vmatpush1.msra.mxu0 0.0
    %3364 = vmatprep.subr.mxu0 0.0
    %3365 = vmatpush1.msra.mxu0 0.0
    %3366 = vmatprep.subr.mxu0 0.0
    %3367 = vmatpush1.msra.mxu0 0.0
    %3368 = vmatprep.subr.mxu0 0.0
    %3369 = vmatpush1.msra.mxu0 0.0
    %3370 = vmatprep.subr.mxu0 0.0
    %3371 = vmatpush1.msra.mxu0 0.0
    %3372 = vmatprep.subr.mxu0 0.0
    %3373 = vmatpush1.msra.mxu0 0.0
    %3374 = vmatprep.subr.mxu0 0.0
    %3375 = vmatpush1.msra.mxu0 0.0
    %3376 = vmatprep.subr.mxu0 0.0
    %3377 = vmatpush1.msra.mxu0 0.0
    %3378 = vmatprep.subr.mxu0 0.0
    %3379 = vmatpush1.msra.mxu0 0.0
    %3380 = vmatprep.mubr.f32.mxu0 0.0
    %v3381 = vand.u32 %v2763, 4294901760
    %v3382 = vsub.f32 %v2763, %v3381
    %3383 = vmatmul.mubr.f32.gmra.mrb[0].mxu0 %v3382
    %v3384 = vpop.f32.mrb[0].mxu0
    %v3385 = vadd.f32 %v3191, %v3384
    %v3386 = vpop.f32.mrb[0].mxu0
    %3387 = vmatprep.mubr.f32.mxu0 0.0
    %v3388 = vand.u32 %v2764, 4294901760
    %v3389 = vsub.f32 %v2764, %v3388
    %3390 = vmatmul.mubr.f32.gmra.mrb[0].mxu0 %v3389
    %v3391 = vpop.f32.mrb[0].mxu0
    %v3392 = vadd.f32 %v3197, %v3391
    %v3393 = vpop.f32.mrb[0].mxu0
    %3394 = vmatprep.mubr.f32.mxu0 0.0
    %v3395 = vand.u32 %v2765, 4294901760
    %v3396 = vsub.f32 %v2765, %v3395
    %3397 = vmatmul.mubr.f32.gmra.mrb[0].mxu0 %v3396
    %v3398 = vpop.f32.mrb[0].mxu0
    %v3399 = vadd.f32 %v3203, %v3398
    %v3400 = vpop.f32.mrb[0].mxu0
    %3401 = vmatprep.mubr.f32.mxu0 0.0
    %v3402 = vand.u32 %v2766, 4294901760
    %v3403 = vsub.f32 %v2766, %v3402
    %3404 = vmatmul.mubr.f32.gmra.mrb[0].mxu0 %v3403
    %v3405 = vpop.f32.mrb[0].mxu0
    %v3406 = vadd.f32 %v3209, %v3405
    %v3407 = vpop.f32.mrb[0].mxu0
    %3408 = vmatprep.mubr.f32.mxu0 0.0
    %v3409 = vand.u32 %v2767, 4294901760
    %v3410 = vsub.f32 %v2767, %v3409
    %3411 = vmatmul.mubr.f32.gmra.mrb[0].mxu0 %v3410
    %v3412 = vpop.f32.mrb[0].mxu0
    %v3413 = vadd.f32 %v3215, %v3412
    %v3414 = vpop.f32.mrb[0].mxu0
    %3415 = vmatprep.mubr.f32.mxu0 0.0
    %v3416 = vand.u32 %v2768, 4294901760
    %v3417 = vsub.f32 %v2768, %v3416
    %3418 = vmatmul.mubr.f32.gmra.mrb[0].mxu0 %v3417
    %v3419 = vpop.f32.mrb[0].mxu0
    %v3420 = vadd.f32 %v3221, %v3419
    %v3421 = vpop.f32.mrb[0].mxu0
    %3422 = vmatprep.mubr.f32.mxu0 0.0
    %v3423 = vand.u32 %v2769, 4294901760
    %v3424 = vsub.f32 %v2769, %v3423
    %3425 = vmatmul.mubr.f32.gmra.mrb[0].mxu0 %v3424
    %v3426 = vpop.f32.mrb[0].mxu0
    %v3427 = vadd.f32 %v3227, %v3426
    %v3428 = vpop.f32.mrb[0].mxu0
    %3429 = vmatprep.mubr.f32.mxu0 0.0
    %v3430 = vand.u32 %v2770, 4294901760
    %v3431 = vsub.f32 %v2770, %v3430
    %3432 = vmatmul.mubr.f32.gmra.mrb[0].mxu0 %v3431
    %v3433 = vpop.f32.mrb[0].mxu0
    %v3434 = vadd.f32 %v3233, %v3433
    %v3435 = vpop.f32.mrb[0].mxu0
    %3436 = vmatprep.mubr.f32.mxu0 0.0
    %v3437 = vand.u32 %v2771, 4294901760
    %v3438 = vsub.f32 %v2771, %v3437
    %3439 = vmatmul.mubr.f32.gmra.mrb[0].mxu0 %v3438
    %v3440 = vpop.f32.mrb[0].mxu0
    %v3441 = vadd.f32 %v3239, %v3440
    %v3442 = vpop.f32.mrb[0].mxu0
    %3443 = vmatprep.mubr.f32.mxu0 0.0
    %v3444 = vand.u32 %v2772, 4294901760
    %v3445 = vsub.f32 %v2772, %v3444
    %3446 = vmatmul.mubr.f32.gmra.mrb[0].mxu0 %v3445
    %v3447 = vpop.f32.mrb[0].mxu0
    %v3448 = vadd.f32 %v3245, %v3447
    %v3449 = vpop.f32.mrb[0].mxu0
    %3450 = vmatprep.mubr.f32.mxu0 0.0
    %v3451 = vand.u32 %v2773, 4294901760
    %v3452 = vsub.f32 %v2773, %v3451
    %3453 = vmatmul.mubr.f32.gmra.mrb[0].mxu0 %v3452
    %v3454 = vpop.f32.mrb[0].mxu0
    %v3455 = vadd.f32 %v3251, %v3454
    %v3456 = vpop.f32.mrb[0].mxu0
    %3457 = vmatprep.mubr.f32.mxu0 0.0
    %v3458 = vand.u32 %v2774, 4294901760
    %v3459 = vsub.f32 %v2774, %v3458
    %3460 = vmatmul.mubr.f32.gmra.mrb[0].mxu0 %v3459
    %v3461 = vpop.f32.mrb[0].mxu0
    %v3462 = vadd.f32 %v3257, %v3461
    %v3463 = vpop.f32.mrb[0].mxu0
    %3464 = vmatprep.mubr.f32.mxu0 0.0
    %v3465 = vand.u32 %v2775, 4294901760
    %v3466 = vsub.f32 %v2775, %v3465
    %3467 = vmatmul.mubr.f32.gmra.mrb[0].mxu0 %v3466
    %v3468 = vpop.f32.mrb[0].mxu0
    %v3469 = vadd.f32 %v3263, %v3468
    %v3470 = vpop.f32.mrb[0].mxu0
    %3471 = vmatprep.mubr.f32.mxu0 0.0
    %v3472 = vand.u32 %v2776, 4294901760
    %v3473 = vsub.f32 %v2776, %v3472
    %3474 = vmatmul.mubr.f32.gmra.mrb[0].mxu0 %v3473
    %v3475 = vpop.f32.mrb[0].mxu0
    %v3476 = vadd.f32 %v3269, %v3475
    %v3477 = vpop.f32.mrb[0].mxu0
    %3478 = vmatprep.mubr.f32.mxu0 0.0
    %v3479 = vand.u32 %v2777, 4294901760
    %v3480 = vsub.f32 %v2777, %v3479
    %3481 = vmatmul.mubr.f32.gmra.mrb[0].mxu0 %v3480
    %v3482 = vpop.f32.mrb[0].mxu0
    %v3483 = vadd.f32 %v3275, %v3482
    %v3484 = vpop.f32.mrb[0].mxu0
    %3485 = vmatprep.mubr.f32.mxu0 0.0
    %v3486 = vand.u32 %v2778, 4294901760
    %v3487 = vsub.f32 %v2778, %v3486
    %3488 = vmatmul.mubr.f32.gmra.mrb[0].mxu0 %v3487
    %v3489 = vpop.f32.mrb[0].mxu0
    %v3490 = vadd.f32 %v3281, %v3489
    %v3491 = vpop.f32.mrb[0].mxu0
    %3492 = vdwg.mxu0
    %3493 = vmatprep.subr.mxu0 0.0
    %v3494 = vand.u32 %v2779, 4294901760
    %3495 = vmatpush1.msra.mxu0 %v3494
    %3496 = vmatprep.subr.mxu0 0.0
    %v3497 = vand.u32 %v2780, 4294901760
    %3498 = vmatpush1.msra.mxu0 %v3497
    %3499 = vmatprep.subr.mxu0 0.0
    %v3500 = vand.u32 %v2781, 4294901760
    %3501 = vmatpush1.msra.mxu0 %v3500
    %3502 = vmatprep.subr.mxu0 0.0
    %v3503 = vand.u32 %v2782, 4294901760
    %3504 = vmatpush1.msra.mxu0 %v3503
    %3505 = vmatprep.subr.mxu0 0.0
    %v3506 = vand.u32 %v2783, 4294901760
    %3507 = vmatpush1.msra.mxu0 %v3506
    %3508 = vmatprep.subr.mxu0 0.0
    %v3509 = vand.u32 %v2784, 4294901760
    %3510 = vmatpush1.msra.mxu0 %v3509
    %3511 = vmatprep.subr.mxu0 0.0
    %v3512 = vand.u32 %v2785, 4294901760
    %3513 = vmatpush1.msra.mxu0 %v3512
    %3514 = vmatprep.subr.mxu0 0.0
    %v3515 = vand.u32 %v2786, 4294901760
    %3516 = vmatpush1.msra.mxu0 %v3515
    %3517 = vmatprep.subr.mxu0 0.0
    %v3518 = vand.u32 %v2787, 4294901760
    %3519 = vmatpush1.msra.mxu0 %v3518
    %3520 = vmatprep.subr.mxu0 0.0
    %v3521 = vand.u32 %v2788, 4294901760
    %3522 = vmatpush1.msra.mxu0 %v3521
    %3523 = vmatprep.subr.mxu0 0.0
    %v3524 = vand.u32 %v2789, 4294901760
    %3525 = vmatpush1.msra.mxu0 %v3524
    %3526 = vmatprep.subr.mxu0 0.0
    %v3527 = vand.u32 %v2790, 4294901760
    %3528 = vmatpush1.msra.mxu0 %v3527
    %3529 = vmatprep.subr.mxu0 0.0
    %v3530 = vand.u32 %v2791, 4294901760
    %3531 = vmatpush1.msra.mxu0 %v3530
    %3532 = vmatprep.subr.mxu0 0.0
    %v3533 = vand.u32 %v2792, 4294901760
    %3534 = vmatpush1.msra.mxu0 %v3533
    %3535 = vmatprep.subr.mxu0 0.0
    %v3536 = vand.u32 %v2793, 4294901760
    %3537 = vmatpush1.msra.mxu0 %v3536
    %3538 = vmatprep.subr.mxu0 0.0
    %v3539 = vand.u32 %v2794, 4294901760
    %3540 = vmatpush1.msra.mxu0 %v3539
    %3541 = vmatprep.subr.mxu0 0.0
    %3542 = vmatpush1.msra.mxu0 0.0
    %3543 = vmatprep.subr.mxu0 0.0
    %3544 = vmatpush1.msra.mxu0 0.0
    %3545 = vmatprep.subr.mxu0 0.0
    %3546 = vmatpush1.msra.mxu0 0.0
    %3547 = vmatprep.subr.mxu0 0.0
    %3548 = vmatpush1.msra.mxu0 0.0
    %3549 = vmatprep.subr.mxu0 0.0
    %3550 = vmatpush1.msra.mxu0 0.0
    %3551 = vmatprep.subr.mxu0 0.0
    %3552 = vmatpush1.msra.mxu0 0.0
    %3553 = vmatprep.subr.mxu0 0.0
    %3554 = vmatpush1.msra.mxu0 0.0
    %3555 = vmatprep.subr.mxu0 0.0
    %3556 = vmatpush1.msra.mxu0 0.0
    %3557 = vmatprep.subr.mxu0 0.0
    %3558 = vmatpush1.msra.mxu0 0.0
    %3559 = vmatprep.subr.mxu0 0.0
    %3560 = vmatpush1.msra.mxu0 0.0
    %3561 = vmatprep.subr.mxu0 0.0
    %3562 = vmatpush1.msra.mxu0 0.0
    %3563 = vmatprep.subr.mxu0 0.0
    %3564 = vmatpush1.msra.mxu0 0.0
    %3565 = vmatprep.subr.mxu0 0.0
    %3566 = vmatpush1.msra.mxu0 0.0
    %3567 = vmatprep.subr.mxu0 0.0
    %3568 = vmatpush1.msra.mxu0 0.0
    %3569 = vmatprep.subr.mxu0 0.0
    %3570 = vmatpush1.msra.mxu0 0.0
    %3571 = vmatprep.subr.mxu0 0.0
    %3572 = vmatpush1.msra.mxu0 0.0
    %3573 = vmatprep.mubr.f32.mxu0 0.0
    %v3574 = vand.u32 %v2763, 4294901760
    %v3575 = vsub.f32 %v2763, %v3574
    %v3576 = vand.u32 %v3575, 4294901760
    %3577 = vmatmul.mubr.f32.gmra.mrb[0].mxu0 %v3576
    %v3578 = vpop.f32.mrb[0].mxu0
    %v3579 = vadd.f32 %v3385, %v3578
    %v3580 = vpop.f32.mrb[0].mxu0
    %3581 = vmatprep.mubr.f32.mxu0 0.0
    %v3582 = vand.u32 %v2764, 4294901760
    %v3583 = vsub.f32 %v2764, %v3582
    %v3584 = vand.u32 %v3583, 4294901760
    %3585 = vmatmul.mubr.f32.gmra.mrb[0].mxu0 %v3584
    %v3586 = vpop.f32.mrb[0].mxu0
    %v3587 = vadd.f32 %v3392, %v3586
    %v3588 = vpop.f32.mrb[0].mxu0
    %3589 = vmatprep.mubr.f32.mxu0 0.0
    %v3590 = vand.u32 %v2765, 4294901760
    %v3591 = vsub.f32 %v2765, %v3590
    %v3592 = vand.u32 %v3591, 4294901760
    %3593 = vmatmul.mubr.f32.gmra.mrb[0].mxu0 %v3592
    %v3594 = vpop.f32.mrb[0].mxu0
    %v3595 = vadd.f32 %v3399, %v3594
    %v3596 = vpop.f32.mrb[0].mxu0
    %3597 = vmatprep.mubr.f32.mxu0 0.0
    %v3598 = vand.u32 %v2766, 4294901760
    %v3599 = vsub.f32 %v2766, %v3598
    %v3600 = vand.u32 %v3599, 4294901760
    %3601 = vmatmul.mubr.f32.gmra.mrb[0].mxu0 %v3600
    %v3602 = vpop.f32.mrb[0].mxu0
    %v3603 = vadd.f32 %v3406, %v3602
    %v3604 = vpop.f32.mrb[0].mxu0
    %3605 = vmatprep.mubr.f32.mxu0 0.0
    %v3606 = vand.u32 %v2767, 4294901760
    %v3607 = vsub.f32 %v2767, %v3606
    %v3608 = vand.u32 %v3607, 4294901760
    %3609 = vmatmul.mubr.f32.gmra.mrb[0].mxu0 %v3608
    %v3610 = vpop.f32.mrb[0].mxu0
    %v3611 = vadd.f32 %v3413, %v3610
    %v3612 = vpop.f32.mrb[0].mxu0
    %3613 = vmatprep.mubr.f32.mxu0 0.0
    %v3614 = vand.u32 %v2768, 4294901760
    %v3615 = vsub.f32 %v2768, %v3614
    %v3616 = vand.u32 %v3615, 4294901760
    %3617 = vmatmul.mubr.f32.gmra.mrb[0].mxu0 %v3616
    %v3618 = vpop.f32.mrb[0].mxu0
    %v3619 = vadd.f32 %v3420, %v3618
    %v3620 = vpop.f32.mrb[0].mxu0
    %3621 = vmatprep.mubr.f32.mxu0 0.0
    %v3622 = vand.u32 %v2769, 4294901760
    %v3623 = vsub.f32 %v2769, %v3622
    %v3624 = vand.u32 %v3623, 4294901760
    %3625 = vmatmul.mubr.f32.gmra.mrb[0].mxu0 %v3624
    %v3626 = vpop.f32.mrb[0].mxu0
    %v3627 = vadd.f32 %v3427, %v3626
    %v3628 = vpop.f32.mrb[0].mxu0
    %3629 = vmatprep.mubr.f32.mxu0 0.0
    %v3630 = vand.u32 %v2770, 4294901760
    %v3631 = vsub.f32 %v2770, %v3630
    %v3632 = vand.u32 %v3631, 4294901760
    %3633 = vmatmul.mubr.f32.gmra.mrb[0].mxu0 %v3632
    %v3634 = vpop.f32.mrb[0].mxu0
    %v3635 = vadd.f32 %v3434, %v3634
    %v3636 = vpop.f32.mrb[0].mxu0
    %3637 = vmatprep.mubr.f32.mxu0 0.0
    %v3638 = vand.u32 %v2771, 4294901760
    %v3639 = vsub.f32 %v2771, %v3638
    %v3640 = vand.u32 %v3639, 4294901760
    %3641 = vmatmul.mubr.f32.gmra.mrb[0].mxu0 %v3640
    %v3642 = vpop.f32.mrb[0].mxu0
    %v3643 = vadd.f32 %v3441, %v3642
    %v3644 = vpop.f32.mrb[0].mxu0
    %3645 = vmatprep.mubr.f32.mxu0 0.0
    %v3646 = vand.u32 %v2772, 4294901760
    %v3647 = vsub.f32 %v2772, %v3646
    %v3648 = vand.u32 %v3647, 4294901760
    %3649 = vmatmul.mubr.f32.gmra.mrb[0].mxu0 %v3648
    %v3650 = vpop.f32.mrb[0].mxu0
    %v3651 = vadd.f32 %v3448, %v3650
    %v3652 = vpop.f32.mrb[0].mxu0
    %3653 = vmatprep.mubr.f32.mxu0 0.0
    %v3654 = vand.u32 %v2773, 4294901760
    %v3655 = vsub.f32 %v2773, %v3654
    %v3656 = vand.u32 %v3655, 4294901760
    %3657 = vmatmul.mubr.f32.gmra.mrb[0].mxu0 %v3656
    %v3658 = vpop.f32.mrb[0].mxu0
    %v3659 = vadd.f32 %v3455, %v3658
    %v3660 = vpop.f32.mrb[0].mxu0
    %3661 = vmatprep.mubr.f32.mxu0 0.0
    %v3662 = vand.u32 %v2774, 4294901760
    %v3663 = vsub.f32 %v2774, %v3662
    %v3664 = vand.u32 %v3663, 4294901760
    %3665 = vmatmul.mubr.f32.gmra.mrb[0].mxu0 %v3664
    %v3666 = vpop.f32.mrb[0].mxu0
    %v3667 = vadd.f32 %v3462, %v3666
    %v3668 = vpop.f32.mrb[0].mxu0
    %3669 = vmatprep.mubr.f32.mxu0 0.0
    %v3670 = vand.u32 %v2775, 4294901760
    %v3671 = vsub.f32 %v2775, %v3670
    %v3672 = vand.u32 %v3671, 4294901760
    %3673 = vmatmul.mubr.f32.gmra.mrb[0].mxu0 %v3672
    %v3674 = vpop.f32.mrb[0].mxu0
    %v3675 = vadd.f32 %v3469, %v3674
    %v3676 = vpop.f32.mrb[0].mxu0
    %3677 = vmatprep.mubr.f32.mxu0 0.0
    %v3678 = vand.u32 %v2776, 4294901760
    %v3679 = vsub.f32 %v2776, %v3678
    %v3680 = vand.u32 %v3679, 4294901760
    %3681 = vmatmul.mubr.f32.gmra.mrb[0].mxu0 %v3680
    %v3682 = vpop.f32.mrb[0].mxu0
    %v3683 = vadd.f32 %v3476, %v3682
    %v3684 = vpop.f32.mrb[0].mxu0
    %3685 = vmatprep.mubr.f32.mxu0 0.0
    %v3686 = vand.u32 %v2777, 4294901760
    %v3687 = vsub.f32 %v2777, %v3686
    %v3688 = vand.u32 %v3687, 4294901760
    %3689 = vmatmul.mubr.f32.gmra.mrb[0].mxu0 %v3688
    %v3690 = vpop.f32.mrb[0].mxu0
    %v3691 = vadd.f32 %v3483, %v3690
    %v3692 = vpop.f32.mrb[0].mxu0
    %3693 = vmatprep.mubr.f32.mxu0 0.0
    %v3694 = vand.u32 %v2778, 4294901760
    %v3695 = vsub.f32 %v2778, %v3694
    %v3696 = vand.u32 %v3695, 4294901760
    %3697 = vmatmul.mubr.f32.gmra.mrb[0].mxu0 %v3696
    %v3698 = vpop.f32.mrb[0].mxu0
    %v3699 = vadd.f32 %v3490, %v3698
    %v3700 = vpop.f32.mrb[0].mxu0
    %3701 = vdwg.mxu0
    %3702 = vmatprep.subr.mxu0 0.0
    %v3703 = vand.u32 %v2779, 4294901760
    %v3704 = vsub.f32 %v2779, %v3703
    %v3705 = vand.u32 %v3704, 4294901760
    %3706 = vmatpush1.msra.mxu0 %v3705
    %3707 = vmatprep.subr.mxu0 0.0
    %v3708 = vand.u32 %v2780, 4294901760
    %v3709 = vsub.f32 %v2780, %v3708
    %v3710 = vand.u32 %v3709, 4294901760
    %3711 = vmatpush1.msra.mxu0 %v3710
    %3712 = vmatprep.subr.mxu0 0.0
    %v3713 = vand.u32 %v2781, 4294901760
    %v3714 = vsub.f32 %v2781, %v3713
    %v3715 = vand.u32 %v3714, 4294901760
    %3716 = vmatpush1.msra.mxu0 %v3715
    %3717 = vmatprep.subr.mxu0 0.0
    %v3718 = vand.u32 %v2782, 4294901760
    %v3719 = vsub.f32 %v2782, %v3718
    %v3720 = vand.u32 %v3719, 4294901760
    %3721 = vmatpush1.msra.mxu0 %v3720
    %3722 = vmatprep.subr.mxu0 0.0
    %v3723 = vand.u32 %v2783, 4294901760
    %v3724 = vsub.f32 %v2783, %v3723
    %v3725 = vand.u32 %v3724, 4294901760
    %3726 = vmatpush1.msra.mxu0 %v3725
    %3727 = vmatprep.subr.mxu0 0.0
    %v3728 = vand.u32 %v2784, 4294901760
    %v3729 = vsub.f32 %v2784, %v3728
    %v3730 = vand.u32 %v3729, 4294901760
    %3731 = vmatpush1.msra.mxu0 %v3730
    %3732 = vmatprep.subr.mxu0 0.0
    %v3733 = vand.u32 %v2785, 4294901760
    %v3734 = vsub.f32 %v2785, %v3733
    %v3735 = vand.u32 %v3734, 4294901760
    %3736 = vmatpush1.msra.mxu0 %v3735
    %3737 = vmatprep.subr.mxu0 0.0
    %v3738 = vand.u32 %v2786, 4294901760
    %v3739 = vsub.f32 %v2786, %v3738
    %v3740 = vand.u32 %v3739, 4294901760
    %3741 = vmatpush1.msra.mxu0 %v3740
    %3742 = vmatprep.subr.mxu0 0.0
    %v3743 = vand.u32 %v2787, 4294901760
    %v3744 = vsub.f32 %v2787, %v3743
    %v3745 = vand.u32 %v3744, 4294901760
    %3746 = vmatpush1.msra.mxu0 %v3745
    %3747 = vmatprep.subr.mxu0 0.0
    %v3748 = vand.u32 %v2788, 4294901760
    %v3749 = vsub.f32 %v2788, %v3748
    %v3750 = vand.u32 %v3749, 4294901760
    %3751 = vmatpush1.msra.mxu0 %v3750
    %3752 = vmatprep.subr.mxu0 0.0
    %v3753 = vand.u32 %v2789, 4294901760
    %v3754 = vsub.f32 %v2789, %v3753
    %v3755 = vand.u32 %v3754, 4294901760
    %3756 = vmatpush1.msra.mxu0 %v3755
    %3757 = vmatprep.subr.mxu0 0.0
    %v3758 = vand.u32 %v2790, 4294901760
    %v3759 = vsub.f32 %v2790, %v3758
    %v3760 = vand.u32 %v3759, 4294901760
    %3761 = vmatpush1.msra.mxu0 %v3760
    %3762 = vmatprep.subr.mxu0 0.0
    %v3763 = vand.u32 %v2791, 4294901760
    %v3764 = vsub.f32 %v2791, %v3763
    %v3765 = vand.u32 %v3764, 4294901760
    %3766 = vmatpush1.msra.mxu0 %v3765
    %3767 = vmatprep.subr.mxu0 0.0
    %v3768 = vand.u32 %v2792, 4294901760
    %v3769 = vsub.f32 %v2792, %v3768
    %v3770 = vand.u32 %v3769, 4294901760
    %3771 = vmatpush1.msra.mxu0 %v3770
    %3772 = vmatprep.subr.mxu0 0.0
    %v3773 = vand.u32 %v2793, 4294901760
    %v3774 = vsub.f32 %v2793, %v3773
    %v3775 = vand.u32 %v3774, 4294901760
    %3776 = vmatpush1.msra.mxu0 %v3775
    %3777 = vmatprep.subr.mxu0 0.0
    %v3778 = vand.u32 %v2794, 4294901760
    %v3779 = vsub.f32 %v2794, %v3778
    %v3780 = vand.u32 %v3779, 4294901760
    %3781 = vmatpush1.msra.mxu0 %v3780
    %3782 = vmatprep.subr.mxu0 0.0
    %3783 = vmatpush1.msra.mxu0 0.0
    %3784 = vmatprep.subr.mxu0 0.0
    %3785 = vmatpush1.msra.mxu0 0.0
    %3786 = vmatprep.subr.mxu0 0.0
    %3787 = vmatpush1.msra.mxu0 0.0
    %3788 = vmatprep.subr.mxu0 0.0
    %3789 = vmatpush1.msra.mxu0 0.0
    %3790 = vmatprep.subr.mxu0 0.0
    %3791 = vmatpush1.msra.mxu0 0.0
    %3792 = vmatprep.subr.mxu0 0.0
    %3793 = vmatpush1.msra.mxu0 0.0
    %3794 = vmatprep.subr.mxu0 0.0
    %3795 = vmatpush1.msra.mxu0 0.0
    %3796 = vmatprep.subr.mxu0 0.0
    %3797 = vmatpush1.msra.mxu0 0.0
    %3798 = vmatprep.subr.mxu0 0.0
    %3799 = vmatpush1.msra.mxu0 0.0
    %3800 = vmatprep.subr.mxu0 0.0
    %3801 = vmatpush1.msra.mxu0 0.0
    %3802 = vmatprep.subr.mxu0 0.0
    %3803 = vmatpush1.msra.mxu0 0.0
    %3804 = vmatprep.subr.mxu0 0.0
    %3805 = vmatpush1.msra.mxu0 0.0
    %3806 = vmatprep.subr.mxu0 0.0
    %3807 = vmatpush1.msra.mxu0 0.0
    %3808 = vmatprep.subr.mxu0 0.0
    %3809 = vmatpush1.msra.mxu0 0.0
    %3810 = vmatprep.subr.mxu0 0.0
    %3811 = vmatpush1.msra.mxu0 0.0
    %3812 = vmatprep.subr.mxu0 0.0
    %3813 = vmatpush1.msra.mxu0 0.0
    %3814 = vmatprep.mubr.f32.mxu0 0.0
    %v3815 = vand.u32 %v2763, 4294901760
    %3816 = vmatmul.mubr.f32.gmra.mrb[0].mxu0 %v3815
    %v3817 = vpop.f32.mrb[0].mxu0
    %v3818 = vadd.f32 %v3579, %v3817
    %v3819 = vpop.f32.mrb[0].mxu0
    %3820 = vmatprep.mubr.f32.mxu0 0.0
    %v3821 = vand.u32 %v2764, 4294901760
    %3822 = vmatmul.mubr.f32.gmra.mrb[0].mxu0 %v3821
    %v3823 = vpop.f32.mrb[0].mxu0
    %v3824 = vadd.f32 %v3587, %v3823
    %v3825 = vpop.f32.mrb[0].mxu0
    %3826 = vmatprep.mubr.f32.mxu0 0.0
    %v3827 = vand.u32 %v2765, 4294901760
    %3828 = vmatmul.mubr.f32.gmra.mrb[0].mxu0 %v3827
    %v3829 = vpop.f32.mrb[0].mxu0
    %v3830 = vadd.f32 %v3595, %v3829
    %v3831 = vpop.f32.mrb[0].mxu0
    %3832 = vmatprep.mubr.f32.mxu0 0.0
    %v3833 = vand.u32 %v2766, 4294901760
    %3834 = vmatmul.mubr.f32.gmra.mrb[0].mxu0 %v3833
    %v3835 = vpop.f32.mrb[0].mxu0
    %v3836 = vadd.f32 %v3603, %v3835
    %v3837 = vpop.f32.mrb[0].mxu0
    %3838 = vmatprep.mubr.f32.mxu0 0.0
    %v3839 = vand.u32 %v2767, 4294901760
    %3840 = vmatmul.mubr.f32.gmra.mrb[0].mxu0 %v3839
    %v3841 = vpop.f32.mrb[0].mxu0
    %v3842 = vadd.f32 %v3611, %v3841
    %v3843 = vpop.f32.mrb[0].mxu0
    %3844 = vmatprep.mubr.f32.mxu0 0.0
    %v3845 = vand.u32 %v2768, 4294901760
    %3846 = vmatmul.mubr.f32.gmra.mrb[0].mxu0 %v3845
    %v3847 = vpop.f32.mrb[0].mxu0
    %v3848 = vadd.f32 %v3619, %v3847
    %v3849 = vpop.f32.mrb[0].mxu0
    %3850 = vmatprep.mubr.f32.mxu0 0.0
    %v3851 = vand.u32 %v2769, 4294901760
    %3852 = vmatmul.mubr.f32.gmra.mrb[0].mxu0 %v3851
    %v3853 = vpop.f32.mrb[0].mxu0
    %v3854 = vadd.f32 %v3627, %v3853
    %v3855 = vpop.f32.mrb[0].mxu0
    %3856 = vmatprep.mubr.f32.mxu0 0.0
    %v3857 = vand.u32 %v2770, 4294901760
    %3858 = vmatmul.mubr.f32.gmra.mrb[0].mxu0 %v3857
    %v3859 = vpop.f32.mrb[0].mxu0
    %v3860 = vadd.f32 %v3635, %v3859
    %v3861 = vpop.f32.mrb[0].mxu0
    %3862 = vmatprep.mubr.f32.mxu0 0.0
    %v3863 = vand.u32 %v2771, 4294901760
    %3864 = vmatmul.mubr.f32.gmra.mrb[0].mxu0 %v3863
    %v3865 = vpop.f32.mrb[0].mxu0
    %v3866 = vadd.f32 %v3643, %v3865
    %v3867 = vpop.f32.mrb[0].mxu0
    %3868 = vmatprep.mubr.f32.mxu0 0.0
    %v3869 = vand.u32 %v2772, 4294901760
    %3870 = vmatmul.mubr.f32.gmra.mrb[0].mxu0 %v3869
    %v3871 = vpop.f32.mrb[0].mxu0
    %v3872 = vadd.f32 %v3651, %v3871
    %v3873 = vpop.f32.mrb[0].mxu0
    %3874 = vmatprep.mubr.f32.mxu0 0.0
    %v3875 = vand.u32 %v2773, 4294901760
    %3876 = vmatmul.mubr.f32.gmra.mrb[0].mxu0 %v3875
    %v3877 = vpop.f32.mrb[0].mxu0
    %v3878 = vadd.f32 %v3659, %v3877
    %v3879 = vpop.f32.mrb[0].mxu0
    %3880 = vmatprep.mubr.f32.mxu0 0.0
    %v3881 = vand.u32 %v2774, 4294901760
    %3882 = vmatmul.mubr.f32.gmra.mrb[0].mxu0 %v3881
    %v3883 = vpop.f32.mrb[0].mxu0
    %v3884 = vadd.f32 %v3667, %v3883
    %v3885 = vpop.f32.mrb[0].mxu0
    %3886 = vmatprep.mubr.f32.mxu0 0.0
    %v3887 = vand.u32 %v2775, 4294901760
    %3888 = vmatmul.mubr.f32.gmra.mrb[0].mxu0 %v3887
    %v3889 = vpop.f32.mrb[0].mxu0
    %v3890 = vadd.f32 %v3675, %v3889
    %v3891 = vpop.f32.mrb[0].mxu0
    %3892 = vmatprep.mubr.f32.mxu0 0.0
    %v3893 = vand.u32 %v2776, 4294901760
    %3894 = vmatmul.mubr.f32.gmra.mrb[0].mxu0 %v3893
    %v3895 = vpop.f32.mrb[0].mxu0
    %v3896 = vadd.f32 %v3683, %v3895
    %v3897 = vpop.f32.mrb[0].mxu0
    %3898 = vmatprep.mubr.f32.mxu0 0.0
    %v3899 = vand.u32 %v2777, 4294901760
    %3900 = vmatmul.mubr.f32.gmra.mrb[0].mxu0 %v3899
    %v3901 = vpop.f32.mrb[0].mxu0
    %v3902 = vadd.f32 %v3691, %v3901
    %v3903 = vpop.f32.mrb[0].mxu0
    %3904 = vmatprep.mubr.f32.mxu0 0.0
    %v3905 = vand.u32 %v2778, 4294901760
    %3906 = vmatmul.mubr.f32.gmra.mrb[0].mxu0 %v3905
    %v3907 = vpop.f32.mrb[0].mxu0
    %v3908 = vadd.f32 %v3699, %v3907
    %v3909 = vpop.f32.mrb[0].mxu0
    %3910 = vdwg.mxu0
    %3911 = vmatprep.subr.mxu0 0.0
    %v3912 = vand.u32 %v2779, 4294901760
    %3913 = vmatpush1.msra.mxu0 %v3912
    %3914 = vmatprep.subr.mxu0 0.0
    %v3915 = vand.u32 %v2780, 4294901760
    %3916 = vmatpush1.msra.mxu0 %v3915
    %3917 = vmatprep.subr.mxu0 0.0
    %v3918 = vand.u32 %v2781, 4294901760
    %3919 = vmatpush1.msra.mxu0 %v3918
    %3920 = vmatprep.subr.mxu0 0.0
    %v3921 = vand.u32 %v2782, 4294901760
    %3922 = vmatpush1.msra.mxu0 %v3921
    %3923 = vmatprep.subr.mxu0 0.0
    %v3924 = vand.u32 %v2783, 4294901760
    %3925 = vmatpush1.msra.mxu0 %v3924
    %3926 = vmatprep.subr.mxu0 0.0
    %v3927 = vand.u32 %v2784, 4294901760
    %3928 = vmatpush1.msra.mxu0 %v3927
    %3929 = vmatprep.subr.mxu0 0.0
    %v3930 = vand.u32 %v2785, 4294901760
    %3931 = vmatpush1.msra.mxu0 %v3930
    %3932 = vmatprep.subr.mxu0 0.0
    %v3933 = vand.u32 %v2786, 4294901760
    %3934 = vmatpush1.msra.mxu0 %v3933
    %3935 = vmatprep.subr.mxu0 0.0
    %v3936 = vand.u32 %v2787, 4294901760
    %3937 = vmatpush1.msra.mxu0 %v3936
    %3938 = vmatprep.subr.mxu0 0.0
    %v3939 = vand.u32 %v2788, 4294901760
    %3940 = vmatpush1.msra.mxu0 %v3939
    %3941 = vmatprep.subr.mxu0 0.0
    %v3942 = vand.u32 %v2789, 4294901760
    %3943 = vmatpush1.msra.mxu0 %v3942
    %3944 = vmatprep.subr.mxu0 0.0
    %v3945 = vand.u32 %v2790, 4294901760
    %3946 = vmatpush1.msra.mxu0 %v3945
    %3947 = vmatprep.subr.mxu0 0.0
    %v3948 = vand.u32 %v2791, 4294901760
    %3949 = vmatpush1.msra.mxu0 %v3948
    %3950 = vmatprep.subr.mxu0 0.0
    %v3951 = vand.u32 %v2792, 4294901760
    %3952 = vmatpush1.msra.mxu0 %v3951
    %3953 = vmatprep.subr.mxu0 0.0
    %v3954 = vand.u32 %v2793, 4294901760
    %3955 = vmatpush1.msra.mxu0 %v3954
    %3956 = vmatprep.subr.mxu0 0.0
    %v3957 = vand.u32 %v2794, 4294901760
    %3958 = vmatpush1.msra.mxu0 %v3957
    %3959 = vmatprep.subr.mxu0 0.0
    %3960 = vmatpush1.msra.mxu0 0.0
    %3961 = vmatprep.subr.mxu0 0.0
    %3962 = vmatpush1.msra.mxu0 0.0
    %3963 = vmatprep.subr.mxu0 0.0
    %3964 = vmatpush1.msra.mxu0 0.0
    %3965 = vmatprep.subr.mxu0 0.0
    %3966 = vmatpush1.msra.mxu0 0.0
    %3967 = vmatprep.subr.mxu0 0.0
    %3968 = vmatpush1.msra.mxu0 0.0
    %3969 = vmatprep.subr.mxu0 0.0
    %3970 = vmatpush1.msra.mxu0 0.0
    %3971 = vmatprep.subr.mxu0 0.0
    %3972 = vmatpush1.msra.mxu0 0.0
    %3973 = vmatprep.subr.mxu0 0.0
    %3974 = vmatpush1.msra.mxu0 0.0
    %3975 = vmatprep.subr.mxu0 0.0
    %3976 = vmatpush1.msra.mxu0 0.0
    %3977 = vmatprep.subr.mxu0 0.0
    %3978 = vmatpush1.msra.mxu0 0.0
    %3979 = vmatprep.subr.mxu0 0.0
    %3980 = vmatpush1.msra.mxu0 0.0
    %3981 = vmatprep.subr.mxu0 0.0
    %3982 = vmatpush1.msra.mxu0 0.0
    %3983 = vmatprep.subr.mxu0 0.0
    %3984 = vmatpush1.msra.mxu0 0.0
    %3985 = vmatprep.subr.mxu0 0.0
    %3986 = vmatpush1.msra.mxu0 0.0
    %3987 = vmatprep.subr.mxu0 0.0
    %3988 = vmatpush1.msra.mxu0 0.0
    %3989 = vmatprep.subr.mxu0 0.0
    %3990 = vmatpush1.msra.mxu0 0.0
    %3991 = vmatprep.mubr.f32.mxu0 0.0
    %v3992 = vand.u32 %v2763, 4294901760
    %3993 = vmatmul.mubr.f32.gmra.mrb[0].mxu0 %v3992
    %v3994 = vpop.f32.mrb[0].mxu0
    %v3995 = vadd.f32 %v3818, %v3994
    %v3996 = vpop.f32.mrb[0].mxu0
    %3997 = vmatprep.mubr.f32.mxu0 0.0
    %v3998 = vand.u32 %v2764, 4294901760
    %3999 = vmatmul.mubr.f32.gmra.mrb[0].mxu0 %v3998
    %v4000 = vpop.f32.mrb[0].mxu0
    %v4001 = vadd.f32 %v3824, %v4000
    %v4002 = vpop.f32.mrb[0].mxu0
    %4003 = vmatprep.mubr.f32.mxu0 0.0
    %v4004 = vand.u32 %v2765, 4294901760
    %4005 = vmatmul.mubr.f32.gmra.mrb[0].mxu0 %v4004
    %v4006 = vpop.f32.mrb[0].mxu0
    %v4007 = vadd.f32 %v3830, %v4006
    %v4008 = vpop.f32.mrb[0].mxu0
    %4009 = vmatprep.mubr.f32.mxu0 0.0
    %v4010 = vand.u32 %v2766, 4294901760
    %4011 = vmatmul.mubr.f32.gmra.mrb[0].mxu0 %v4010
    %v4012 = vpop.f32.mrb[0].mxu0
    %v4013 = vadd.f32 %v3836, %v4012
    %v4014 = vpop.f32.mrb[0].mxu0
    %4015 = vmatprep.mubr.f32.mxu0 0.0
    %v4016 = vand.u32 %v2767, 4294901760
    %4017 = vmatmul.mubr.f32.gmra.mrb[0].mxu0 %v4016
    %v4018 = vpop.f32.mrb[0].mxu0
    %v4019 = vadd.f32 %v3842, %v4018
    %v4020 = vpop.f32.mrb[0].mxu0
    %4021 = vmatprep.mubr.f32.mxu0 0.0
    %v4022 = vand.u32 %v2768, 4294901760
    %4023 = vmatmul.mubr.f32.gmra.mrb[0].mxu0 %v4022
    %v4024 = vpop.f32.mrb[0].mxu0
    %v4025 = vadd.f32 %v3848, %v4024
    %v4026 = vpop.f32.mrb[0].mxu0
    %4027 = vmatprep.mubr.f32.mxu0 0.0
    %v4028 = vand.u32 %v2769, 4294901760
    %4029 = vmatmul.mubr.f32.gmra.mrb[0].mxu0 %v4028
    %v4030 = vpop.f32.mrb[0].mxu0
    %v4031 = vadd.f32 %v3854, %v4030
    %v4032 = vpop.f32.mrb[0].mxu0
    %4033 = vmatprep.mubr.f32.mxu0 0.0
    %v4034 = vand.u32 %v2770, 4294901760
    %4035 = vmatmul.mubr.f32.gmra.mrb[0].mxu0 %v4034
    %v4036 = vpop.f32.mrb[0].mxu0
    %v4037 = vadd.f32 %v3860, %v4036
    %v4038 = vpop.f32.mrb[0].mxu0
    %4039 = vmatprep.mubr.f32.mxu0 0.0
    %v4040 = vand.u32 %v2771, 4294901760
    %4041 = vmatmul.mubr.f32.gmra.mrb[0].mxu0 %v4040
    %v4042 = vpop.f32.mrb[0].mxu0
    %v4043 = vadd.f32 %v3866, %v4042
    %v4044 = vpop.f32.mrb[0].mxu0
    %4045 = vmatprep.mubr.f32.mxu0 0.0
    %v4046 = vand.u32 %v2772, 4294901760
    %4047 = vmatmul.mubr.f32.gmra.mrb[0].mxu0 %v4046
    %v4048 = vpop.f32.mrb[0].mxu0
    %v4049 = vadd.f32 %v3872, %v4048
    %v4050 = vpop.f32.mrb[0].mxu0
    %4051 = vmatprep.mubr.f32.mxu0 0.0
    %v4052 = vand.u32 %v2773, 4294901760
    %4053 = vmatmul.mubr.f32.gmra.mrb[0].mxu0 %v4052
    %v4054 = vpop.f32.mrb[0].mxu0
    %v4055 = vadd.f32 %v3878, %v4054
    %v4056 = vpop.f32.mrb[0].mxu0
    %4057 = vmatprep.mubr.f32.mxu0 0.0
    %v4058 = vand.u32 %v2774, 4294901760
    %4059 = vmatmul.mubr.f32.gmra.mrb[0].mxu0 %v4058
    %v4060 = vpop.f32.mrb[0].mxu0
    %v4061 = vadd.f32 %v3884, %v4060
    %v4062 = vpop.f32.mrb[0].mxu0
    %4063 = vmatprep.mubr.f32.mxu0 0.0
    %v4064 = vand.u32 %v2775, 4294901760
    %4065 = vmatmul.mubr.f32.gmra.mrb[0].mxu0 %v4064
    %v4066 = vpop.f32.mrb[0].mxu0
    %v4067 = vadd.f32 %v3890, %v4066
    %v4068 = vpop.f32.mrb[0].mxu0
    %4069 = vmatprep.mubr.f32.mxu0 0.0
    %v4070 = vand.u32 %v2776, 4294901760
    %4071 = vmatmul.mubr.f32.gmra.mrb[0].mxu0 %v4070
    %v4072 = vpop.f32.mrb[0].mxu0
    %v4073 = vadd.f32 %v3896, %v4072
    %v4074 = vpop.f32.mrb[0].mxu0
    %4075 = vmatprep.mubr.f32.mxu0 0.0
    %v4076 = vand.u32 %v2777, 4294901760
    %4077 = vmatmul.mubr.f32.gmra.mrb[0].mxu0 %v4076
    %v4078 = vpop.f32.mrb[0].mxu0
    %v4079 = vadd.f32 %v3902, %v4078
    %v4080 = vpop.f32.mrb[0].mxu0
    %4081 = vmatprep.mubr.f32.mxu0 0.0
    %v4082 = vand.u32 %v2778, 4294901760
    %4083 = vmatmul.mubr.f32.gmra.mrb[0].mxu0 %v4082
    %v4084 = vpop.f32.mrb[0].mxu0
    %v4085 = vadd.f32 %v3908, %v4084
    %v4086 = vpop.f32.mrb[0].mxu0
    %4087 = vdwg.mxu0
    %4088 = vst [vmem:[#allocation8] sm:$0xff] %v3995
    %4089 = vst [vmem:[#allocation8 + $0x8] sm:$0xff] %v4001
    %4090 = vst [vmem:[#allocation8 + $0x10] sm:$0xff] %v4007
    %4091 = vst [vmem:[#allocation8 + $0x18] sm:$0xff] %v4013
    %4092 = vst [vmem:[#allocation8 + $0x20] sm:$0xff] %v4019
    %4093 = vst [vmem:[#allocation8 + $0x28] sm:$0xff] %v4025
    %4094 = vst [vmem:[#allocation8 + $0x30] sm:$0xff] %v4031
    %4095 = vst [vmem:[#allocation8 + $0x38] sm:$0xff] %v4037
    %4096 = vst [vmem:[#allocation8 + $0x40] sm:$0xff] %v4043
    %4097 = vst [vmem:[#allocation8 + $0x48] sm:$0xff] %v4049
    %4098 = vst [vmem:[#allocation8 + $0x50] sm:$0xff] %v4055
    %4099 = vst [vmem:[#allocation8 + $0x58] sm:$0xff] %v4061
    %4100 = vst [vmem:[#allocation8 + $0x60] sm:$0xff] %v4067
    %4101 = vst [vmem:[#allocation8 + $0x68] sm:$0xff] %v4073
    %4102 = vst [vmem:[#allocation8 + $0x70] sm:$0xff] %v4079
    %4103 = vst [vmem:[#allocation8 + $0x78] sm:$0xff] %v4085
    // Predicated region
    $region38: #{tpu_custom_call.1} parent=1 // pred_check
      _
    $region39: #{tpu_custom_call.1} parent=1 // pred_check_branch
      %4105 = sbr.rel (0) target = $region41
    $region40: #{tpu_custom_call.1} parent=1 // pred_region
      %s4107 = ssub.s32 2048, 2048
      %4108 = vsyncadd [#allocation4], %s4107
      %s4109 = sshll.u32 [#allocation8], 4
      %s4110 = int_to_ptr.vmem [resolvable:$true] %s4109
      %4115 = dma.vmem_to_hbm [thread:$0]  %s4110, 2048, %s6, [#allocation4], 128, 128, 8
    $region41: #{tpu_custom_call.1} parent=1 // pred_fallthru
      _
    // Predicated region
    $region42: #{tpu_custom_call.1} parent=1 // pred_check
      _
    $region43: #{tpu_custom_call.1} parent=1 // pred_check_branch
      %4117 = sbr.rel (0) target = $region45
    $region44: #{tpu_custom_call.1} parent=1 // pred_region
      %4118 = dma.done [#allocation4], 2048
    $region45: #{tpu_custom_call.1} parent=1 // pred_fallthru
      _
    %4119 = vsyncpa [#allocation3], 1
    %4120 = vsyncpa [#allocation6], 1
    %4121 = vsyncpa [#allocation4], 1

</llo_original>
